<compile_context>
chip_gen: v7x
topology: tpu7x:2x2x1
jax: 0.10.0
libtpu: 0.0.40
codegen_flags: <defaults>
</compile_context>

<pallas_src>
import functools

import jax
import jax.numpy as jnp
from jax.experimental import pallas as pl
from jax.experimental.pallas import tpu as pltpu


def _round_up(x, m):
    return (x + m - 1) // m * m


def _num_tensorcores():
    """Best-effort detection of TensorCores per chip (v7x has 2, v5e/v6e have 1)."""
    try:
        kind = jax.devices()[0].device_kind.lower()
        if "v7" in kind:
            return 2
    except Exception:
        pass
    return 1


def _choose_tiling(nn, num_cores, max_tile=8192):
    """Pick (tile, nn_pad): tile is a multiple of 128 that divides nn_pad, is as large
    as possible (<= max_tile), and yields grid >= num_cores when that costs nothing."""
    nn_pad = _round_up(nn, 128)
    t = min(max_tile, nn_pad)
    t -= t % 128
    while t >= 128:
        if nn_pad % t == 0 and nn_pad // t >= num_cores:
            return t, nn_pad
        t -= 128
    # Fall back: single biggest tile (e.g. nn_pad == 128 on a 2-core chip).
    tile = min(max_tile, nn_pad)
    return tile, _round_up(nn, tile)


def _choose_chunk(tile):
    """Lane sub-chunk for the in-kernel one-hot build (multiple of 128, divides tile)."""
    for c in (512, 256, 128):
        if tile % c == 0:
            return min(c, tile)
    return tile  # unreachable: tile is always a multiple of 128


def _rel_pos_index(window_size):
    """Reproduces the relative_position_index buffer from __init__ (plain JAX glue)."""
    wh, ww = window_size
    coords_h = jnp.arange(wh)
    coords_w = jnp.arange(ww)
    # torch.meshgrid default is 'ij' indexing
    gh, gw = jnp.meshgrid(coords_h, coords_w, indexing="ij")
    coords = jnp.stack([gh, gw], axis=0)                     # (2, Wh, Ww)
    coords_flat = coords.reshape(2, -1)                      # (2, N)
    rel = coords_flat[:, :, None] - coords_flat[:, None, :]  # (2, N, N)
    rel = jnp.transpose(rel, (1, 2, 0))                      # (N, N, 2)
    rel = rel.at[..., 0].add(wh - 1)
    rel = rel.at[..., 1].add(ww - 1)
    rel = rel.at[..., 0].multiply(2 * ww - 1)
    return rel.sum(-1).astype(jnp.int32)                     # (N, N)


def _bias_gather_kernel(idx_ref, table_t_ref, out_ref, *, chunk):
    # idx_ref:     (1, TILE)    int32  -- flattened relative_position_index tile
    # table_t_ref: (H, P_pad)   bf16   -- transposed + zero-padded bias table
    # out_ref:     (H, TILE)    bf16   -- lane-dense gather result tile
    p_pad = table_t_ref.shape[1]
    tile = out_ref.shape[1]
    n_chunks = tile // chunk

    table_t = table_t_ref[...]                                       # (H, P_pad), tiny
    # Hoisted out of the loop (JAX does not CSE broadcast_in_dim / iota).
    p_iota = jax.lax.broadcasted_iota(jnp.int32, (p_pad, chunk), 0)  # (P_pad, chunk)

    def body(c, carry):
        start = pl.multiple_of(c * chunk, chunk)                     # aligned lane offset
        idx = idx_ref[:, pl.ds(start, chunk)]                        # (1, chunk)
        # one_hot[p, k] = 1 if idx[k] == p else 0  (0/1 are exact in bf16)
        one_hot = (p_iota == idx).astype(jnp.bfloat16)               # (P_pad, chunk)
        # Gather via MXU: out[h, k] = table[idx[k], h]  (bf16 x bf16 -> f32 acc)
        acc = jnp.dot(table_t, one_hot, preferred_element_type=jnp.float32)
        out_ref[:, pl.ds(start, chunk)] = acc.astype(out_ref.dtype)
        return carry

    jax.lax.fori_loop(0, n_chunks, body, 0, unroll=True)


@functools.partial(jax.jit, static_argnums=(2, 3))
def relative_position_bias_2d(table, rel_index, window_size, out_dtype=jnp.bfloat16):
    """table: (P, num_heads) f32, rel_index: (N, N) int32 -> (1, num_heads, N, N)."""
    wh, ww = window_size
    n = wh * ww
    p, num_heads = table.shape
    nn = n * n

    # --- MXU-aligned K: pad P up to a multiple of 256 (>= 256). ---------------
    p_pad = _round_up(max(p, 256), 256)

    # --- Tile the NN (lane) axis; tile divides nn_pad whenever possible. ------
    num_cores = _num_tensorcores()
    tile, nn_pad = _choose_tiling(nn, num_cores)
    chunk = _choose_chunk(tile)
    grid = (nn_pad // tile,)

    # rel_index is (N, N) already; the [:N, :N] slice of the module is a no-op.
    idx_flat = rel_index.reshape(-1).astype(jnp.int32)
    if nn_pad != nn:
        idx_flat = jnp.pad(idx_flat, (0, nn_pad - nn))        # padded idx -> row 0 (discarded)
    idx_flat = idx_flat.reshape(1, nn_pad)                    # (1, NN_pad)

    table_t = table.T.astype(jnp.bfloat16)                    # (H, P) bf16
    if p_pad != p:
        table_t = jnp.pad(table_t, ((0, 0), (0, p_pad - p)))  # (H, P_pad); pad rows never selected

    out_bytes = jnp.dtype(out_dtype).itemsize

    # --- VMEM budget (double-buffered IO + per-chunk intermediates), 2x margin.
    per_iter_bytes = (
        2 * tile * 4                        # idx blocks (int32, double-buffered)
        + 2 * num_heads * p_pad * 2         # table blocks (bf16, double-buffered)
        + 2 * num_heads * tile * out_bytes  # out blocks (double-buffered)
        + num_heads * p_pad * 2             # table held in the kernel
        + p_pad * chunk * (4 + 1 + 2)       # per-chunk iota + compare + one-hot
    )
    # Cap at 48 MiB so we never sit at v7x's 64 MiB/TC physical ceiling.
    vmem_limit = int(min(max(2 * per_iter_bytes, 4 * 1024 * 1024), 48 * 1024 * 1024))

    cost = pl.CostEstimate(
        flops=2 * num_heads * p_pad * nn_pad,
        transcendentals=0,
        bytes_accessed=nn_pad * 4 + num_heads * p_pad * 2 + num_heads * nn_pad * out_bytes,
    )

    out = pl.pallas_call(
        functools.partial(_bias_gather_kernel, chunk=chunk),
        out_shape=jax.ShapeDtypeStruct((num_heads, nn_pad), out_dtype),
        grid=grid,
        in_specs=[
            pl.BlockSpec((1, tile), lambda i: (0, i)),            # idx tile
            pl.BlockSpec((num_heads, p_pad), lambda i: (0, 0)),   # full table every step
        ],
        out_specs=pl.BlockSpec((num_heads, tile), lambda i: (0, i)),
        compiler_params=pltpu.CompilerParams(
            dimension_semantics=("parallel",),                    # shards across v7x's 2 TCs
            vmem_limit_bytes=vmem_limit,
        ),
        cost_estimate=cost,
    )(idx_flat, table_t)

    if nn_pad != nn:
        out = out[:, :nn]                                         # only when padding was needed
    return out.reshape(num_heads, n, n)[None]                     # (1, H, N, N)


if __name__ == "__main__":
    window_size = (8, 8)
    num_heads = 4
    init_std = 0.02

    wh, ww = window_size
    num_rel_positions = (2 * wh - 1) * (2 * ww - 1)

    # Deterministic parameter init (mirrors trunc_normal_(std=0.02), truncated at +/- 2 std).
    key = jax.random.PRNGKey(0)
    table = (
        jax.random.truncated_normal(
            key, -2.0, 2.0, (num_rel_positions, num_heads), dtype=jnp.float32
        )
        * init_std
    )

    rel_index = _rel_pos_index(window_size)

    bias = relative_position_bias_2d(table, rel_index, window_size)
    bias = jax.block_until_ready(bias)

    n = wh * ww
    assert bias.shape == (1, num_heads, n, n), bias.shape
    assert bias.dtype == jnp.bfloat16, bias.dtype

    # Reference 1: exact semantics with the bf16-rounded table (kernel stores bf16;
    # each value is a single bf16 table entry, so the result must be bit-exact).
    table_bf16 = table.astype(jnp.bfloat16)
    ref_exact = table_bf16[rel_index.reshape(-1)].reshape(n, n, num_heads)
    ref_exact = ref_exact.transpose(2, 0, 1)[None]
    assert jnp.array_equal(bias, ref_exact), "bf16-exact gather mismatch"

    # Reference 2: original f32 PyTorch semantics (loose tolerance for bf16 table rounding).
    ref_f32 = table[rel_index.reshape(-1)].reshape(n, n, num_heads).transpose(2, 0, 1)[None]
    assert jnp.allclose(bias.astype(jnp.float32), ref_f32, atol=1e-3, rtol=1e-2)

    print("KERNEL_OK")
</pallas_src>

<mosaic_0001>
module attributes {stable_mosaic.version = 11 : i64} {
  func.func @_bias_gather_kernel(%arg0: i32, %arg1: memref<1x4096xi32, #tpu.memory_space<vmem>>, %arg2: memref<4x256xbf16, #tpu.memory_space<vmem>>, %arg3: memref<4x4096xbf16, #tpu.memory_space<vmem>>) attributes {dimension_semantics = [#tpu.dimension_semantics<parallel>], iteration_bounds = array<i64: 1>, scalar_prefetch = 0 : i64, scratch_operands = 0 : i64, tpu.core_type = #tpu.core_type<tc>, window_params = [{transform_indices = @transform_0, window_bounds = array<i64: 1, 4096>}, {pipeline_mode = #tpu.pipeline_mode<synchronous>, transform_indices = @transform_1, window_bounds = array<i64: 4, 256>}, {transform_indices = @transform_2, window_bounds = array<i64: 4, 4096>}]} {
    %c0 = arith.constant 0 : index
    %c0_0 = arith.constant 0 : index
    %0 = vector.load %arg2[%c0, %c0_0] : memref<4x256xbf16, #tpu.memory_space<vmem>>, vector<4x256xbf16>
    %1 = tpu.iota {dimensions = array<i32: 0>} : vector<256x512xi32>
    %c0_i32 = arith.constant 0 : i32
    %c512_i32 = arith.constant 512 : i32
    %2 = arith.muli %c0_i32, %c512_i32 : i32
    %3 = tpu.assume_multiple %2, 512 : i32
    %c0_1 = arith.constant 0 : index
    %4 = arith.index_cast %3 : i32 to index
    %5 = vector.load %arg1[%c0_1, %4] : memref<1x4096xi32, #tpu.memory_space<vmem>>, vector<1x512xi32>
    %6 = vector.broadcast %5 : vector<1x512xi32> to vector<256x512xi32>
    %7 = arith.cmpi eq, %1, %6 : vector<256x512xi32>
    %8 = arith.extui %7 : vector<256x512xi1> to vector<256x512xi32>
    %9 = arith.sitofp %8 : vector<256x512xi32> to vector<256x512xf32>
    %10 = arith.truncf %9 : vector<256x512xf32> to vector<256x512xbf16>
    %cst = arith.constant dense<0.000000e+00> : vector<4x512xf32>
    %11 = tpu.matmul %0, %10, %cst {dimension_numbers = #tpu.dot_dimension_numbers<[1], [0], [0], [1], [0, 0, 1, 1], [], []>} : vector<4x256xbf16>, vector<256x512xbf16>, vector<4x512xf32> -> vector<4x512xf32>
    %12 = arith.truncf %11 : vector<4x512xf32> to vector<4x512xbf16>
    %c0_2 = arith.constant 0 : index
    %13 = arith.index_cast %3 : i32 to index
    %14 = vector.load %arg3[%c0_2, %13] : memref<4x4096xbf16, #tpu.memory_space<vmem>>, vector<4x512xbf16>
    tpu.vector_store %arg3[%c0_2, %13], %12 {strides = array<i32>} : memref<4x4096xbf16, #tpu.memory_space<vmem>>, vector<4x512xbf16>,
    %c1_i32 = arith.constant 1 : i32
    %c512_i32_3 = arith.constant 512 : i32
    %15 = arith.muli %c1_i32, %c512_i32_3 : i32
    %16 = tpu.assume_multiple %15, 512 : i32
    %c0_4 = arith.constant 0 : index
    %17 = arith.index_cast %16 : i32 to index
    %18 = vector.load %arg1[%c0_4, %17] : memref<1x4096xi32, #tpu.memory_space<vmem>>, vector<1x512xi32>
    %19 = vector.broadcast %18 : vector<1x512xi32> to vector<256x512xi32>
    %20 = arith.cmpi eq, %1, %19 : vector<256x512xi32>
    %21 = arith.extui %20 : vector<256x512xi1> to vector<256x512xi32>
    %22 = arith.sitofp %21 : vector<256x512xi32> to vector<256x512xf32>
    %23 = arith.truncf %22 : vector<256x512xf32> to vector<256x512xbf16>
    %cst_5 = arith.constant dense<0.000000e+00> : vector<4x512xf32>
    %24 = tpu.matmul %0, %23, %cst_5 {dimension_numbers = #tpu.dot_dimension_numbers<[1], [0], [0], [1], [0, 0, 1, 1], [], []>} : vector<4x256xbf16>, vector<256x512xbf16>, vector<4x512xf32> -> vector<4x512xf32>
    %25 = arith.truncf %24 : vector<4x512xf32> to vector<4x512xbf16>
    %c0_6 = arith.constant 0 : index
    %26 = arith.index_cast %16 : i32 to index
    %27 = vector.load %arg3[%c0_6, %26] : memref<4x4096xbf16, #tpu.memory_space<vmem>>, vector<4x512xbf16>
    tpu.vector_store %arg3[%c0_6, %26], %25 {strides = array<i32>} : memref<4x4096xbf16, #tpu.memory_space<vmem>>, vector<4x512xbf16>,
    %c2_i32 = arith.constant 2 : i32
    %c512_i32_7 = arith.constant 512 : i32
    %28 = arith.muli %c2_i32, %c512_i32_7 : i32
    %29 = tpu.assume_multiple %28, 512 : i32
    %c0_8 = arith.constant 0 : index
    %30 = arith.index_cast %29 : i32 to index
    %31 = vector.load %arg1[%c0_8, %30] : memref<1x4096xi32, #tpu.memory_space<vmem>>, vector<1x512xi32>
    %32 = vector.broadcast %31 : vector<1x512xi32> to vector<256x512xi32>
    %33 = arith.cmpi eq, %1, %32 : vector<256x512xi32>
    %34 = arith.extui %33 : vector<256x512xi1> to vector<256x512xi32>
    %35 = arith.sitofp %34 : vector<256x512xi32> to vector<256x512xf32>
    %36 = arith.truncf %35 : vector<256x512xf32> to vector<256x512xbf16>
    %cst_9 = arith.constant dense<0.000000e+00> : vector<4x512xf32>
    %37 = tpu.matmul %0, %36, %cst_9 {dimension_numbers = #tpu.dot_dimension_numbers<[1], [0], [0], [1], [0, 0, 1, 1], [], []>} : vector<4x256xbf16>, vector<256x512xbf16>, vector<4x512xf32> -> vector<4x512xf32>
    %38 = arith.truncf %37 : vector<4x512xf32> to vector<4x512xbf16>
    %c0_10 = arith.constant 0 : index
    %39 = arith.index_cast %29 : i32 to index
    %40 = vector.load %arg3[%c0_10, %39] : memref<4x4096xbf16, #tpu.memory_space<vmem>>, vector<4x512xbf16>
    tpu.vector_store %arg3[%c0_10, %39], %38 {strides = array<i32>} : memref<4x4096xbf16, #tpu.memory_space<vmem>>, vector<4x512xbf16>,
    %c3_i32 = arith.constant 3 : i32
    %c512_i32_11 = arith.constant 512 : i32
    %41 = arith.muli %c3_i32, %c512_i32_11 : i32
    %42 = tpu.assume_multiple %41, 512 : i32
    %c0_12 = arith.constant 0 : index
    %43 = arith.index_cast %42 : i32 to index
    %44 = vector.load %arg1[%c0_12, %43] : memref<1x4096xi32, #tpu.memory_space<vmem>>, vector<1x512xi32>
    %45 = vector.broadcast %44 : vector<1x512xi32> to vector<256x512xi32>
    %46 = arith.cmpi eq, %1, %45 : vector<256x512xi32>
    %47 = arith.extui %46 : vector<256x512xi1> to vector<256x512xi32>
    %48 = arith.sitofp %47 : vector<256x512xi32> to vector<256x512xf32>
    %49 = arith.truncf %48 : vector<256x512xf32> to vector<256x512xbf16>
    %cst_13 = arith.constant dense<0.000000e+00> : vector<4x512xf32>
    %50 = tpu.matmul %0, %49, %cst_13 {dimension_numbers = #tpu.dot_dimension_numbers<[1], [0], [0], [1], [0, 0, 1, 1], [], []>} : vector<4x256xbf16>, vector<256x512xbf16>, vector<4x512xf32> -> vector<4x512xf32>
    %51 = arith.truncf %50 : vector<4x512xf32> to vector<4x512xbf16>
    %c0_14 = arith.constant 0 : index
    %52 = arith.index_cast %42 : i32 to index
    %53 = vector.load %arg3[%c0_14, %52] : memref<4x4096xbf16, #tpu.memory_space<vmem>>, vector<4x512xbf16>
    tpu.vector_store %arg3[%c0_14, %52], %51 {strides = array<i32>} : memref<4x4096xbf16, #tpu.memory_space<vmem>>, vector<4x512xbf16>,
    %c4_i32 = arith.constant 4 : i32
    %c512_i32_15 = arith.constant 512 : i32
    %54 = arith.muli %c4_i32, %c512_i32_15 : i32
    %55 = tpu.assume_multiple %54, 512 : i32
    %c0_16 = arith.constant 0 : index
    %56 = arith.index_cast %55 : i32 to index
    %57 = vector.load %arg1[%c0_16, %56] : memref<1x4096xi32, #tpu.memory_space<vmem>>, vector<1x512xi32>
    %58 = vector.broadcast %57 : vector<1x512xi32> to vector<256x512xi32>
    %59 = arith.cmpi eq, %1, %58 : vector<256x512xi32>
    %60 = arith.extui %59 : vector<256x512xi1> to vector<256x512xi32>
    %61 = arith.sitofp %60 : vector<256x512xi32> to vector<256x512xf32>
    %62 = arith.truncf %61 : vector<256x512xf32> to vector<256x512xbf16>
    %cst_17 = arith.constant dense<0.000000e+00> : vector<4x512xf32>
    %63 = tpu.matmul %0, %62, %cst_17 {dimension_numbers = #tpu.dot_dimension_numbers<[1], [0], [0], [1], [0, 0, 1, 1], [], []>} : vector<4x256xbf16>, vector<256x512xbf16>, vector<4x512xf32> -> vector<4x512xf32>
    %64 = arith.truncf %63 : vector<4x512xf32> to vector<4x512xbf16>
    %c0_18 = arith.constant 0 : index
    %65 = arith.index_cast %55 : i32 to index
    %66 = vector.load %arg3[%c0_18, %65] : memref<4x4096xbf16, #tpu.memory_space<vmem>>, vector<4x512xbf16>
    tpu.vector_store %arg3[%c0_18, %65], %64 {strides = array<i32>} : memref<4x4096xbf16, #tpu.memory_space<vmem>>, vector<4x512xbf16>,
    %c5_i32 = arith.constant 5 : i32
    %c512_i32_19 = arith.constant 512 : i32
    %67 = arith.muli %c5_i32, %c512_i32_19 : i32
    %68 = tpu.assume_multiple %67, 512 : i32
    %c0_20 = arith.constant 0 : index
    %69 = arith.index_cast %68 : i32 to index
    %70 = vector.load %arg1[%c0_20, %69] : memref<1x4096xi32, #tpu.memory_space<vmem>>, vector<1x512xi32>
    %71 = vector.broadcast %70 : vector<1x512xi32> to vector<256x512xi32>
    %72 = arith.cmpi eq, %1, %71 : vector<256x512xi32>
    %73 = arith.extui %72 : vector<256x512xi1> to vector<256x512xi32>
    %74 = arith.sitofp %73 : vector<256x512xi32> to vector<256x512xf32>
    %75 = arith.truncf %74 : vector<256x512xf32> to vector<256x512xbf16>
    %cst_21 = arith.constant dense<0.000000e+00> : vector<4x512xf32>
    %76 = tpu.matmul %0, %75, %cst_21 {dimension_numbers = #tpu.dot_dimension_numbers<[1], [0], [0], [1], [0, 0, 1, 1], [], []>} : vector<4x256xbf16>, vector<256x512xbf16>, vector<4x512xf32> -> vector<4x512xf32>
    %77 = arith.truncf %76 : vector<4x512xf32> to vector<4x512xbf16>
    %c0_22 = arith.constant 0 : index
    %78 = arith.index_cast %68 : i32 to index
    %79 = vector.load %arg3[%c0_22, %78] : memref<4x4096xbf16, #tpu.memory_space<vmem>>, vector<4x512xbf16>
    tpu.vector_store %arg3[%c0_22, %78], %77 {strides = array<i32>} : memref<4x4096xbf16, #tpu.memory_space<vmem>>, vector<4x512xbf16>,
    %c6_i32 = arith.constant 6 : i32
    %c512_i32_23 = arith.constant 512 : i32
    %80 = arith.muli %c6_i32, %c512_i32_23 : i32
    %81 = tpu.assume_multiple %80, 512 : i32
    %c0_24 = arith.constant 0 : index
    %82 = arith.index_cast %81 : i32 to index
    %83 = vector.load %arg1[%c0_24, %82] : memref<1x4096xi32, #tpu.memory_space<vmem>>, vector<1x512xi32>
    %84 = vector.broadcast %83 : vector<1x512xi32> to vector<256x512xi32>
    %85 = arith.cmpi eq, %1, %84 : vector<256x512xi32>
    %86 = arith.extui %85 : vector<256x512xi1> to vector<256x512xi32>
    %87 = arith.sitofp %86 : vector<256x512xi32> to vector<256x512xf32>
    %88 = arith.truncf %87 : vector<256x512xf32> to vector<256x512xbf16>
    %cst_25 = arith.constant dense<0.000000e+00> : vector<4x512xf32>
    %89 = tpu.matmul %0, %88, %cst_25 {dimension_numbers = #tpu.dot_dimension_numbers<[1], [0], [0], [1], [0, 0, 1, 1], [], []>} : vector<4x256xbf16>, vector<256x512xbf16>, vector<4x512xf32> -> vector<4x512xf32>
    %90 = arith.truncf %89 : vector<4x512xf32> to vector<4x512xbf16>
    %c0_26 = arith.constant 0 : index
    %91 = arith.index_cast %81 : i32 to index
    %92 = vector.load %arg3[%c0_26, %91] : memref<4x4096xbf16, #tpu.memory_space<vmem>>, vector<4x512xbf16>
    tpu.vector_store %arg3[%c0_26, %91], %90 {strides = array<i32>} : memref<4x4096xbf16, #tpu.memory_space<vmem>>, vector<4x512xbf16>,
    %c7_i32 = arith.constant 7 : i32
    %c512_i32_27 = arith.constant 512 : i32
    %93 = arith.muli %c7_i32, %c512_i32_27 : i32
    %94 = tpu.assume_multiple %93, 512 : i32
    %c0_28 = arith.constant 0 : index
    %95 = arith.index_cast %94 : i32 to index
    %96 = vector.load %arg1[%c0_28, %95] : memref<1x4096xi32, #tpu.memory_space<vmem>>, vector<1x512xi32>
    %97 = vector.broadcast %96 : vector<1x512xi32> to vector<256x512xi32>
    %98 = arith.cmpi eq, %1, %97 : vector<256x512xi32>
    %99 = arith.extui %98 : vector<256x512xi1> to vector<256x512xi32>
    %100 = arith.sitofp %99 : vector<256x512xi32> to vector<256x512xf32>
    %101 = arith.truncf %100 : vector<256x512xf32> to vector<256x512xbf16>
    %cst_29 = arith.constant dense<0.000000e+00> : vector<4x512xf32>
    %102 = tpu.matmul %0, %101, %cst_29 {dimension_numbers = #tpu.dot_dimension_numbers<[1], [0], [0], [1], [0, 0, 1, 1], [], []>} : vector<4x256xbf16>, vector<256x512xbf16>, vector<4x512xf32> -> vector<4x512xf32>
    %103 = arith.truncf %102 : vector<4x512xf32> to vector<4x512xbf16>
    %c0_30 = arith.constant 0 : index
    %104 = arith.index_cast %94 : i32 to index
    %105 = vector.load %arg3[%c0_30, %104] : memref<4x4096xbf16, #tpu.memory_space<vmem>>, vector<4x512xbf16>
    tpu.vector_store %arg3[%c0_30, %104], %103 {strides = array<i32>} : memref<4x4096xbf16, #tpu.memory_space<vmem>>, vector<4x512xbf16>,
    %c8_i32 = arith.constant 8 : i32
    return
  }
  func.func @transform_0(%arg0: i32) -> (i32, i32) {
    %c0_i32 = arith.constant 0 : i32
    %c0_i32_0 = arith.constant 0 : i32
    return %c0_i32, %arg0 : i32, i32
  }
  func.func @transform_1(%arg0: i32) -> (i32, i32) {
    %c0_i32 = arith.constant 0 : i32
    %c0_i32_0 = arith.constant 0 : i32
    %c0_i32_1 = arith.constant 0 : i32
    return %c0_i32, %c0_i32_0 : i32, i32
  }
  func.func @transform_2(%arg0: i32) -> (i32, i32) {
    %c0_i32 = arith.constant 0 : i32
    %c0_i32_0 = arith.constant 0 : i32
    return %c0_i32, %arg0 : i32, i32
  }
}

</mosaic_0001>

<llo_original>
// kernel: relative_position_bias_2d.1
$region0: #{relative_position_bias_2d.1}
  #allocation0 [shape = 'u32[]', space=smem, size = 0x4, offset = 0x4, fixed_abs, tag = 'smem constant byte address 0x4 - core index']
  #allocation1 [shape = 'u32[144,128]{1,0:T(1,128)}', space=vmem, size = 0x12000, scoped, tag = 'internal scratch']
  %s0 = inlined_call_operand.vmem [shape: s32[1,4096], index: 0, kind: input, shape index: {}]
  %s1 = inlined_call_operand.vmem [shape: bf16[4,256], index: 1, kind: input, shape index: {}]
  %s2 = inlined_call_operand.vmem [shape: bf16[4,4096], index: 2, kind: output, shape index: {}]
  %s3 = sld [smem:[#allocation0]]
  $region18: #{relative_position_bias_2d.1} parent=0
    _
  %s5 = ssub.s32 1, %s3
  %s6 = scalar_select 0, %s5, %s3
  // Predicated region
  $region2: #{relative_position_bias_2d.1} parent=0 // pred_check
    _
  $region3: #{relative_position_bias_2d.1} parent=0 // pred_check_branch
    %8 = sbr.rel (0) target = $region5
  $region4: #{relative_position_bias_2d.1} parent=0 // pred_region
    _
  $region5: #{relative_position_bias_2d.1} parent=0 // pred_fallthru
    _
  // Predicated region
  $region6: #{relative_position_bias_2d.1} parent=0 // pred_check
    _
  $region7: #{relative_position_bias_2d.1} parent=0 // pred_check_branch
    %10 = sbr.rel (0) target = $region9
  $region8: #{relative_position_bias_2d.1} parent=0 // pred_region
    _
  $region9: #{relative_position_bias_2d.1} parent=0 // pred_fallthru
    _
  %v11 = vld [vmem:[%s1] sm:$0xf]
  %v12 = vlaneseq
  %v13 = vshrl.u32 %v12, 7
  %v14 = vadd.s32 %v13, 8
  %v15 = vadd.s32 %v13, 16
  %v16 = vadd.s32 %v13, 24
  %v17 = vadd.s32 %v13, 32
  %v18 = vadd.s32 %v13, 40
  %v19 = vadd.s32 %v13, 48
  %v20 = vadd.s32 %v13, 56
  %v21 = vadd.s32 %v13, 64
  %v22 = vadd.s32 %v13, 72
  %v23 = vadd.s32 %v13, 80
  %v24 = vadd.s32 %v13, 88
  %v25 = vadd.s32 %v13, 96
  %v26 = vadd.s32 %v13, 104
  %v27 = vadd.s32 %v13, 112
  %v28 = vadd.s32 %v13, 120
  %v29 = vadd.s32 %v13, 128
  %v30 = vadd.s32 %v13, 136
  %v31 = vadd.s32 %v13, 144
  %v32 = vadd.s32 %v13, 152
  %v33 = vadd.s32 %v13, 160
  %v34 = vadd.s32 %v13, 168
  %v35 = vadd.s32 %v13, 176
  %v36 = vadd.s32 %v13, 184
  %v37 = vadd.s32 %v13, 192
  %v38 = vadd.s32 %v13, 200
  %v39 = vadd.s32 %v13, 208
  %v40 = vadd.s32 %v13, 216
  %v41 = vadd.s32 %v13, 224
  %v42 = vadd.s32 %v13, 232
  %v43 = vadd.s32 %v13, 240
  %v44 = vadd.s32 %v13, 248
  %v45 = vld [vmem:[%s0] sm:$0xf]
  %v46 = vlaneseq
  %v47 = vshrl.u32 %v46, 7
  %v48 = vsub.s32 0, %v47
  %v49 = vrot.slane %v45, %v48
  %v50 = vlaneseq
  %v51 = vshrl.u32 %v50, 7
  %v52 = vsub.s32 1, %v51
  %v53 = vrot.slane %v45, %v52
  %v54 = vlaneseq
  %v55 = vshrl.u32 %v54, 7
  %v56 = vsub.s32 2, %v55
  %v57 = vrot.slane %v45, %v56
  %v58 = vlaneseq
  %v59 = vshrl.u32 %v58, 7
  %v60 = vsub.s32 3, %v59
  %v61 = vrot.slane %v45, %v60
  %vm62 = vcmp.eq.s32.totalorder %v13, %v49
  %vm63 = vcmp.eq.s32.totalorder %v13, %v53
  %vm64 = vcmp.eq.s32.totalorder %v13, %v57
  %vm65 = vcmp.eq.s32.totalorder %v13, %v61
  %vm66 = vcmp.eq.s32.totalorder %v14, %v49
  %vm67 = vcmp.eq.s32.totalorder %v14, %v53
  %vm68 = vcmp.eq.s32.totalorder %v14, %v57
  %vm69 = vcmp.eq.s32.totalorder %v14, %v61
  %vm70 = vcmp.eq.s32.totalorder %v15, %v49
  %vm71 = vcmp.eq.s32.totalorder %v15, %v53
  %vm72 = vcmp.eq.s32.totalorder %v15, %v57
  %vm73 = vcmp.eq.s32.totalorder %v15, %v61
  %vm74 = vcmp.eq.s32.totalorder %v16, %v49
  %vm75 = vcmp.eq.s32.totalorder %v16, %v53
  %vm76 = vcmp.eq.s32.totalorder %v16, %v57
  %vm77 = vcmp.eq.s32.totalorder %v16, %v61
  %vm78 = vcmp.eq.s32.totalorder %v17, %v49
  %vm79 = vcmp.eq.s32.totalorder %v17, %v53
  %vm80 = vcmp.eq.s32.totalorder %v17, %v57
  %vm81 = vcmp.eq.s32.totalorder %v17, %v61
  %vm82 = vcmp.eq.s32.totalorder %v18, %v49
  %vm83 = vcmp.eq.s32.totalorder %v18, %v53
  %vm84 = vcmp.eq.s32.totalorder %v18, %v57
  %vm85 = vcmp.eq.s32.totalorder %v18, %v61
  %vm86 = vcmp.eq.s32.totalorder %v19, %v49
  %vm87 = vcmp.eq.s32.totalorder %v19, %v53
  %vm88 = vcmp.eq.s32.totalorder %v19, %v57
  %vm89 = vcmp.eq.s32.totalorder %v19, %v61
  %vm90 = vcmp.eq.s32.totalorder %v20, %v49
  %vm91 = vcmp.eq.s32.totalorder %v20, %v53
  %vm92 = vcmp.eq.s32.totalorder %v20, %v57
  %vm93 = vcmp.eq.s32.totalorder %v20, %v61
  %vm94 = vcmp.eq.s32.totalorder %v21, %v49
  %vm95 = vcmp.eq.s32.totalorder %v21, %v53
  %vm96 = vcmp.eq.s32.totalorder %v21, %v57
  %vm97 = vcmp.eq.s32.totalorder %v21, %v61
  %vm98 = vcmp.eq.s32.totalorder %v22, %v49
  %vm99 = vcmp.eq.s32.totalorder %v22, %v53
  %vm100 = vcmp.eq.s32.totalorder %v22, %v57
  %vm101 = vcmp.eq.s32.totalorder %v22, %v61
  %vm102 = vcmp.eq.s32.totalorder %v23, %v49
  %vm103 = vcmp.eq.s32.totalorder %v23, %v53
  %vm104 = vcmp.eq.s32.totalorder %v23, %v57
  %vm105 = vcmp.eq.s32.totalorder %v23, %v61
  %vm106 = vcmp.eq.s32.totalorder %v24, %v49
  %vm107 = vcmp.eq.s32.totalorder %v24, %v53
  %vm108 = vcmp.eq.s32.totalorder %v24, %v57
  %vm109 = vcmp.eq.s32.totalorder %v24, %v61
  %vm110 = vcmp.eq.s32.totalorder %v25, %v49
  %vm111 = vcmp.eq.s32.totalorder %v25, %v53
  %vm112 = vcmp.eq.s32.totalorder %v25, %v57
  %vm113 = vcmp.eq.s32.totalorder %v25, %v61
  %vm114 = vcmp.eq.s32.totalorder %v26, %v49
  %vm115 = vcmp.eq.s32.totalorder %v26, %v53
  %vm116 = vcmp.eq.s32.totalorder %v26, %v57
  %vm117 = vcmp.eq.s32.totalorder %v26, %v61
  %vm118 = vcmp.eq.s32.totalorder %v27, %v49
  %vm119 = vcmp.eq.s32.totalorder %v27, %v53
  %vm120 = vcmp.eq.s32.totalorder %v27, %v57
  %vm121 = vcmp.eq.s32.totalorder %v27, %v61
  %vm122 = vcmp.eq.s32.totalorder %v28, %v49
  %vm123 = vcmp.eq.s32.totalorder %v28, %v53
  %vm124 = vcmp.eq.s32.totalorder %v28, %v57
  %vm125 = vcmp.eq.s32.totalorder %v28, %v61
  %vm126 = vcmp.eq.s32.totalorder %v29, %v49
  %vm127 = vcmp.eq.s32.totalorder %v29, %v53
  %vm128 = vcmp.eq.s32.totalorder %v29, %v57
  %vm129 = vcmp.eq.s32.totalorder %v29, %v61
  %vm130 = vcmp.eq.s32.totalorder %v30, %v49
  %vm131 = vcmp.eq.s32.totalorder %v30, %v53
  %vm132 = vcmp.eq.s32.totalorder %v30, %v57
  %vm133 = vcmp.eq.s32.totalorder %v30, %v61
  %vm134 = vcmp.eq.s32.totalorder %v31, %v49
  %vm135 = vcmp.eq.s32.totalorder %v31, %v53
  %vm136 = vcmp.eq.s32.totalorder %v31, %v57
  %vm137 = vcmp.eq.s32.totalorder %v31, %v61
  %vm138 = vcmp.eq.s32.totalorder %v32, %v49
  %vm139 = vcmp.eq.s32.totalorder %v32, %v53
  %vm140 = vcmp.eq.s32.totalorder %v32, %v57
  %vm141 = vcmp.eq.s32.totalorder %v32, %v61
  %vm142 = vcmp.eq.s32.totalorder %v33, %v49
  %vm143 = vcmp.eq.s32.totalorder %v33, %v53
  %vm144 = vcmp.eq.s32.totalorder %v33, %v57
  %vm145 = vcmp.eq.s32.totalorder %v33, %v61
  %vm146 = vcmp.eq.s32.totalorder %v34, %v49
  %vm147 = vcmp.eq.s32.totalorder %v34, %v53
  %vm148 = vcmp.eq.s32.totalorder %v34, %v57
  %vm149 = vcmp.eq.s32.totalorder %v34, %v61
  %vm150 = vcmp.eq.s32.totalorder %v35, %v49
  %vm151 = vcmp.eq.s32.totalorder %v35, %v53
  %vm152 = vcmp.eq.s32.totalorder %v35, %v57
  %vm153 = vcmp.eq.s32.totalorder %v35, %v61
  %vm154 = vcmp.eq.s32.totalorder %v36, %v49
  %vm155 = vcmp.eq.s32.totalorder %v36, %v53
  %vm156 = vcmp.eq.s32.totalorder %v36, %v57
  %vm157 = vcmp.eq.s32.totalorder %v36, %v61
  %vm158 = vcmp.eq.s32.totalorder %v37, %v49
  %vm159 = vcmp.eq.s32.totalorder %v37, %v53
  %vm160 = vcmp.eq.s32.totalorder %v37, %v57
  %vm161 = vcmp.eq.s32.totalorder %v37, %v61
  %vm162 = vcmp.eq.s32.totalorder %v38, %v49
  %vm163 = vcmp.eq.s32.totalorder %v38, %v53
  %vm164 = vcmp.eq.s32.totalorder %v38, %v57
  %vm165 = vcmp.eq.s32.totalorder %v38, %v61
  %vm166 = vcmp.eq.s32.totalorder %v39, %v49
  %vm167 = vcmp.eq.s32.totalorder %v39, %v53
  %vm168 = vcmp.eq.s32.totalorder %v39, %v57
  %vm169 = vcmp.eq.s32.totalorder %v39, %v61
  %vm170 = vcmp.eq.s32.totalorder %v40, %v49
  %vm171 = vcmp.eq.s32.totalorder %v40, %v53
  %vm172 = vcmp.eq.s32.totalorder %v40, %v57
  %vm173 = vcmp.eq.s32.totalorder %v40, %v61
  %vm174 = vcmp.eq.s32.totalorder %v41, %v49
  %vm175 = vcmp.eq.s32.totalorder %v41, %v53
  %vm176 = vcmp.eq.s32.totalorder %v41, %v57
  %vm177 = vcmp.eq.s32.totalorder %v41, %v61
  %vm178 = vcmp.eq.s32.totalorder %v42, %v49
  %vm179 = vcmp.eq.s32.totalorder %v42, %v53
  %vm180 = vcmp.eq.s32.totalorder %v42, %v57
  %vm181 = vcmp.eq.s32.totalorder %v42, %v61
  %vm182 = vcmp.eq.s32.totalorder %v43, %v49
  %vm183 = vcmp.eq.s32.totalorder %v43, %v53
  %vm184 = vcmp.eq.s32.totalorder %v43, %v57
  %vm185 = vcmp.eq.s32.totalorder %v43, %v61
  %vm186 = vcmp.eq.s32.totalorder %v44, %v49
  %vm187 = vcmp.eq.s32.totalorder %v44, %v53
  %vm188 = vcmp.eq.s32.totalorder %v44, %v57
  %vm189 = vcmp.eq.s32.totalorder %v44, %v61
  %v190 = vsel %vm62, 1, 0
  %v191 = vsel %vm63, 1, 0
  %v192 = vsel %vm64, 1, 0
  %v193 = vsel %vm65, 1, 0
  %v194 = vsel %vm66, 1, 0
  %v195 = vsel %vm67, 1, 0
  %v196 = vsel %vm68, 1, 0
  %v197 = vsel %vm69, 1, 0
  %v198 = vsel %vm70, 1, 0
  %v199 = vsel %vm71, 1, 0
  %v200 = vsel %vm72, 1, 0
  %v201 = vsel %vm73, 1, 0
  %v202 = vsel %vm74, 1, 0
  %v203 = vsel %vm75, 1, 0
  %v204 = vsel %vm76, 1, 0
  %v205 = vsel %vm77, 1, 0
  %v206 = vsel %vm78, 1, 0
  %v207 = vsel %vm79, 1, 0
  %v208 = vsel %vm80, 1, 0
  %v209 = vsel %vm81, 1, 0
  %v210 = vsel %vm82, 1, 0
  %v211 = vsel %vm83, 1, 0
  %v212 = vsel %vm84, 1, 0
  %v213 = vsel %vm85, 1, 0
  %v214 = vsel %vm86, 1, 0
  %v215 = vsel %vm87, 1, 0
  %v216 = vsel %vm88, 1, 0
  %v217 = vsel %vm89, 1, 0
  %v218 = vsel %vm90, 1, 0
  %v219 = vsel %vm91, 1, 0
  %v220 = vsel %vm92, 1, 0
  %v221 = vsel %vm93, 1, 0
  %v222 = vsel %vm94, 1, 0
  %v223 = vsel %vm95, 1, 0
  %v224 = vsel %vm96, 1, 0
  %v225 = vsel %vm97, 1, 0
  %v226 = vsel %vm98, 1, 0
  %v227 = vsel %vm99, 1, 0
  %v228 = vsel %vm100, 1, 0
  %v229 = vsel %vm101, 1, 0
  %v230 = vsel %vm102, 1, 0
  %v231 = vsel %vm103, 1, 0
  %v232 = vsel %vm104, 1, 0
  %v233 = vsel %vm105, 1, 0
  %v234 = vsel %vm106, 1, 0
  %v235 = vsel %vm107, 1, 0
  %v236 = vsel %vm108, 1, 0
  %v237 = vsel %vm109, 1, 0
  %v238 = vsel %vm110, 1, 0
  %v239 = vsel %vm111, 1, 0
  %v240 = vsel %vm112, 1, 0
  %v241 = vsel %vm113, 1, 0
  %v242 = vsel %vm114, 1, 0
  %v243 = vsel %vm115, 1, 0
  %v244 = vsel %vm116, 1, 0
  %v245 = vsel %vm117, 1, 0
  %v246 = vsel %vm118, 1, 0
  %v247 = vsel %vm119, 1, 0
  %v248 = vsel %vm120, 1, 0
  %v249 = vsel %vm121, 1, 0
  %v250 = vsel %vm122, 1, 0
  %v251 = vsel %vm123, 1, 0
  %v252 = vsel %vm124, 1, 0
  %v253 = vsel %vm125, 1, 0
  %v254 = vsel %vm126, 1, 0
  %v255 = vsel %vm127, 1, 0
  %v256 = vsel %vm128, 1, 0
  %v257 = vsel %vm129, 1, 0
  %v258 = vsel %vm130, 1, 0
  %v259 = vsel %vm131, 1, 0
  %v260 = vsel %vm132, 1, 0
  %v261 = vsel %vm133, 1, 0
  %v262 = vsel %vm134, 1, 0
  %v263 = vsel %vm135, 1, 0
  %v264 = vsel %vm136, 1, 0
  %v265 = vsel %vm137, 1, 0
  %v266 = vsel %vm138, 1, 0
  %v267 = vsel %vm139, 1, 0
  %v268 = vsel %vm140, 1, 0
  %v269 = vsel %vm141, 1, 0
  %v270 = vsel %vm142, 1, 0
  %v271 = vsel %vm143, 1, 0
  %v272 = vsel %vm144, 1, 0
  %v273 = vsel %vm145, 1, 0
  %v274 = vsel %vm146, 1, 0
  %v275 = vsel %vm147, 1, 0
  %v276 = vsel %vm148, 1, 0
  %v277 = vsel %vm149, 1, 0
  %v278 = vsel %vm150, 1, 0
  %v279 = vsel %vm151, 1, 0
  %v280 = vsel %vm152, 1, 0
  %v281 = vsel %vm153, 1, 0
  %v282 = vsel %vm154, 1, 0
  %v283 = vsel %vm155, 1, 0
  %v284 = vsel %vm156, 1, 0
  %v285 = vsel %vm157, 1, 0
  %v286 = vsel %vm158, 1, 0
  %v287 = vsel %vm159, 1, 0
  %v288 = vsel %vm160, 1, 0
  %v289 = vsel %vm161, 1, 0
  %v290 = vsel %vm162, 1, 0
  %v291 = vsel %vm163, 1, 0
  %v292 = vsel %vm164, 1, 0
  %v293 = vsel %vm165, 1, 0
  %v294 = vsel %vm166, 1, 0
  %v295 = vsel %vm167, 1, 0
  %v296 = vsel %vm168, 1, 0
  %v297 = vsel %vm169, 1, 0
  %v298 = vsel %vm170, 1, 0
  %v299 = vsel %vm171, 1, 0
  %v300 = vsel %vm172, 1, 0
  %v301 = vsel %vm173, 1, 0
  %v302 = vsel %vm174, 1, 0
  %v303 = vsel %vm175, 1, 0
  %v304 = vsel %vm176, 1, 0
  %v305 = vsel %vm177, 1, 0
  %v306 = vsel %vm178, 1, 0
  %v307 = vsel %vm179, 1, 0
  %v308 = vsel %vm180, 1, 0
  %v309 = vsel %vm181, 1, 0
  %v310 = vsel %vm182, 1, 0
  %v311 = vsel %vm183, 1, 0
  %v312 = vsel %vm184, 1, 0
  %v313 = vsel %vm185, 1, 0
  %v314 = vsel %vm186, 1, 0
  %v315 = vsel %vm187, 1, 0
  %v316 = vsel %vm188, 1, 0
  %v317 = vsel %vm189, 1, 0
  %v318 = vcvt.s32.f32 %v190
  %v319 = vcvt.s32.f32 %v191
  %v320 = vcvt.s32.f32 %v192
  %v321 = vcvt.s32.f32 %v193
  %v322 = vcvt.s32.f32 %v194
  %v323 = vcvt.s32.f32 %v195
  %v324 = vcvt.s32.f32 %v196
  %v325 = vcvt.s32.f32 %v197
  %v326 = vcvt.s32.f32 %v198
  %v327 = vcvt.s32.f32 %v199
  %v328 = vcvt.s32.f32 %v200
  %v329 = vcvt.s32.f32 %v201
  %v330 = vcvt.s32.f32 %v202
  %v331 = vcvt.s32.f32 %v203
  %v332 = vcvt.s32.f32 %v204
  %v333 = vcvt.s32.f32 %v205
  %v334 = vcvt.s32.f32 %v206
  %v335 = vcvt.s32.f32 %v207
  %v336 = vcvt.s32.f32 %v208
  %v337 = vcvt.s32.f32 %v209
  %v338 = vcvt.s32.f32 %v210
  %v339 = vcvt.s32.f32 %v211
  %v340 = vcvt.s32.f32 %v212
  %v341 = vcvt.s32.f32 %v213
  %v342 = vcvt.s32.f32 %v214
  %v343 = vcvt.s32.f32 %v215
  %v344 = vcvt.s32.f32 %v216
  %v345 = vcvt.s32.f32 %v217
  %v346 = vcvt.s32.f32 %v218
  %v347 = vcvt.s32.f32 %v219
  %v348 = vcvt.s32.f32 %v220
  %v349 = vcvt.s32.f32 %v221
  %v350 = vcvt.s32.f32 %v222
  %v351 = vcvt.s32.f32 %v223
  %v352 = vcvt.s32.f32 %v224
  %v353 = vcvt.s32.f32 %v225
  %v354 = vcvt.s32.f32 %v226
  %v355 = vcvt.s32.f32 %v227
  %v356 = vcvt.s32.f32 %v228
  %v357 = vcvt.s32.f32 %v229
  %v358 = vcvt.s32.f32 %v230
  %v359 = vcvt.s32.f32 %v231
  %v360 = vcvt.s32.f32 %v232
  %v361 = vcvt.s32.f32 %v233
  %v362 = vcvt.s32.f32 %v234
  %v363 = vcvt.s32.f32 %v235
  %v364 = vcvt.s32.f32 %v236
  %v365 = vcvt.s32.f32 %v237
  %v366 = vcvt.s32.f32 %v238
  %v367 = vcvt.s32.f32 %v239
  %v368 = vcvt.s32.f32 %v240
  %v369 = vcvt.s32.f32 %v241
  %v370 = vcvt.s32.f32 %v242
  %v371 = vcvt.s32.f32 %v243
  %v372 = vcvt.s32.f32 %v244
  %v373 = vcvt.s32.f32 %v245
  %v374 = vcvt.s32.f32 %v246
  %v375 = vcvt.s32.f32 %v247
  %v376 = vcvt.s32.f32 %v248
  %v377 = vcvt.s32.f32 %v249
  %v378 = vcvt.s32.f32 %v250
  %v379 = vcvt.s32.f32 %v251
  %v380 = vcvt.s32.f32 %v252
  %v381 = vcvt.s32.f32 %v253
  %v382 = vcvt.s32.f32 %v254
  %v383 = vcvt.s32.f32 %v255
  %v384 = vcvt.s32.f32 %v256
  %v385 = vcvt.s32.f32 %v257
  %v386 = vcvt.s32.f32 %v258
  %v387 = vcvt.s32.f32 %v259
  %v388 = vcvt.s32.f32 %v260
  %v389 = vcvt.s32.f32 %v261
  %v390 = vcvt.s32.f32 %v262
  %v391 = vcvt.s32.f32 %v263
  %v392 = vcvt.s32.f32 %v264
  %v393 = vcvt.s32.f32 %v265
  %v394 = vcvt.s32.f32 %v266
  %v395 = vcvt.s32.f32 %v267
  %v396 = vcvt.s32.f32 %v268
  %v397 = vcvt.s32.f32 %v269
  %v398 = vcvt.s32.f32 %v270
  %v399 = vcvt.s32.f32 %v271
  %v400 = vcvt.s32.f32 %v272
  %v401 = vcvt.s32.f32 %v273
  %v402 = vcvt.s32.f32 %v274
  %v403 = vcvt.s32.f32 %v275
  %v404 = vcvt.s32.f32 %v276
  %v405 = vcvt.s32.f32 %v277
  %v406 = vcvt.s32.f32 %v278
  %v407 = vcvt.s32.f32 %v279
  %v408 = vcvt.s32.f32 %v280
  %v409 = vcvt.s32.f32 %v281
  %v410 = vcvt.s32.f32 %v282
  %v411 = vcvt.s32.f32 %v283
  %v412 = vcvt.s32.f32 %v284
  %v413 = vcvt.s32.f32 %v285
  %v414 = vcvt.s32.f32 %v286
  %v415 = vcvt.s32.f32 %v287
  %v416 = vcvt.s32.f32 %v288
  %v417 = vcvt.s32.f32 %v289
  %v418 = vcvt.s32.f32 %v290
  %v419 = vcvt.s32.f32 %v291
  %v420 = vcvt.s32.f32 %v292
  %v421 = vcvt.s32.f32 %v293
  %v422 = vcvt.s32.f32 %v294
  %v423 = vcvt.s32.f32 %v295
  %v424 = vcvt.s32.f32 %v296
  %v425 = vcvt.s32.f32 %v297
  %v426 = vcvt.s32.f32 %v298
  %v427 = vcvt.s32.f32 %v299
  %v428 = vcvt.s32.f32 %v300
  %v429 = vcvt.s32.f32 %v301
  %v430 = vcvt.s32.f32 %v302
  %v431 = vcvt.s32.f32 %v303
  %v432 = vcvt.s32.f32 %v304
  %v433 = vcvt.s32.f32 %v305
  %v434 = vcvt.s32.f32 %v306
  %v435 = vcvt.s32.f32 %v307
  %v436 = vcvt.s32.f32 %v308
  %v437 = vcvt.s32.f32 %v309
  %v438 = vcvt.s32.f32 %v310
  %v439 = vcvt.s32.f32 %v311
  %v440 = vcvt.s32.f32 %v312
  %v441 = vcvt.s32.f32 %v313
  %v442 = vcvt.s32.f32 %v314
  %v443 = vcvt.s32.f32 %v315
  %v444 = vcvt.s32.f32 %v316
  %v445 = vcvt.s32.f32 %v317
  %v446 = vpack.c.bf16 %v322, %v318
  %v447 = vpack.c.bf16 %v323, %v319
  %v448 = vpack.c.bf16 %v324, %v320
  %v449 = vpack.c.bf16 %v325, %v321
  %v450 = vpack.c.bf16 %v330, %v326
  %v451 = vpack.c.bf16 %v331, %v327
  %v452 = vpack.c.bf16 %v332, %v328
  %v453 = vpack.c.bf16 %v333, %v329
  %v454 = vpack.c.bf16 %v338, %v334
  %v455 = vpack.c.bf16 %v339, %v335
  %v456 = vpack.c.bf16 %v340, %v336
  %v457 = vpack.c.bf16 %v341, %v337
  %v458 = vpack.c.bf16 %v346, %v342
  %v459 = vpack.c.bf16 %v347, %v343
  %v460 = vpack.c.bf16 %v348, %v344
  %v461 = vpack.c.bf16 %v349, %v345
  %v462 = vpack.c.bf16 %v354, %v350
  %v463 = vpack.c.bf16 %v355, %v351
  %v464 = vpack.c.bf16 %v356, %v352
  %v465 = vpack.c.bf16 %v357, %v353
  %v466 = vpack.c.bf16 %v362, %v358
  %v467 = vpack.c.bf16 %v363, %v359
  %v468 = vpack.c.bf16 %v364, %v360
  %v469 = vpack.c.bf16 %v365, %v361
  %v470 = vpack.c.bf16 %v370, %v366
  %v471 = vpack.c.bf16 %v371, %v367
  %v472 = vpack.c.bf16 %v372, %v368
  %v473 = vpack.c.bf16 %v373, %v369
  %v474 = vpack.c.bf16 %v378, %v374
  %v475 = vpack.c.bf16 %v379, %v375
  %v476 = vpack.c.bf16 %v380, %v376
  %v477 = vpack.c.bf16 %v381, %v377
  %v478 = vpack.c.bf16 %v386, %v382
  %v479 = vpack.c.bf16 %v387, %v383
  %v480 = vpack.c.bf16 %v388, %v384
  %v481 = vpack.c.bf16 %v389, %v385
  %v482 = vpack.c.bf16 %v394, %v390
  %v483 = vpack.c.bf16 %v395, %v391
  %v484 = vpack.c.bf16 %v396, %v392
  %v485 = vpack.c.bf16 %v397, %v393
  %v486 = vpack.c.bf16 %v402, %v398
  %v487 = vpack.c.bf16 %v403, %v399
  %v488 = vpack.c.bf16 %v404, %v400
  %v489 = vpack.c.bf16 %v405, %v401
  %v490 = vpack.c.bf16 %v410, %v406
  %v491 = vpack.c.bf16 %v411, %v407
  %v492 = vpack.c.bf16 %v412, %v408
  %v493 = vpack.c.bf16 %v413, %v409
  %v494 = vpack.c.bf16 %v418, %v414
  %v495 = vpack.c.bf16 %v419, %v415
  %v496 = vpack.c.bf16 %v420, %v416
  %v497 = vpack.c.bf16 %v421, %v417
  %v498 = vpack.c.bf16 %v426, %v422
  %v499 = vpack.c.bf16 %v427, %v423
  %v500 = vpack.c.bf16 %v428, %v424
  %v501 = vpack.c.bf16 %v429, %v425
  %v502 = vpack.c.bf16 %v434, %v430
  %v503 = vpack.c.bf16 %v435, %v431
  %v504 = vpack.c.bf16 %v436, %v432
  %v505 = vpack.c.bf16 %v437, %v433
  %v506 = vpack.c.bf16 %v442, %v438
  %v507 = vpack.c.bf16 %v443, %v439
  %v508 = vpack.c.bf16 %v444, %v440
  %v509 = vpack.c.bf16 %v445, %v441
  %v512 = vunpack.c.l.s4 1983009808
  %v513 = vunpack.c.0.s8 %v512
  %v514 = vlaneseq
  %v515 = vshrl.u32 %v514, 7
  %v516 = vsub.s32 %v513, %v515
  %v517 = vrot.slane %v11, %v516
  %v518 = vcombine.high %v517, %v517
  %521 = vmatprep.subr.bf16.mxu0 %v447
  %522 = vmatpush1.bf16.msra.mxu0 %v446
  %523 = vmatprep.subr.bf16.mxu0 %v451
  %524 = vmatpush1.bf16.msra.mxu0 %v450
  %525 = vmatprep.subr.bf16.mxu0 %v455
  %526 = vmatpush1.bf16.msra.mxu0 %v454
  %527 = vmatprep.subr.bf16.mxu0 %v459
  %528 = vmatpush1.bf16.msra.mxu0 %v458
  %529 = vmatprep.subr.bf16.mxu0 %v463
  %530 = vmatpush1.bf16.msra.mxu0 %v462
  %531 = vmatprep.subr.bf16.mxu0 %v467
  %532 = vmatpush1.bf16.msra.mxu0 %v466
  %533 = vmatprep.subr.bf16.mxu0 %v471
  %534 = vmatpush1.bf16.msra.mxu0 %v470
  %535 = vmatprep.subr.bf16.mxu0 %v475
  %536 = vmatpush1.bf16.msra.mxu0 %v474
  %537 = vmatprep.subr.bf16.mxu0 %v479
  %538 = vmatpush1.bf16.msra.mxu0 %v478
  %539 = vmatprep.subr.bf16.mxu0 %v483
  %540 = vmatpush1.bf16.msra.mxu0 %v482
  %541 = vmatprep.subr.bf16.mxu0 %v487
  %542 = vmatpush1.bf16.msra.mxu0 %v486
  %543 = vmatprep.subr.bf16.mxu0 %v491
  %544 = vmatpush1.bf16.msra.mxu0 %v490
  %545 = vmatprep.subr.bf16.mxu0 %v495
  %546 = vmatpush1.bf16.msra.mxu0 %v494
  %547 = vmatprep.subr.bf16.mxu0 %v499
  %548 = vmatpush1.bf16.msra.mxu0 %v498
  %549 = vmatprep.subr.bf16.mxu0 %v503
  %550 = vmatpush1.bf16.msra.mxu0 %v502
  %551 = vmatprep.subr.bf16.mxu0 %v507
  %552 = vmatpush1.bf16.msra.mxu0 %v506
  %553 = vmatprep.mubr.bf16.mxu0 %v518
  %554 = vmatmul.mubr.bf16.gmra.mrb[0].mxu0 %v517
  %v555 = vpop.f32.mrb[0].mxu0
  %v556 = vadd.f32 0.0, %v555
  %v557 = vpop.f32.mrb[0].mxu0
  %v558 = vadd.f32 0.0, %v557
  %v559 = vpop.f32.mrb[0].mxu0
  %v560 = vpop.f32.mrb[0].mxu0
  %561 = vdwg.mxu0
  %562 = vmatprep.subr.bf16.mxu0 %v449
  %563 = vmatpush1.bf16.msra.mxu0 %v448
  %564 = vmatprep.subr.bf16.mxu0 %v453
  %565 = vmatpush1.bf16.msra.mxu0 %v452
  %566 = vmatprep.subr.bf16.mxu0 %v457
  %567 = vmatpush1.bf16.msra.mxu0 %v456
  %568 = vmatprep.subr.bf16.mxu0 %v461
  %569 = vmatpush1.bf16.msra.mxu0 %v460
  %570 = vmatprep.subr.bf16.mxu0 %v465
  %571 = vmatpush1.bf16.msra.mxu0 %v464
  %572 = vmatprep.subr.bf16.mxu0 %v469
  %573 = vmatpush1.bf16.msra.mxu0 %v468
  %574 = vmatprep.subr.bf16.mxu0 %v473
  %575 = vmatpush1.bf16.msra.mxu0 %v472
  %576 = vmatprep.subr.bf16.mxu0 %v477
  %577 = vmatpush1.bf16.msra.mxu0 %v476
  %578 = vmatprep.subr.bf16.mxu0 %v481
  %579 = vmatpush1.bf16.msra.mxu0 %v480
  %580 = vmatprep.subr.bf16.mxu0 %v485
  %581 = vmatpush1.bf16.msra.mxu0 %v484
  %582 = vmatprep.subr.bf16.mxu0 %v489
  %583 = vmatpush1.bf16.msra.mxu0 %v488
  %584 = vmatprep.subr.bf16.mxu0 %v493
  %585 = vmatpush1.bf16.msra.mxu0 %v492
  %586 = vmatprep.subr.bf16.mxu0 %v497
  %587 = vmatpush1.bf16.msra.mxu0 %v496
  %588 = vmatprep.subr.bf16.mxu0 %v501
  %589 = vmatpush1.bf16.msra.mxu0 %v500
  %590 = vmatprep.subr.bf16.mxu0 %v505
  %591 = vmatpush1.bf16.msra.mxu0 %v504
  %592 = vmatprep.subr.bf16.mxu0 %v509
  %593 = vmatpush1.bf16.msra.mxu0 %v508
  %594 = vmatprep.mubr.bf16.mxu0 %v518
  %595 = vmatmul.mubr.bf16.gmra.mrb[0].mxu0 %v517
  %v596 = vpop.f32.mrb[0].mxu0
  %v597 = vadd.f32 0.0, %v596
  %v598 = vpop.f32.mrb[0].mxu0
  %v599 = vadd.f32 0.0, %v598
  %v600 = vpop.f32.mrb[0].mxu0
  %v601 = vpop.f32.mrb[0].mxu0
  %602 = vdwg.mxu0
  %v603 = vpack.c.bf16 %v556, %v556
  %v604 = vpack.c.bf16 %v558, %v558
  %v605 = vpack.c.bf16 %v597, %v597
  %v606 = vpack.c.bf16 %v599, %v599
  %v611 = vcombine.low %v603, %v604
  %v612 = vcombine.low %v605, %v606
  %v614 = vunpack.c.l.s4 1983009808
  %v615 = vunpack.c.0.s8 %v614
  %v616 = vlaneseq
  %v617 = vshrl.u32 %v616, 7
  %v618 = vsub.s32 %v615, %v617
  %v619 = vrot.slane %v611, %v618
  %v621 = vunpack.c.l.s4 1983009808
  %v622 = vunpack.c.0.s8 %v621
  %v623 = vlaneseq
  %v624 = vshrl.u32 %v623, 7
  %v625 = vsub.s32 %v622, %v624
  %v626 = vrot.slane %v612, %v625
  %v627 = vcombine.low %v619, %v626
  %629 = vst [vmem:[%s2] sm:$0xff] %v627
  %s630 = scalar_lea.vmem %s0, 4
  %v631 = vld [vmem:[%s630] sm:$0xf]
  %v632 = vlaneseq
  %v633 = vshrl.u32 %v632, 7
  %v634 = vsub.s32 0, %v633
  %v635 = vrot.slane %v631, %v634
  %v636 = vlaneseq
  %v637 = vshrl.u32 %v636, 7
  %v638 = vsub.s32 1, %v637
  %v639 = vrot.slane %v631, %v638
  %v640 = vlaneseq
  %v641 = vshrl.u32 %v640, 7
  %v642 = vsub.s32 2, %v641
  %v643 = vrot.slane %v631, %v642
  %v644 = vlaneseq
  %v645 = vshrl.u32 %v644, 7
  %v646 = vsub.s32 3, %v645
  %v647 = vrot.slane %v631, %v646
  %vm648 = vcmp.eq.s32.totalorder %v13, %v635
  %vm649 = vcmp.eq.s32.totalorder %v13, %v639
  %vm650 = vcmp.eq.s32.totalorder %v13, %v643
  %vm651 = vcmp.eq.s32.totalorder %v13, %v647
  %vm652 = vcmp.eq.s32.totalorder %v14, %v635
  %vm653 = vcmp.eq.s32.totalorder %v14, %v639
  %vm654 = vcmp.eq.s32.totalorder %v14, %v643
  %vm655 = vcmp.eq.s32.totalorder %v14, %v647
  %vm656 = vcmp.eq.s32.totalorder %v15, %v635
  %vm657 = vcmp.eq.s32.totalorder %v15, %v639
  %vm658 = vcmp.eq.s32.totalorder %v15, %v643
  %vm659 = vcmp.eq.s32.totalorder %v15, %v647
  %vm660 = vcmp.eq.s32.totalorder %v16, %v635
  %vm661 = vcmp.eq.s32.totalorder %v16, %v639
  %vm662 = vcmp.eq.s32.totalorder %v16, %v643
  %vm663 = vcmp.eq.s32.totalorder %v16, %v647
  %vm664 = vcmp.eq.s32.totalorder %v17, %v635
  %vm665 = vcmp.eq.s32.totalorder %v17, %v639
  %vm666 = vcmp.eq.s32.totalorder %v17, %v643
  %vm667 = vcmp.eq.s32.totalorder %v17, %v647
  %vm668 = vcmp.eq.s32.totalorder %v18, %v635
  %vm669 = vcmp.eq.s32.totalorder %v18, %v639
  %vm670 = vcmp.eq.s32.totalorder %v18, %v643
  %vm671 = vcmp.eq.s32.totalorder %v18, %v647
  %vm672 = vcmp.eq.s32.totalorder %v19, %v635
  %vm673 = vcmp.eq.s32.totalorder %v19, %v639
  %vm674 = vcmp.eq.s32.totalorder %v19, %v643
  %vm675 = vcmp.eq.s32.totalorder %v19, %v647
  %vm676 = vcmp.eq.s32.totalorder %v20, %v635
  %vm677 = vcmp.eq.s32.totalorder %v20, %v639
  %vm678 = vcmp.eq.s32.totalorder %v20, %v643
  %vm679 = vcmp.eq.s32.totalorder %v20, %v647
  %vm680 = vcmp.eq.s32.totalorder %v21, %v635
  %vm681 = vcmp.eq.s32.totalorder %v21, %v639
  %vm682 = vcmp.eq.s32.totalorder %v21, %v643
  %vm683 = vcmp.eq.s32.totalorder %v21, %v647
  %vm684 = vcmp.eq.s32.totalorder %v22, %v635
  %vm685 = vcmp.eq.s32.totalorder %v22, %v639
  %vm686 = vcmp.eq.s32.totalorder %v22, %v643
  %vm687 = vcmp.eq.s32.totalorder %v22, %v647
  %vm688 = vcmp.eq.s32.totalorder %v23, %v635
  %vm689 = vcmp.eq.s32.totalorder %v23, %v639
  %vm690 = vcmp.eq.s32.totalorder %v23, %v643
  %vm691 = vcmp.eq.s32.totalorder %v23, %v647
  %vm692 = vcmp.eq.s32.totalorder %v24, %v635
  %vm693 = vcmp.eq.s32.totalorder %v24, %v639
  %vm694 = vcmp.eq.s32.totalorder %v24, %v643
  %vm695 = vcmp.eq.s32.totalorder %v24, %v647
  %vm696 = vcmp.eq.s32.totalorder %v25, %v635
  %vm697 = vcmp.eq.s32.totalorder %v25, %v639
  %vm698 = vcmp.eq.s32.totalorder %v25, %v643
  %vm699 = vcmp.eq.s32.totalorder %v25, %v647
  %vm700 = vcmp.eq.s32.totalorder %v26, %v635
  %vm701 = vcmp.eq.s32.totalorder %v26, %v639
  %vm702 = vcmp.eq.s32.totalorder %v26, %v643
  %vm703 = vcmp.eq.s32.totalorder %v26, %v647
  %vm704 = vcmp.eq.s32.totalorder %v27, %v635
  %vm705 = vcmp.eq.s32.totalorder %v27, %v639
  %vm706 = vcmp.eq.s32.totalorder %v27, %v643
  %vm707 = vcmp.eq.s32.totalorder %v27, %v647
  %vm708 = vcmp.eq.s32.totalorder %v28, %v635
  %vm709 = vcmp.eq.s32.totalorder %v28, %v639
  %vm710 = vcmp.eq.s32.totalorder %v28, %v643
  %vm711 = vcmp.eq.s32.totalorder %v28, %v647
  %vm712 = vcmp.eq.s32.totalorder %v29, %v635
  %vm713 = vcmp.eq.s32.totalorder %v29, %v639
  %vm714 = vcmp.eq.s32.totalorder %v29, %v643
  %vm715 = vcmp.eq.s32.totalorder %v29, %v647
  %vm716 = vcmp.eq.s32.totalorder %v30, %v635
  %vm717 = vcmp.eq.s32.totalorder %v30, %v639
  %vm718 = vcmp.eq.s32.totalorder %v30, %v643
  %vm719 = vcmp.eq.s32.totalorder %v30, %v647
  %vm720 = vcmp.eq.s32.totalorder %v31, %v635
  %vm721 = vcmp.eq.s32.totalorder %v31, %v639
  %vm722 = vcmp.eq.s32.totalorder %v31, %v643
  %vm723 = vcmp.eq.s32.totalorder %v31, %v647
  %vm724 = vcmp.eq.s32.totalorder %v32, %v635
  %vm725 = vcmp.eq.s32.totalorder %v32, %v639
  %vm726 = vcmp.eq.s32.totalorder %v32, %v643
  %vm727 = vcmp.eq.s32.totalorder %v32, %v647
  %vm728 = vcmp.eq.s32.totalorder %v33, %v635
  %vm729 = vcmp.eq.s32.totalorder %v33, %v639
  %vm730 = vcmp.eq.s32.totalorder %v33, %v643
  %vm731 = vcmp.eq.s32.totalorder %v33, %v647
  %vm732 = vcmp.eq.s32.totalorder %v34, %v635
  %vm733 = vcmp.eq.s32.totalorder %v34, %v639
  %vm734 = vcmp.eq.s32.totalorder %v34, %v643
  %vm735 = vcmp.eq.s32.totalorder %v34, %v647
  %vm736 = vcmp.eq.s32.totalorder %v35, %v635
  %vm737 = vcmp.eq.s32.totalorder %v35, %v639
  %vm738 = vcmp.eq.s32.totalorder %v35, %v643
  %vm739 = vcmp.eq.s32.totalorder %v35, %v647
  %vm740 = vcmp.eq.s32.totalorder %v36, %v635
  %vm741 = vcmp.eq.s32.totalorder %v36, %v639
  %vm742 = vcmp.eq.s32.totalorder %v36, %v643
  %vm743 = vcmp.eq.s32.totalorder %v36, %v647
  %vm744 = vcmp.eq.s32.totalorder %v37, %v635
  %vm745 = vcmp.eq.s32.totalorder %v37, %v639
  %vm746 = vcmp.eq.s32.totalorder %v37, %v643
  %vm747 = vcmp.eq.s32.totalorder %v37, %v647
  %vm748 = vcmp.eq.s32.totalorder %v38, %v635
  %vm749 = vcmp.eq.s32.totalorder %v38, %v639
  %vm750 = vcmp.eq.s32.totalorder %v38, %v643
  %vm751 = vcmp.eq.s32.totalorder %v38, %v647
  %vm752 = vcmp.eq.s32.totalorder %v39, %v635
  %vm753 = vcmp.eq.s32.totalorder %v39, %v639
  %vm754 = vcmp.eq.s32.totalorder %v39, %v643
  %vm755 = vcmp.eq.s32.totalorder %v39, %v647
  %vm756 = vcmp.eq.s32.totalorder %v40, %v635
  %vm757 = vcmp.eq.s32.totalorder %v40, %v639
  %vm758 = vcmp.eq.s32.totalorder %v40, %v643
  %vm759 = vcmp.eq.s32.totalorder %v40, %v647
  %vm760 = vcmp.eq.s32.totalorder %v41, %v635
  %vm761 = vcmp.eq.s32.totalorder %v41, %v639
  %vm762 = vcmp.eq.s32.totalorder %v41, %v643
  %vm763 = vcmp.eq.s32.totalorder %v41, %v647
  %vm764 = vcmp.eq.s32.totalorder %v42, %v635
  %vm765 = vcmp.eq.s32.totalorder %v42, %v639
  %vm766 = vcmp.eq.s32.totalorder %v42, %v643
  %vm767 = vcmp.eq.s32.totalorder %v42, %v647
  %vm768 = vcmp.eq.s32.totalorder %v43, %v635
  %vm769 = vcmp.eq.s32.totalorder %v43, %v639
  %vm770 = vcmp.eq.s32.totalorder %v43, %v643
  %vm771 = vcmp.eq.s32.totalorder %v43, %v647
  %vm772 = vcmp.eq.s32.totalorder %v44, %v635
  %vm773 = vcmp.eq.s32.totalorder %v44, %v639
  %vm774 = vcmp.eq.s32.totalorder %v44, %v643
  %vm775 = vcmp.eq.s32.totalorder %v44, %v647
  %v776 = vsel %vm648, 1, 0
  %v777 = vsel %vm649, 1, 0
  %v778 = vsel %vm650, 1, 0
  %v779 = vsel %vm651, 1, 0
  %v780 = vsel %vm652, 1, 0
  %v781 = vsel %vm653, 1, 0
  %v782 = vsel %vm654, 1, 0
  %v783 = vsel %vm655, 1, 0
  %v784 = vsel %vm656, 1, 0
  %v785 = vsel %vm657, 1, 0
  %v786 = vsel %vm658, 1, 0
  %v787 = vsel %vm659, 1, 0
  %v788 = vsel %vm660, 1, 0
  %v789 = vsel %vm661, 1, 0
  %v790 = vsel %vm662, 1, 0
  %v791 = vsel %vm663, 1, 0
  %v792 = vsel %vm664, 1, 0
  %v793 = vsel %vm665, 1, 0
  %v794 = vsel %vm666, 1, 0
  %v795 = vsel %vm667, 1, 0
  %v796 = vsel %vm668, 1, 0
  %v797 = vsel %vm669, 1, 0
  %v798 = vsel %vm670, 1, 0
  %v799 = vsel %vm671, 1, 0
  %v800 = vsel %vm672, 1, 0
  %v801 = vsel %vm673, 1, 0
  %v802 = vsel %vm674, 1, 0
  %v803 = vsel %vm675, 1, 0
  %v804 = vsel %vm676, 1, 0
  %v805 = vsel %vm677, 1, 0
  %v806 = vsel %vm678, 1, 0
  %v807 = vsel %vm679, 1, 0
  %v808 = vsel %vm680, 1, 0
  %v809 = vsel %vm681, 1, 0
  %v810 = vsel %vm682, 1, 0
  %v811 = vsel %vm683, 1, 0
  %v812 = vsel %vm684, 1, 0
  %v813 = vsel %vm685, 1, 0
  %v814 = vsel %vm686, 1, 0
  %v815 = vsel %vm687, 1, 0
  %v816 = vsel %vm688, 1, 0
  %v817 = vsel %vm689, 1, 0
  %v818 = vsel %vm690, 1, 0
  %v819 = vsel %vm691, 1, 0
  %v820 = vsel %vm692, 1, 0
  %v821 = vsel %vm693, 1, 0
  %v822 = vsel %vm694, 1, 0
  %v823 = vsel %vm695, 1, 0
  %v824 = vsel %vm696, 1, 0
  %v825 = vsel %vm697, 1, 0
  %v826 = vsel %vm698, 1, 0
  %v827 = vsel %vm699, 1, 0
  %v828 = vsel %vm700, 1, 0
  %v829 = vsel %vm701, 1, 0
  %v830 = vsel %vm702, 1, 0
  %v831 = vsel %vm703, 1, 0
  %v832 = vsel %vm704, 1, 0
  %v833 = vsel %vm705, 1, 0
  %v834 = vsel %vm706, 1, 0
  %v835 = vsel %vm707, 1, 0
  %v836 = vsel %vm708, 1, 0
  %v837 = vsel %vm709, 1, 0
  %v838 = vsel %vm710, 1, 0
  %v839 = vsel %vm711, 1, 0
  %v840 = vsel %vm712, 1, 0
  %v841 = vsel %vm713, 1, 0
  %v842 = vsel %vm714, 1, 0
  %v843 = vsel %vm715, 1, 0
  %v844 = vsel %vm716, 1, 0
  %v845 = vsel %vm717, 1, 0
  %v846 = vsel %vm718, 1, 0
  %v847 = vsel %vm719, 1, 0
  %v848 = vsel %vm720, 1, 0
  %v849 = vsel %vm721, 1, 0
  %v850 = vsel %vm722, 1, 0
  %v851 = vsel %vm723, 1, 0
  %v852 = vsel %vm724, 1, 0
  %v853 = vsel %vm725, 1, 0
  %v854 = vsel %vm726, 1, 0
  %v855 = vsel %vm727, 1, 0
  %v856 = vsel %vm728, 1, 0
  %v857 = vsel %vm729, 1, 0
  %v858 = vsel %vm730, 1, 0
  %v859 = vsel %vm731, 1, 0
  %v860 = vsel %vm732, 1, 0
  %v861 = vsel %vm733, 1, 0
  %v862 = vsel %vm734, 1, 0
  %v863 = vsel %vm735, 1, 0
  %v864 = vsel %vm736, 1, 0
  %v865 = vsel %vm737, 1, 0
  %v866 = vsel %vm738, 1, 0
  %v867 = vsel %vm739, 1, 0
  %v868 = vsel %vm740, 1, 0
  %v869 = vsel %vm741, 1, 0
  %v870 = vsel %vm742, 1, 0
  %v871 = vsel %vm743, 1, 0
  %v872 = vsel %vm744, 1, 0
  %v873 = vsel %vm745, 1, 0
  %v874 = vsel %vm746, 1, 0
  %v875 = vsel %vm747, 1, 0
  %v876 = vsel %vm748, 1, 0
  %v877 = vsel %vm749, 1, 0
  %v878 = vsel %vm750, 1, 0
  %v879 = vsel %vm751, 1, 0
  %v880 = vsel %vm752, 1, 0
  %v881 = vsel %vm753, 1, 0
  %v882 = vsel %vm754, 1, 0
  %v883 = vsel %vm755, 1, 0
  %v884 = vsel %vm756, 1, 0
  %v885 = vsel %vm757, 1, 0
  %v886 = vsel %vm758, 1, 0
  %v887 = vsel %vm759, 1, 0
  %v888 = vsel %vm760, 1, 0
  %v889 = vsel %vm761, 1, 0
  %v890 = vsel %vm762, 1, 0
  %v891 = vsel %vm763, 1, 0
  %v892 = vsel %vm764, 1, 0
  %v893 = vsel %vm765, 1, 0
  %v894 = vsel %vm766, 1, 0
  %v895 = vsel %vm767, 1, 0
  %v896 = vsel %vm768, 1, 0
  %v897 = vsel %vm769, 1, 0
  %v898 = vsel %vm770, 1, 0
  %v899 = vsel %vm771, 1, 0
  %v900 = vsel %vm772, 1, 0
  %v901 = vsel %vm773, 1, 0
  %v902 = vsel %vm774, 1, 0
  %v903 = vsel %vm775, 1, 0
  %v904 = vcvt.s32.f32 %v776
  %v905 = vcvt.s32.f32 %v777
  %v906 = vcvt.s32.f32 %v778
  %v907 = vcvt.s32.f32 %v779
  %v908 = vcvt.s32.f32 %v780
  %v909 = vcvt.s32.f32 %v781
  %v910 = vcvt.s32.f32 %v782
  %v911 = vcvt.s32.f32 %v783
  %v912 = vcvt.s32.f32 %v784
  %v913 = vcvt.s32.f32 %v785
  %v914 = vcvt.s32.f32 %v786
  %v915 = vcvt.s32.f32 %v787
  %v916 = vcvt.s32.f32 %v788
  %v917 = vcvt.s32.f32 %v789
  %v918 = vcvt.s32.f32 %v790
  %v919 = vcvt.s32.f32 %v791
  %v920 = vcvt.s32.f32 %v792
  %v921 = vcvt.s32.f32 %v793
  %v922 = vcvt.s32.f32 %v794
  %v923 = vcvt.s32.f32 %v795
  %v924 = vcvt.s32.f32 %v796
  %v925 = vcvt.s32.f32 %v797
  %v926 = vcvt.s32.f32 %v798
  %v927 = vcvt.s32.f32 %v799
  %v928 = vcvt.s32.f32 %v800
  %v929 = vcvt.s32.f32 %v801
  %v930 = vcvt.s32.f32 %v802
  %v931 = vcvt.s32.f32 %v803
  %v932 = vcvt.s32.f32 %v804
  %v933 = vcvt.s32.f32 %v805
  %v934 = vcvt.s32.f32 %v806
  %v935 = vcvt.s32.f32 %v807
  %v936 = vcvt.s32.f32 %v808
  %v937 = vcvt.s32.f32 %v809
  %v938 = vcvt.s32.f32 %v810
  %v939 = vcvt.s32.f32 %v811
  %v940 = vcvt.s32.f32 %v812
  %v941 = vcvt.s32.f32 %v813
  %v942 = vcvt.s32.f32 %v814
  %v943 = vcvt.s32.f32 %v815
  %v944 = vcvt.s32.f32 %v816
  %v945 = vcvt.s32.f32 %v817
  %v946 = vcvt.s32.f32 %v818
  %v947 = vcvt.s32.f32 %v819
  %v948 = vcvt.s32.f32 %v820
  %v949 = vcvt.s32.f32 %v821
  %v950 = vcvt.s32.f32 %v822
  %v951 = vcvt.s32.f32 %v823
  %v952 = vcvt.s32.f32 %v824
  %v953 = vcvt.s32.f32 %v825
  %v954 = vcvt.s32.f32 %v826
  %v955 = vcvt.s32.f32 %v827
  %v956 = vcvt.s32.f32 %v828
  %v957 = vcvt.s32.f32 %v829
  %v958 = vcvt.s32.f32 %v830
  %v959 = vcvt.s32.f32 %v831
  %v960 = vcvt.s32.f32 %v832
  %v961 = vcvt.s32.f32 %v833
  %v962 = vcvt.s32.f32 %v834
  %v963 = vcvt.s32.f32 %v835
  %v964 = vcvt.s32.f32 %v836
  %v965 = vcvt.s32.f32 %v837
  %v966 = vcvt.s32.f32 %v838
  %v967 = vcvt.s32.f32 %v839
  %v968 = vcvt.s32.f32 %v840
  %v969 = vcvt.s32.f32 %v841
  %v970 = vcvt.s32.f32 %v842
  %v971 = vcvt.s32.f32 %v843
  %v972 = vcvt.s32.f32 %v844
  %v973 = vcvt.s32.f32 %v845
  %v974 = vcvt.s32.f32 %v846
  %v975 = vcvt.s32.f32 %v847
  %v976 = vcvt.s32.f32 %v848
  %v977 = vcvt.s32.f32 %v849
  %v978 = vcvt.s32.f32 %v850
  %v979 = vcvt.s32.f32 %v851
  %v980 = vcvt.s32.f32 %v852
  %v981 = vcvt.s32.f32 %v853
  %v982 = vcvt.s32.f32 %v854
  %v983 = vcvt.s32.f32 %v855
  %v984 = vcvt.s32.f32 %v856
  %v985 = vcvt.s32.f32 %v857
  %v986 = vcvt.s32.f32 %v858
  %v987 = vcvt.s32.f32 %v859
  %v988 = vcvt.s32.f32 %v860
  %v989 = vcvt.s32.f32 %v861
  %v990 = vcvt.s32.f32 %v862
  %v991 = vcvt.s32.f32 %v863
  %v992 = vcvt.s32.f32 %v864
  %v993 = vcvt.s32.f32 %v865
  %v994 = vcvt.s32.f32 %v866
  %v995 = vcvt.s32.f32 %v867
  %v996 = vcvt.s32.f32 %v868
  %v997 = vcvt.s32.f32 %v869
  %v998 = vcvt.s32.f32 %v870
  %v999 = vcvt.s32.f32 %v871
  %v1000 = vcvt.s32.f32 %v872
  %v1001 = vcvt.s32.f32 %v873
  %v1002 = vcvt.s32.f32 %v874
  %v1003 = vcvt.s32.f32 %v875
  %v1004 = vcvt.s32.f32 %v876
  %v1005 = vcvt.s32.f32 %v877
  %v1006 = vcvt.s32.f32 %v878
  %v1007 = vcvt.s32.f32 %v879
  %v1008 = vcvt.s32.f32 %v880
  %v1009 = vcvt.s32.f32 %v881
  %v1010 = vcvt.s32.f32 %v882
  %v1011 = vcvt.s32.f32 %v883
  %v1012 = vcvt.s32.f32 %v884
  %v1013 = vcvt.s32.f32 %v885
  %v1014 = vcvt.s32.f32 %v886
  %v1015 = vcvt.s32.f32 %v887
  %v1016 = vcvt.s32.f32 %v888
  %v1017 = vcvt.s32.f32 %v889
  %v1018 = vcvt.s32.f32 %v890
  %v1019 = vcvt.s32.f32 %v891
  %v1020 = vcvt.s32.f32 %v892
  %v1021 = vcvt.s32.f32 %v893
  %v1022 = vcvt.s32.f32 %v894
  %v1023 = vcvt.s32.f32 %v895
  %v1024 = vcvt.s32.f32 %v896
  %v1025 = vcvt.s32.f32 %v897
  %v1026 = vcvt.s32.f32 %v898
  %v1027 = vcvt.s32.f32 %v899
  %v1028 = vcvt.s32.f32 %v900
  %v1029 = vcvt.s32.f32 %v901
  %v1030 = vcvt.s32.f32 %v902
  %v1031 = vcvt.s32.f32 %v903
  %v1032 = vpack.c.bf16 %v908, %v904
  %v1033 = vpack.c.bf16 %v909, %v905
  %v1034 = vpack.c.bf16 %v910, %v906
  %v1035 = vpack.c.bf16 %v911, %v907
  %v1036 = vpack.c.bf16 %v916, %v912
  %v1037 = vpack.c.bf16 %v917, %v913
  %v1038 = vpack.c.bf16 %v918, %v914
  %v1039 = vpack.c.bf16 %v919, %v915
  %v1040 = vpack.c.bf16 %v924, %v920
  %v1041 = vpack.c.bf16 %v925, %v921
  %v1042 = vpack.c.bf16 %v926, %v922
  %v1043 = vpack.c.bf16 %v927, %v923
  %v1044 = vpack.c.bf16 %v932, %v928
  %v1045 = vpack.c.bf16 %v933, %v929
  %v1046 = vpack.c.bf16 %v934, %v930
  %v1047 = vpack.c.bf16 %v935, %v931
  %v1048 = vpack.c.bf16 %v940, %v936
  %v1049 = vpack.c.bf16 %v941, %v937
  %v1050 = vpack.c.bf16 %v942, %v938
  %v1051 = vpack.c.bf16 %v943, %v939
  %v1052 = vpack.c.bf16 %v948, %v944
  %v1053 = vpack.c.bf16 %v949, %v945
  %v1054 = vpack.c.bf16 %v950, %v946
  %v1055 = vpack.c.bf16 %v951, %v947
  %v1056 = vpack.c.bf16 %v956, %v952
  %v1057 = vpack.c.bf16 %v957, %v953
  %v1058 = vpack.c.bf16 %v958, %v954
  %v1059 = vpack.c.bf16 %v959, %v955
  %v1060 = vpack.c.bf16 %v964, %v960
  %v1061 = vpack.c.bf16 %v965, %v961
  %v1062 = vpack.c.bf16 %v966, %v962
  %v1063 = vpack.c.bf16 %v967, %v963
  %v1064 = vpack.c.bf16 %v972, %v968
  %v1065 = vpack.c.bf16 %v973, %v969
  %v1066 = vpack.c.bf16 %v974, %v970
  %v1067 = vpack.c.bf16 %v975, %v971
  %v1068 = vpack.c.bf16 %v980, %v976
  %v1069 = vpack.c.bf16 %v981, %v977
  %v1070 = vpack.c.bf16 %v982, %v978
  %v1071 = vpack.c.bf16 %v983, %v979
  %v1072 = vpack.c.bf16 %v988, %v984
  %v1073 = vpack.c.bf16 %v989, %v985
  %v1074 = vpack.c.bf16 %v990, %v986
  %v1075 = vpack.c.bf16 %v991, %v987
  %v1076 = vpack.c.bf16 %v996, %v992
  %v1077 = vpack.c.bf16 %v997, %v993
  %v1078 = vpack.c.bf16 %v998, %v994
  %v1079 = vpack.c.bf16 %v999, %v995
  %v1080 = vpack.c.bf16 %v1004, %v1000
  %v1081 = vpack.c.bf16 %v1005, %v1001
  %v1082 = vpack.c.bf16 %v1006, %v1002
  %v1083 = vpack.c.bf16 %v1007, %v1003
  %v1084 = vpack.c.bf16 %v1012, %v1008
  %v1085 = vpack.c.bf16 %v1013, %v1009
  %v1086 = vpack.c.bf16 %v1014, %v1010
  %v1087 = vpack.c.bf16 %v1015, %v1011
  %v1088 = vpack.c.bf16 %v1020, %v1016
  %v1089 = vpack.c.bf16 %v1021, %v1017
  %v1090 = vpack.c.bf16 %v1022, %v1018
  %v1091 = vpack.c.bf16 %v1023, %v1019
  %v1092 = vpack.c.bf16 %v1028, %v1024
  %v1093 = vpack.c.bf16 %v1029, %v1025
  %v1094 = vpack.c.bf16 %v1030, %v1026
  %v1095 = vpack.c.bf16 %v1031, %v1027
  %1096 = vmatprep.subr.bf16.mxu0 %v1033
  %1097 = vmatpush1.bf16.msra.mxu0 %v1032
  %1098 = vmatprep.subr.bf16.mxu0 %v1037
  %1099 = vmatpush1.bf16.msra.mxu0 %v1036
  %1100 = vmatprep.subr.bf16.mxu0 %v1041
  %1101 = vmatpush1.bf16.msra.mxu0 %v1040
  %1102 = vmatprep.subr.bf16.mxu0 %v1045
  %1103 = vmatpush1.bf16.msra.mxu0 %v1044
  %1104 = vmatprep.subr.bf16.mxu0 %v1049
  %1105 = vmatpush1.bf16.msra.mxu0 %v1048
  %1106 = vmatprep.subr.bf16.mxu0 %v1053
  %1107 = vmatpush1.bf16.msra.mxu0 %v1052
  %1108 = vmatprep.subr.bf16.mxu0 %v1057
  %1109 = vmatpush1.bf16.msra.mxu0 %v1056
  %1110 = vmatprep.subr.bf16.mxu0 %v1061
  %1111 = vmatpush1.bf16.msra.mxu0 %v1060
  %1112 = vmatprep.subr.bf16.mxu0 %v1065
  %1113 = vmatpush1.bf16.msra.mxu0 %v1064
  %1114 = vmatprep.subr.bf16.mxu0 %v1069
  %1115 = vmatpush1.bf16.msra.mxu0 %v1068
  %1116 = vmatprep.subr.bf16.mxu0 %v1073
  %1117 = vmatpush1.bf16.msra.mxu0 %v1072
  %1118 = vmatprep.subr.bf16.mxu0 %v1077
  %1119 = vmatpush1.bf16.msra.mxu0 %v1076
  %1120 = vmatprep.subr.bf16.mxu0 %v1081
  %1121 = vmatpush1.bf16.msra.mxu0 %v1080
  %1122 = vmatprep.subr.bf16.mxu0 %v1085
  %1123 = vmatpush1.bf16.msra.mxu0 %v1084
  %1124 = vmatprep.subr.bf16.mxu0 %v1089
  %1125 = vmatpush1.bf16.msra.mxu0 %v1088
  %1126 = vmatprep.subr.bf16.mxu0 %v1093
  %1127 = vmatpush1.bf16.msra.mxu0 %v1092
  %1128 = vmatprep.mubr.bf16.mxu0 %v518
  %1129 = vmatmul.mubr.bf16.gmra.mrb[0].mxu0 %v517
  %v1130 = vpop.f32.mrb[0].mxu0
  %v1131 = vadd.f32 0.0, %v1130
  %v1132 = vpop.f32.mrb[0].mxu0
  %v1133 = vadd.f32 0.0, %v1132
  %v1134 = vpop.f32.mrb[0].mxu0
  %v1135 = vpop.f32.mrb[0].mxu0
  %1136 = vdwg.mxu0
  %1137 = vmatprep.subr.bf16.mxu0 %v1035
  %1138 = vmatpush1.bf16.msra.mxu0 %v1034
  %1139 = vmatprep.subr.bf16.mxu0 %v1039
  %1140 = vmatpush1.bf16.msra.mxu0 %v1038
  %1141 = vmatprep.subr.bf16.mxu0 %v1043
  %1142 = vmatpush1.bf16.msra.mxu0 %v1042
  %1143 = vmatprep.subr.bf16.mxu0 %v1047
  %1144 = vmatpush1.bf16.msra.mxu0 %v1046
  %1145 = vmatprep.subr.bf16.mxu0 %v1051
  %1146 = vmatpush1.bf16.msra.mxu0 %v1050
  %1147 = vmatprep.subr.bf16.mxu0 %v1055
  %1148 = vmatpush1.bf16.msra.mxu0 %v1054
  %1149 = vmatprep.subr.bf16.mxu0 %v1059
  %1150 = vmatpush1.bf16.msra.mxu0 %v1058
  %1151 = vmatprep.subr.bf16.mxu0 %v1063
  %1152 = vmatpush1.bf16.msra.mxu0 %v1062
  %1153 = vmatprep.subr.bf16.mxu0 %v1067
  %1154 = vmatpush1.bf16.msra.mxu0 %v1066
  %1155 = vmatprep.subr.bf16.mxu0 %v1071
  %1156 = vmatpush1.bf16.msra.mxu0 %v1070
  %1157 = vmatprep.subr.bf16.mxu0 %v1075
  %1158 = vmatpush1.bf16.msra.mxu0 %v1074
  %1159 = vmatprep.subr.bf16.mxu0 %v1079
  %1160 = vmatpush1.bf16.msra.mxu0 %v1078
  %1161 = vmatprep.subr.bf16.mxu0 %v1083
  %1162 = vmatpush1.bf16.msra.mxu0 %v1082
  %1163 = vmatprep.subr.bf16.mxu0 %v1087
  %1164 = vmatpush1.bf16.msra.mxu0 %v1086
  %1165 = vmatprep.subr.bf16.mxu0 %v1091
  %1166 = vmatpush1.bf16.msra.mxu0 %v1090
  %1167 = vmatprep.subr.bf16.mxu0 %v1095
  %1168 = vmatpush1.bf16.msra.mxu0 %v1094
  %1169 = vmatprep.mubr.bf16.mxu0 %v518
  %1170 = vmatmul.mubr.bf16.gmra.mrb[0].mxu0 %v517
  %v1171 = vpop.f32.mrb[0].mxu0
  %v1172 = vadd.f32 0.0, %v1171
  %v1173 = vpop.f32.mrb[0].mxu0
  %v1174 = vadd.f32 0.0, %v1173
  %v1175 = vpop.f32.mrb[0].mxu0
  %v1176 = vpop.f32.mrb[0].mxu0
  %1177 = vdwg.mxu0
  %v1178 = vpack.c.bf16 %v1131, %v1131
  %v1179 = vpack.c.bf16 %v1133, %v1133
  %v1180 = vpack.c.bf16 %v1172, %v1172
  %v1181 = vpack.c.bf16 %v1174, %v1174
  %v1186 = vcombine.low %v1178, %v1179
  %v1187 = vcombine.low %v1180, %v1181
  %v1189 = vunpack.c.l.s4 1983009808
  %v1190 = vunpack.c.0.s8 %v1189
  %v1191 = vlaneseq
  %v1192 = vshrl.u32 %v1191, 7
  %v1193 = vsub.s32 %v1190, %v1192
  %v1194 = vrot.slane %v1186, %v1193
  %v1196 = vunpack.c.l.s4 1983009808
  %v1197 = vunpack.c.0.s8 %v1196
  %v1198 = vlaneseq
  %v1199 = vshrl.u32 %v1198, 7
  %v1200 = vsub.s32 %v1197, %v1199
  %v1201 = vrot.slane %v1187, %v1200
  %v1202 = vcombine.low %v1194, %v1201
  %s1204 = scalar_lea.vmem %s2, 8
  %1205 = vst [vmem:[%s1204] sm:$0xff] %v1202
  %s1206 = scalar_lea.vmem %s0, 8
  %v1207 = vld [vmem:[%s1206] sm:$0xf]
  %v1208 = vlaneseq
  %v1209 = vshrl.u32 %v1208, 7
  %v1210 = vsub.s32 0, %v1209
  %v1211 = vrot.slane %v1207, %v1210
  %v1212 = vlaneseq
  %v1213 = vshrl.u32 %v1212, 7
  %v1214 = vsub.s32 1, %v1213
  %v1215 = vrot.slane %v1207, %v1214
  %v1216 = vlaneseq
  %v1217 = vshrl.u32 %v1216, 7
  %v1218 = vsub.s32 2, %v1217
  %v1219 = vrot.slane %v1207, %v1218
  %v1220 = vlaneseq
  %v1221 = vshrl.u32 %v1220, 7
  %v1222 = vsub.s32 3, %v1221
  %v1223 = vrot.slane %v1207, %v1222
  %vm1224 = vcmp.eq.s32.totalorder %v13, %v1211
  %vm1225 = vcmp.eq.s32.totalorder %v13, %v1215
  %vm1226 = vcmp.eq.s32.totalorder %v13, %v1219
  %vm1227 = vcmp.eq.s32.totalorder %v13, %v1223
  %vm1228 = vcmp.eq.s32.totalorder %v14, %v1211
  %vm1229 = vcmp.eq.s32.totalorder %v14, %v1215
  %vm1230 = vcmp.eq.s32.totalorder %v14, %v1219
  %vm1231 = vcmp.eq.s32.totalorder %v14, %v1223
  %vm1232 = vcmp.eq.s32.totalorder %v15, %v1211
  %vm1233 = vcmp.eq.s32.totalorder %v15, %v1215
  %vm1234 = vcmp.eq.s32.totalorder %v15, %v1219
  %vm1235 = vcmp.eq.s32.totalorder %v15, %v1223
  %vm1236 = vcmp.eq.s32.totalorder %v16, %v1211
  %vm1237 = vcmp.eq.s32.totalorder %v16, %v1215
  %vm1238 = vcmp.eq.s32.totalorder %v16, %v1219
  %vm1239 = vcmp.eq.s32.totalorder %v16, %v1223
  %vm1240 = vcmp.eq.s32.totalorder %v17, %v1211
  %vm1241 = vcmp.eq.s32.totalorder %v17, %v1215
  %vm1242 = vcmp.eq.s32.totalorder %v17, %v1219
  %vm1243 = vcmp.eq.s32.totalorder %v17, %v1223
  %vm1244 = vcmp.eq.s32.totalorder %v18, %v1211
  %vm1245 = vcmp.eq.s32.totalorder %v18, %v1215
  %vm1246 = vcmp.eq.s32.totalorder %v18, %v1219
  %vm1247 = vcmp.eq.s32.totalorder %v18, %v1223
  %vm1248 = vcmp.eq.s32.totalorder %v19, %v1211
  %vm1249 = vcmp.eq.s32.totalorder %v19, %v1215
  %vm1250 = vcmp.eq.s32.totalorder %v19, %v1219
  %vm1251 = vcmp.eq.s32.totalorder %v19, %v1223
  %vm1252 = vcmp.eq.s32.totalorder %v20, %v1211
  %vm1253 = vcmp.eq.s32.totalorder %v20, %v1215
  %vm1254 = vcmp.eq.s32.totalorder %v20, %v1219
  %vm1255 = vcmp.eq.s32.totalorder %v20, %v1223
  %vm1256 = vcmp.eq.s32.totalorder %v21, %v1211
  %vm1257 = vcmp.eq.s32.totalorder %v21, %v1215
  %vm1258 = vcmp.eq.s32.totalorder %v21, %v1219
  %vm1259 = vcmp.eq.s32.totalorder %v21, %v1223
  %vm1260 = vcmp.eq.s32.totalorder %v22, %v1211
  %vm1261 = vcmp.eq.s32.totalorder %v22, %v1215
  %vm1262 = vcmp.eq.s32.totalorder %v22, %v1219
  %vm1263 = vcmp.eq.s32.totalorder %v22, %v1223
  %vm1264 = vcmp.eq.s32.totalorder %v23, %v1211
  %vm1265 = vcmp.eq.s32.totalorder %v23, %v1215
  %vm1266 = vcmp.eq.s32.totalorder %v23, %v1219
  %vm1267 = vcmp.eq.s32.totalorder %v23, %v1223
  %vm1268 = vcmp.eq.s32.totalorder %v24, %v1211
  %vm1269 = vcmp.eq.s32.totalorder %v24, %v1215
  %vm1270 = vcmp.eq.s32.totalorder %v24, %v1219
  %vm1271 = vcmp.eq.s32.totalorder %v24, %v1223
  %vm1272 = vcmp.eq.s32.totalorder %v25, %v1211
  %vm1273 = vcmp.eq.s32.totalorder %v25, %v1215
  %vm1274 = vcmp.eq.s32.totalorder %v25, %v1219
  %vm1275 = vcmp.eq.s32.totalorder %v25, %v1223
  %vm1276 = vcmp.eq.s32.totalorder %v26, %v1211
  %vm1277 = vcmp.eq.s32.totalorder %v26, %v1215
  %vm1278 = vcmp.eq.s32.totalorder %v26, %v1219
  %vm1279 = vcmp.eq.s32.totalorder %v26, %v1223
  %vm1280 = vcmp.eq.s32.totalorder %v27, %v1211
  %vm1281 = vcmp.eq.s32.totalorder %v27, %v1215
  %vm1282 = vcmp.eq.s32.totalorder %v27, %v1219
  %vm1283 = vcmp.eq.s32.totalorder %v27, %v1223
  %vm1284 = vcmp.eq.s32.totalorder %v28, %v1211
  %vm1285 = vcmp.eq.s32.totalorder %v28, %v1215
  %vm1286 = vcmp.eq.s32.totalorder %v28, %v1219
  %vm1287 = vcmp.eq.s32.totalorder %v28, %v1223
  %vm1288 = vcmp.eq.s32.totalorder %v29, %v1211
  %vm1289 = vcmp.eq.s32.totalorder %v29, %v1215
  %vm1290 = vcmp.eq.s32.totalorder %v29, %v1219
  %vm1291 = vcmp.eq.s32.totalorder %v29, %v1223
  %vm1292 = vcmp.eq.s32.totalorder %v30, %v1211
  %vm1293 = vcmp.eq.s32.totalorder %v30, %v1215
  %vm1294 = vcmp.eq.s32.totalorder %v30, %v1219
  %vm1295 = vcmp.eq.s32.totalorder %v30, %v1223
  %vm1296 = vcmp.eq.s32.totalorder %v31, %v1211
  %vm1297 = vcmp.eq.s32.totalorder %v31, %v1215
  %vm1298 = vcmp.eq.s32.totalorder %v31, %v1219
  %vm1299 = vcmp.eq.s32.totalorder %v31, %v1223
  %vm1300 = vcmp.eq.s32.totalorder %v32, %v1211
  %vm1301 = vcmp.eq.s32.totalorder %v32, %v1215
  %vm1302 = vcmp.eq.s32.totalorder %v32, %v1219
  %vm1303 = vcmp.eq.s32.totalorder %v32, %v1223
  %vm1304 = vcmp.eq.s32.totalorder %v33, %v1211
  %vm1305 = vcmp.eq.s32.totalorder %v33, %v1215
  %vm1306 = vcmp.eq.s32.totalorder %v33, %v1219
  %vm1307 = vcmp.eq.s32.totalorder %v33, %v1223
  %vm1308 = vcmp.eq.s32.totalorder %v34, %v1211
  %vm1309 = vcmp.eq.s32.totalorder %v34, %v1215
  %vm1310 = vcmp.eq.s32.totalorder %v34, %v1219
  %vm1311 = vcmp.eq.s32.totalorder %v34, %v1223
  %vm1312 = vcmp.eq.s32.totalorder %v35, %v1211
  %vm1313 = vcmp.eq.s32.totalorder %v35, %v1215
  %vm1314 = vcmp.eq.s32.totalorder %v35, %v1219
  %vm1315 = vcmp.eq.s32.totalorder %v35, %v1223
  %vm1316 = vcmp.eq.s32.totalorder %v36, %v1211
  %vm1317 = vcmp.eq.s32.totalorder %v36, %v1215
  %vm1318 = vcmp.eq.s32.totalorder %v36, %v1219
  %vm1319 = vcmp.eq.s32.totalorder %v36, %v1223
  %vm1320 = vcmp.eq.s32.totalorder %v37, %v1211
  %vm1321 = vcmp.eq.s32.totalorder %v37, %v1215
  %vm1322 = vcmp.eq.s32.totalorder %v37, %v1219
  %vm1323 = vcmp.eq.s32.totalorder %v37, %v1223
  %vm1324 = vcmp.eq.s32.totalorder %v38, %v1211
  %vm1325 = vcmp.eq.s32.totalorder %v38, %v1215
  %vm1326 = vcmp.eq.s32.totalorder %v38, %v1219
  %vm1327 = vcmp.eq.s32.totalorder %v38, %v1223
  %vm1328 = vcmp.eq.s32.totalorder %v39, %v1211
  %vm1329 = vcmp.eq.s32.totalorder %v39, %v1215
  %vm1330 = vcmp.eq.s32.totalorder %v39, %v1219
  %vm1331 = vcmp.eq.s32.totalorder %v39, %v1223
  %vm1332 = vcmp.eq.s32.totalorder %v40, %v1211
  %vm1333 = vcmp.eq.s32.totalorder %v40, %v1215
  %vm1334 = vcmp.eq.s32.totalorder %v40, %v1219
  %vm1335 = vcmp.eq.s32.totalorder %v40, %v1223
  %vm1336 = vcmp.eq.s32.totalorder %v41, %v1211
  %vm1337 = vcmp.eq.s32.totalorder %v41, %v1215
  %vm1338 = vcmp.eq.s32.totalorder %v41, %v1219
  %vm1339 = vcmp.eq.s32.totalorder %v41, %v1223
  %vm1340 = vcmp.eq.s32.totalorder %v42, %v1211
  %vm1341 = vcmp.eq.s32.totalorder %v42, %v1215
  %vm1342 = vcmp.eq.s32.totalorder %v42, %v1219
  %vm1343 = vcmp.eq.s32.totalorder %v42, %v1223
  %vm1344 = vcmp.eq.s32.totalorder %v43, %v1211
  %vm1345 = vcmp.eq.s32.totalorder %v43, %v1215
  %vm1346 = vcmp.eq.s32.totalorder %v43, %v1219
  %vm1347 = vcmp.eq.s32.totalorder %v43, %v1223
  %vm1348 = vcmp.eq.s32.totalorder %v44, %v1211
  %vm1349 = vcmp.eq.s32.totalorder %v44, %v1215
  %vm1350 = vcmp.eq.s32.totalorder %v44, %v1219
  %vm1351 = vcmp.eq.s32.totalorder %v44, %v1223
  %v1352 = vsel %vm1224, 1, 0
  %v1353 = vsel %vm1225, 1, 0
  %v1354 = vsel %vm1226, 1, 0
  %v1355 = vsel %vm1227, 1, 0
  %v1356 = vsel %vm1228, 1, 0
  %v1357 = vsel %vm1229, 1, 0
  %v1358 = vsel %vm1230, 1, 0
  %v1359 = vsel %vm1231, 1, 0
  %v1360 = vsel %vm1232, 1, 0
  %v1361 = vsel %vm1233, 1, 0
  %v1362 = vsel %vm1234, 1, 0
  %v1363 = vsel %vm1235, 1, 0
  %v1364 = vsel %vm1236, 1, 0
  %v1365 = vsel %vm1237, 1, 0
  %v1366 = vsel %vm1238, 1, 0
  %v1367 = vsel %vm1239, 1, 0
  %v1368 = vsel %vm1240, 1, 0
  %v1369 = vsel %vm1241, 1, 0
  %v1370 = vsel %vm1242, 1, 0
  %v1371 = vsel %vm1243, 1, 0
  %v1372 = vsel %vm1244, 1, 0
  %v1373 = vsel %vm1245, 1, 0
  %v1374 = vsel %vm1246, 1, 0
  %v1375 = vsel %vm1247, 1, 0
  %v1376 = vsel %vm1248, 1, 0
  %v1377 = vsel %vm1249, 1, 0
  %v1378 = vsel %vm1250, 1, 0
  %v1379 = vsel %vm1251, 1, 0
  %v1380 = vsel %vm1252, 1, 0
  %v1381 = vsel %vm1253, 1, 0
  %v1382 = vsel %vm1254, 1, 0
  %v1383 = vsel %vm1255, 1, 0
  %v1384 = vsel %vm1256, 1, 0
  %v1385 = vsel %vm1257, 1, 0
  %v1386 = vsel %vm1258, 1, 0
  %v1387 = vsel %vm1259, 1, 0
  %v1388 = vsel %vm1260, 1, 0
  %v1389 = vsel %vm1261, 1, 0
  %v1390 = vsel %vm1262, 1, 0
  %v1391 = vsel %vm1263, 1, 0
  %v1392 = vsel %vm1264, 1, 0
  %v1393 = vsel %vm1265, 1, 0
  %v1394 = vsel %vm1266, 1, 0
  %v1395 = vsel %vm1267, 1, 0
  %v1396 = vsel %vm1268, 1, 0
  %v1397 = vsel %vm1269, 1, 0
  %v1398 = vsel %vm1270, 1, 0
  %v1399 = vsel %vm1271, 1, 0
  %v1400 = vsel %vm1272, 1, 0
  %v1401 = vsel %vm1273, 1, 0
  %v1402 = vsel %vm1274, 1, 0
  %v1403 = vsel %vm1275, 1, 0
  %v1404 = vsel %vm1276, 1, 0
  %v1405 = vsel %vm1277, 1, 0
  %v1406 = vsel %vm1278, 1, 0
  %v1407 = vsel %vm1279, 1, 0
  %v1408 = vsel %vm1280, 1, 0
  %v1409 = vsel %vm1281, 1, 0
  %v1410 = vsel %vm1282, 1, 0
  %v1411 = vsel %vm1283, 1, 0
  %v1412 = vsel %vm1284, 1, 0
  %v1413 = vsel %vm1285, 1, 0
  %v1414 = vsel %vm1286, 1, 0
  %v1415 = vsel %vm1287, 1, 0
  %v1416 = vsel %vm1288, 1, 0
  %v1417 = vsel %vm1289, 1, 0
  %v1418 = vsel %vm1290, 1, 0
  %v1419 = vsel %vm1291, 1, 0
  %v1420 = vsel %vm1292, 1, 0
  %v1421 = vsel %vm1293, 1, 0
  %v1422 = vsel %vm1294, 1, 0
  %v1423 = vsel %vm1295, 1, 0
  %v1424 = vsel %vm1296, 1, 0
  %v1425 = vsel %vm1297, 1, 0
  %v1426 = vsel %vm1298, 1, 0
  %v1427 = vsel %vm1299, 1, 0
  %v1428 = vsel %vm1300, 1, 0
  %v1429 = vsel %vm1301, 1, 0
  %v1430 = vsel %vm1302, 1, 0
  %v1431 = vsel %vm1303, 1, 0
  %v1432 = vsel %vm1304, 1, 0
  %v1433 = vsel %vm1305, 1, 0
  %v1434 = vsel %vm1306, 1, 0
  %v1435 = vsel %vm1307, 1, 0
  %v1436 = vsel %vm1308, 1, 0
  %v1437 = vsel %vm1309, 1, 0
  %v1438 = vsel %vm1310, 1, 0
  %v1439 = vsel %vm1311, 1, 0
  %v1440 = vsel %vm1312, 1, 0
  %v1441 = vsel %vm1313, 1, 0
  %v1442 = vsel %vm1314, 1, 0
  %v1443 = vsel %vm1315, 1, 0
  %v1444 = vsel %vm1316, 1, 0
  %v1445 = vsel %vm1317, 1, 0
  %v1446 = vsel %vm1318, 1, 0
  %v1447 = vsel %vm1319, 1, 0
  %v1448 = vsel %vm1320, 1, 0
  %v1449 = vsel %vm1321, 1, 0
  %v1450 = vsel %vm1322, 1, 0
  %v1451 = vsel %vm1323, 1, 0
  %v1452 = vsel %vm1324, 1, 0
  %v1453 = vsel %vm1325, 1, 0
  %v1454 = vsel %vm1326, 1, 0
  %v1455 = vsel %vm1327, 1, 0
  %v1456 = vsel %vm1328, 1, 0
  %v1457 = vsel %vm1329, 1, 0
  %v1458 = vsel %vm1330, 1, 0
  %v1459 = vsel %vm1331, 1, 0
  %v1460 = vsel %vm1332, 1, 0
  %v1461 = vsel %vm1333, 1, 0
  %v1462 = vsel %vm1334, 1, 0
  %v1463 = vsel %vm1335, 1, 0
  %v1464 = vsel %vm1336, 1, 0
  %v1465 = vsel %vm1337, 1, 0
  %v1466 = vsel %vm1338, 1, 0
  %v1467 = vsel %vm1339, 1, 0
  %v1468 = vsel %vm1340, 1, 0
  %v1469 = vsel %vm1341, 1, 0
  %v1470 = vsel %vm1342, 1, 0
  %v1471 = vsel %vm1343, 1, 0
  %v1472 = vsel %vm1344, 1, 0
  %v1473 = vsel %vm1345, 1, 0
  %v1474 = vsel %vm1346, 1, 0
  %v1475 = vsel %vm1347, 1, 0
  %v1476 = vsel %vm1348, 1, 0
  %v1477 = vsel %vm1349, 1, 0
  %v1478 = vsel %vm1350, 1, 0
  %v1479 = vsel %vm1351, 1, 0
  %v1480 = vcvt.s32.f32 %v1352
  %v1481 = vcvt.s32.f32 %v1353
  %v1482 = vcvt.s32.f32 %v1354
  %v1483 = vcvt.s32.f32 %v1355
  %v1484 = vcvt.s32.f32 %v1356
  %v1485 = vcvt.s32.f32 %v1357
  %v1486 = vcvt.s32.f32 %v1358
  %v1487 = vcvt.s32.f32 %v1359
  %v1488 = vcvt.s32.f32 %v1360
  %v1489 = vcvt.s32.f32 %v1361
  %v1490 = vcvt.s32.f32 %v1362
  %v1491 = vcvt.s32.f32 %v1363
  %v1492 = vcvt.s32.f32 %v1364
  %v1493 = vcvt.s32.f32 %v1365
  %v1494 = vcvt.s32.f32 %v1366
  %v1495 = vcvt.s32.f32 %v1367
  %v1496 = vcvt.s32.f32 %v1368
  %v1497 = vcvt.s32.f32 %v1369
  %v1498 = vcvt.s32.f32 %v1370
  %v1499 = vcvt.s32.f32 %v1371
  %v1500 = vcvt.s32.f32 %v1372
  %v1501 = vcvt.s32.f32 %v1373
  %v1502 = vcvt.s32.f32 %v1374
  %v1503 = vcvt.s32.f32 %v1375
  %v1504 = vcvt.s32.f32 %v1376
  %v1505 = vcvt.s32.f32 %v1377
  %v1506 = vcvt.s32.f32 %v1378
  %v1507 = vcvt.s32.f32 %v1379
  %v1508 = vcvt.s32.f32 %v1380
  %v1509 = vcvt.s32.f32 %v1381
  %v1510 = vcvt.s32.f32 %v1382
  %v1511 = vcvt.s32.f32 %v1383
  %v1512 = vcvt.s32.f32 %v1384
  %v1513 = vcvt.s32.f32 %v1385
  %v1514 = vcvt.s32.f32 %v1386
  %v1515 = vcvt.s32.f32 %v1387
  %v1516 = vcvt.s32.f32 %v1388
  %v1517 = vcvt.s32.f32 %v1389
  %v1518 = vcvt.s32.f32 %v1390
  %v1519 = vcvt.s32.f32 %v1391
  %v1520 = vcvt.s32.f32 %v1392
  %v1521 = vcvt.s32.f32 %v1393
  %v1522 = vcvt.s32.f32 %v1394
  %v1523 = vcvt.s32.f32 %v1395
  %v1524 = vcvt.s32.f32 %v1396
  %v1525 = vcvt.s32.f32 %v1397
  %v1526 = vcvt.s32.f32 %v1398
  %v1527 = vcvt.s32.f32 %v1399
  %v1528 = vcvt.s32.f32 %v1400
  %v1529 = vcvt.s32.f32 %v1401
  %v1530 = vcvt.s32.f32 %v1402
  %v1531 = vcvt.s32.f32 %v1403
  %v1532 = vcvt.s32.f32 %v1404
  %v1533 = vcvt.s32.f32 %v1405
  %v1534 = vcvt.s32.f32 %v1406
  %v1535 = vcvt.s32.f32 %v1407
  %v1536 = vcvt.s32.f32 %v1408
  %v1537 = vcvt.s32.f32 %v1409
  %v1538 = vcvt.s32.f32 %v1410
  %v1539 = vcvt.s32.f32 %v1411
  %v1540 = vcvt.s32.f32 %v1412
  %v1541 = vcvt.s32.f32 %v1413
  %v1542 = vcvt.s32.f32 %v1414
  %v1543 = vcvt.s32.f32 %v1415
  %v1544 = vcvt.s32.f32 %v1416
  %v1545 = vcvt.s32.f32 %v1417
  %v1546 = vcvt.s32.f32 %v1418
  %v1547 = vcvt.s32.f32 %v1419
  %v1548 = vcvt.s32.f32 %v1420
  %v1549 = vcvt.s32.f32 %v1421
  %v1550 = vcvt.s32.f32 %v1422
  %v1551 = vcvt.s32.f32 %v1423
  %v1552 = vcvt.s32.f32 %v1424
  %v1553 = vcvt.s32.f32 %v1425
  %v1554 = vcvt.s32.f32 %v1426
  %v1555 = vcvt.s32.f32 %v1427
  %v1556 = vcvt.s32.f32 %v1428
  %v1557 = vcvt.s32.f32 %v1429
  %v1558 = vcvt.s32.f32 %v1430
  %v1559 = vcvt.s32.f32 %v1431
  %v1560 = vcvt.s32.f32 %v1432
  %v1561 = vcvt.s32.f32 %v1433
  %v1562 = vcvt.s32.f32 %v1434
  %v1563 = vcvt.s32.f32 %v1435
  %v1564 = vcvt.s32.f32 %v1436
  %v1565 = vcvt.s32.f32 %v1437
  %v1566 = vcvt.s32.f32 %v1438
  %v1567 = vcvt.s32.f32 %v1439
  %v1568 = vcvt.s32.f32 %v1440
  %v1569 = vcvt.s32.f32 %v1441
  %v1570 = vcvt.s32.f32 %v1442
  %v1571 = vcvt.s32.f32 %v1443
  %v1572 = vcvt.s32.f32 %v1444
  %v1573 = vcvt.s32.f32 %v1445
  %v1574 = vcvt.s32.f32 %v1446
  %v1575 = vcvt.s32.f32 %v1447
  %v1576 = vcvt.s32.f32 %v1448
  %v1577 = vcvt.s32.f32 %v1449
  %v1578 = vcvt.s32.f32 %v1450
  %v1579 = vcvt.s32.f32 %v1451
  %v1580 = vcvt.s32.f32 %v1452
  %v1581 = vcvt.s32.f32 %v1453
  %v1582 = vcvt.s32.f32 %v1454
  %v1583 = vcvt.s32.f32 %v1455
  %v1584 = vcvt.s32.f32 %v1456
  %v1585 = vcvt.s32.f32 %v1457
  %v1586 = vcvt.s32.f32 %v1458
  %v1587 = vcvt.s32.f32 %v1459
  %v1588 = vcvt.s32.f32 %v1460
  %v1589 = vcvt.s32.f32 %v1461
  %v1590 = vcvt.s32.f32 %v1462
  %v1591 = vcvt.s32.f32 %v1463
  %v1592 = vcvt.s32.f32 %v1464
  %v1593 = vcvt.s32.f32 %v1465
  %v1594 = vcvt.s32.f32 %v1466
  %v1595 = vcvt.s32.f32 %v1467
  %v1596 = vcvt.s32.f32 %v1468
  %v1597 = vcvt.s32.f32 %v1469
  %v1598 = vcvt.s32.f32 %v1470
  %v1599 = vcvt.s32.f32 %v1471
  %v1600 = vcvt.s32.f32 %v1472
  %v1601 = vcvt.s32.f32 %v1473
  %v1602 = vcvt.s32.f32 %v1474
  %v1603 = vcvt.s32.f32 %v1475
  %v1604 = vcvt.s32.f32 %v1476
  %v1605 = vcvt.s32.f32 %v1477
  %v1606 = vcvt.s32.f32 %v1478
  %v1607 = vcvt.s32.f32 %v1479
  %v1608 = vpack.c.bf16 %v1484, %v1480
  %v1609 = vpack.c.bf16 %v1485, %v1481
  %v1610 = vpack.c.bf16 %v1486, %v1482
  %v1611 = vpack.c.bf16 %v1487, %v1483
  %v1612 = vpack.c.bf16 %v1492, %v1488
  %v1613 = vpack.c.bf16 %v1493, %v1489
  %v1614 = vpack.c.bf16 %v1494, %v1490
  %v1615 = vpack.c.bf16 %v1495, %v1491
  %v1616 = vpack.c.bf16 %v1500, %v1496
  %v1617 = vpack.c.bf16 %v1501, %v1497
  %v1618 = vpack.c.bf16 %v1502, %v1498
  %v1619 = vpack.c.bf16 %v1503, %v1499
  %v1620 = vpack.c.bf16 %v1508, %v1504
  %v1621 = vpack.c.bf16 %v1509, %v1505
  %v1622 = vpack.c.bf16 %v1510, %v1506
  %v1623 = vpack.c.bf16 %v1511, %v1507
  %v1624 = vpack.c.bf16 %v1516, %v1512
  %v1625 = vpack.c.bf16 %v1517, %v1513
  %v1626 = vpack.c.bf16 %v1518, %v1514
  %v1627 = vpack.c.bf16 %v1519, %v1515
  %v1628 = vpack.c.bf16 %v1524, %v1520
  %v1629 = vpack.c.bf16 %v1525, %v1521
  %v1630 = vpack.c.bf16 %v1526, %v1522
  %v1631 = vpack.c.bf16 %v1527, %v1523
  %v1632 = vpack.c.bf16 %v1532, %v1528
  %v1633 = vpack.c.bf16 %v1533, %v1529
  %v1634 = vpack.c.bf16 %v1534, %v1530
  %v1635 = vpack.c.bf16 %v1535, %v1531
  %v1636 = vpack.c.bf16 %v1540, %v1536
  %v1637 = vpack.c.bf16 %v1541, %v1537
  %v1638 = vpack.c.bf16 %v1542, %v1538
  %v1639 = vpack.c.bf16 %v1543, %v1539
  %v1640 = vpack.c.bf16 %v1548, %v1544
  %v1641 = vpack.c.bf16 %v1549, %v1545
  %v1642 = vpack.c.bf16 %v1550, %v1546
  %v1643 = vpack.c.bf16 %v1551, %v1547
  %v1644 = vpack.c.bf16 %v1556, %v1552
  %v1645 = vpack.c.bf16 %v1557, %v1553
  %v1646 = vpack.c.bf16 %v1558, %v1554
  %v1647 = vpack.c.bf16 %v1559, %v1555
  %v1648 = vpack.c.bf16 %v1564, %v1560
  %v1649 = vpack.c.bf16 %v1565, %v1561
  %v1650 = vpack.c.bf16 %v1566, %v1562
  %v1651 = vpack.c.bf16 %v1567, %v1563
  %v1652 = vpack.c.bf16 %v1572, %v1568
  %v1653 = vpack.c.bf16 %v1573, %v1569
  %v1654 = vpack.c.bf16 %v1574, %v1570
  %v1655 = vpack.c.bf16 %v1575, %v1571
  %v1656 = vpack.c.bf16 %v1580, %v1576
  %v1657 = vpack.c.bf16 %v1581, %v1577
  %v1658 = vpack.c.bf16 %v1582, %v1578
  %v1659 = vpack.c.bf16 %v1583, %v1579
  %v1660 = vpack.c.bf16 %v1588, %v1584
  %v1661 = vpack.c.bf16 %v1589, %v1585
  %v1662 = vpack.c.bf16 %v1590, %v1586
  %v1663 = vpack.c.bf16 %v1591, %v1587
  %v1664 = vpack.c.bf16 %v1596, %v1592
  %v1665 = vpack.c.bf16 %v1597, %v1593
  %v1666 = vpack.c.bf16 %v1598, %v1594
  %v1667 = vpack.c.bf16 %v1599, %v1595
  %v1668 = vpack.c.bf16 %v1604, %v1600
  %v1669 = vpack.c.bf16 %v1605, %v1601
  %v1670 = vpack.c.bf16 %v1606, %v1602
  %v1671 = vpack.c.bf16 %v1607, %v1603
  %1672 = vmatprep.subr.bf16.mxu0 %v1609
  %1673 = vmatpush1.bf16.msra.mxu0 %v1608
  %1674 = vmatprep.subr.bf16.mxu0 %v1613
  %1675 = vmatpush1.bf16.msra.mxu0 %v1612
  %1676 = vmatprep.subr.bf16.mxu0 %v1617
  %1677 = vmatpush1.bf16.msra.mxu0 %v1616
  %1678 = vmatprep.subr.bf16.mxu0 %v1621
  %1679 = vmatpush1.bf16.msra.mxu0 %v1620
  %1680 = vmatprep.subr.bf16.mxu0 %v1625
  %1681 = vmatpush1.bf16.msra.mxu0 %v1624
  %1682 = vmatprep.subr.bf16.mxu0 %v1629
  %1683 = vmatpush1.bf16.msra.mxu0 %v1628
  %1684 = vmatprep.subr.bf16.mxu0 %v1633
  %1685 = vmatpush1.bf16.msra.mxu0 %v1632
  %1686 = vmatprep.subr.bf16.mxu0 %v1637
  %1687 = vmatpush1.bf16.msra.mxu0 %v1636
  %1688 = vmatprep.subr.bf16.mxu0 %v1641
  %1689 = vmatpush1.bf16.msra.mxu0 %v1640
  %1690 = vmatprep.subr.bf16.mxu0 %v1645
  %1691 = vmatpush1.bf16.msra.mxu0 %v1644
  %1692 = vmatprep.subr.bf16.mxu0 %v1649
  %1693 = vmatpush1.bf16.msra.mxu0 %v1648
  %1694 = vmatprep.subr.bf16.mxu0 %v1653
  %1695 = vmatpush1.bf16.msra.mxu0 %v1652
  %1696 = vmatprep.subr.bf16.mxu0 %v1657
  %1697 = vmatpush1.bf16.msra.mxu0 %v1656
  %1698 = vmatprep.subr.bf16.mxu0 %v1661
  %1699 = vmatpush1.bf16.msra.mxu0 %v1660
  %1700 = vmatprep.subr.bf16.mxu0 %v1665
  %1701 = vmatpush1.bf16.msra.mxu0 %v1664
  %1702 = vmatprep.subr.bf16.mxu0 %v1669
  %1703 = vmatpush1.bf16.msra.mxu0 %v1668
  %1704 = vmatprep.mubr.bf16.mxu0 %v518
  %1705 = vmatmul.mubr.bf16.gmra.mrb[0].mxu0 %v517
  %v1706 = vpop.f32.mrb[0].mxu0
  %v1707 = vadd.f32 0.0, %v1706
  %v1708 = vpop.f32.mrb[0].mxu0
  %v1709 = vadd.f32 0.0, %v1708
  %v1710 = vpop.f32.mrb[0].mxu0
  %v1711 = vpop.f32.mrb[0].mxu0
  %1712 = vdwg.mxu0
  %1713 = vmatprep.subr.bf16.mxu0 %v1611
  %1714 = vmatpush1.bf16.msra.mxu0 %v1610
  %1715 = vmatprep.subr.bf16.mxu0 %v1615
  %1716 = vmatpush1.bf16.msra.mxu0 %v1614
  %1717 = vmatprep.subr.bf16.mxu0 %v1619
  %1718 = vmatpush1.bf16.msra.mxu0 %v1618
  %1719 = vmatprep.subr.bf16.mxu0 %v1623
  %1720 = vmatpush1.bf16.msra.mxu0 %v1622
  %1721 = vmatprep.subr.bf16.mxu0 %v1627
  %1722 = vmatpush1.bf16.msra.mxu0 %v1626
  %1723 = vmatprep.subr.bf16.mxu0 %v1631
  %1724 = vmatpush1.bf16.msra.mxu0 %v1630
  %1725 = vmatprep.subr.bf16.mxu0 %v1635
  %1726 = vmatpush1.bf16.msra.mxu0 %v1634
  %1727 = vmatprep.subr.bf16.mxu0 %v1639
  %1728 = vmatpush1.bf16.msra.mxu0 %v1638
  %1729 = vmatprep.subr.bf16.mxu0 %v1643
  %1730 = vmatpush1.bf16.msra.mxu0 %v1642
  %1731 = vmatprep.subr.bf16.mxu0 %v1647
  %1732 = vmatpush1.bf16.msra.mxu0 %v1646
  %1733 = vmatprep.subr.bf16.mxu0 %v1651
  %1734 = vmatpush1.bf16.msra.mxu0 %v1650
  %1735 = vmatprep.subr.bf16.mxu0 %v1655
  %1736 = vmatpush1.bf16.msra.mxu0 %v1654
  %1737 = vmatprep.subr.bf16.mxu0 %v1659
  %1738 = vmatpush1.bf16.msra.mxu0 %v1658
  %1739 = vmatprep.subr.bf16.mxu0 %v1663
  %1740 = vmatpush1.bf16.msra.mxu0 %v1662
  %1741 = vmatprep.subr.bf16.mxu0 %v1667
  %1742 = vmatpush1.bf16.msra.mxu0 %v1666
  %1743 = vmatprep.subr.bf16.mxu0 %v1671
  %1744 = vmatpush1.bf16.msra.mxu0 %v1670
  %1745 = vmatprep.mubr.bf16.mxu0 %v518
  %1746 = vmatmul.mubr.bf16.gmra.mrb[0].mxu0 %v517
  %v1747 = vpop.f32.mrb[0].mxu0
  %v1748 = vadd.f32 0.0, %v1747
  %v1749 = vpop.f32.mrb[0].mxu0
  %v1750 = vadd.f32 0.0, %v1749
  %v1751 = vpop.f32.mrb[0].mxu0
  %v1752 = vpop.f32.mrb[0].mxu0
  %1753 = vdwg.mxu0
  %v1754 = vpack.c.bf16 %v1707, %v1707
  %v1755 = vpack.c.bf16 %v1709, %v1709
  %v1756 = vpack.c.bf16 %v1748, %v1748
  %v1757 = vpack.c.bf16 %v1750, %v1750
  %v1762 = vcombine.low %v1754, %v1755
  %v1763 = vcombine.low %v1756, %v1757
  %v1765 = vunpack.c.l.s4 1983009808
  %v1766 = vunpack.c.0.s8 %v1765
  %v1767 = vlaneseq
  %v1768 = vshrl.u32 %v1767, 7
  %v1769 = vsub.s32 %v1766, %v1768
  %v1770 = vrot.slane %v1762, %v1769
  %v1772 = vunpack.c.l.s4 1983009808
  %v1773 = vunpack.c.0.s8 %v1772
  %v1774 = vlaneseq
  %v1775 = vshrl.u32 %v1774, 7
  %v1776 = vsub.s32 %v1773, %v1775
  %v1777 = vrot.slane %v1763, %v1776
  %v1778 = vcombine.low %v1770, %v1777
  %s1780 = scalar_lea.vmem %s2, 16
  %1781 = vst [vmem:[%s1780] sm:$0xff] %v1778
  %s1782 = scalar_lea.vmem %s0, 12
  %v1783 = vld [vmem:[%s1782] sm:$0xf]
  %v1784 = vlaneseq
  %v1785 = vshrl.u32 %v1784, 7
  %v1786 = vsub.s32 0, %v1785
  %v1787 = vrot.slane %v1783, %v1786
  %v1788 = vlaneseq
  %v1789 = vshrl.u32 %v1788, 7
  %v1790 = vsub.s32 1, %v1789
  %v1791 = vrot.slane %v1783, %v1790
  %v1792 = vlaneseq
  %v1793 = vshrl.u32 %v1792, 7
  %v1794 = vsub.s32 2, %v1793
  %v1795 = vrot.slane %v1783, %v1794
  %v1796 = vlaneseq
  %v1797 = vshrl.u32 %v1796, 7
  %v1798 = vsub.s32 3, %v1797
  %v1799 = vrot.slane %v1783, %v1798
  %vm1800 = vcmp.eq.s32.totalorder %v13, %v1787
  %vm1801 = vcmp.eq.s32.totalorder %v13, %v1791
  %vm1802 = vcmp.eq.s32.totalorder %v13, %v1795
  %vm1803 = vcmp.eq.s32.totalorder %v13, %v1799
  %vm1804 = vcmp.eq.s32.totalorder %v14, %v1787
  %vm1805 = vcmp.eq.s32.totalorder %v14, %v1791
  %vm1806 = vcmp.eq.s32.totalorder %v14, %v1795
  %vm1807 = vcmp.eq.s32.totalorder %v14, %v1799
  %vm1808 = vcmp.eq.s32.totalorder %v15, %v1787
  %vm1809 = vcmp.eq.s32.totalorder %v15, %v1791
  %vm1810 = vcmp.eq.s32.totalorder %v15, %v1795
  %vm1811 = vcmp.eq.s32.totalorder %v15, %v1799
  %vm1812 = vcmp.eq.s32.totalorder %v16, %v1787
  %vm1813 = vcmp.eq.s32.totalorder %v16, %v1791
  %vm1814 = vcmp.eq.s32.totalorder %v16, %v1795
  %vm1815 = vcmp.eq.s32.totalorder %v16, %v1799
  %vm1816 = vcmp.eq.s32.totalorder %v17, %v1787
  %vm1817 = vcmp.eq.s32.totalorder %v17, %v1791
  %vm1818 = vcmp.eq.s32.totalorder %v17, %v1795
  %vm1819 = vcmp.eq.s32.totalorder %v17, %v1799
  %vm1820 = vcmp.eq.s32.totalorder %v18, %v1787
  %vm1821 = vcmp.eq.s32.totalorder %v18, %v1791
  %vm1822 = vcmp.eq.s32.totalorder %v18, %v1795
  %vm1823 = vcmp.eq.s32.totalorder %v18, %v1799
  %vm1824 = vcmp.eq.s32.totalorder %v19, %v1787
  %vm1825 = vcmp.eq.s32.totalorder %v19, %v1791
  %vm1826 = vcmp.eq.s32.totalorder %v19, %v1795
  %vm1827 = vcmp.eq.s32.totalorder %v19, %v1799
  %vm1828 = vcmp.eq.s32.totalorder %v20, %v1787
  %vm1829 = vcmp.eq.s32.totalorder %v20, %v1791
  %vm1830 = vcmp.eq.s32.totalorder %v20, %v1795
  %vm1831 = vcmp.eq.s32.totalorder %v20, %v1799
  %vm1832 = vcmp.eq.s32.totalorder %v21, %v1787
  %vm1833 = vcmp.eq.s32.totalorder %v21, %v1791
  %vm1834 = vcmp.eq.s32.totalorder %v21, %v1795
  %vm1835 = vcmp.eq.s32.totalorder %v21, %v1799
  %vm1836 = vcmp.eq.s32.totalorder %v22, %v1787
  %vm1837 = vcmp.eq.s32.totalorder %v22, %v1791
  %vm1838 = vcmp.eq.s32.totalorder %v22, %v1795
  %vm1839 = vcmp.eq.s32.totalorder %v22, %v1799
  %vm1840 = vcmp.eq.s32.totalorder %v23, %v1787
  %vm1841 = vcmp.eq.s32.totalorder %v23, %v1791
  %vm1842 = vcmp.eq.s32.totalorder %v23, %v1795
  %vm1843 = vcmp.eq.s32.totalorder %v23, %v1799
  %vm1844 = vcmp.eq.s32.totalorder %v24, %v1787
  %vm1845 = vcmp.eq.s32.totalorder %v24, %v1791
  %vm1846 = vcmp.eq.s32.totalorder %v24, %v1795
  %vm1847 = vcmp.eq.s32.totalorder %v24, %v1799
  %vm1848 = vcmp.eq.s32.totalorder %v25, %v1787
  %vm1849 = vcmp.eq.s32.totalorder %v25, %v1791
  %vm1850 = vcmp.eq.s32.totalorder %v25, %v1795
  %vm1851 = vcmp.eq.s32.totalorder %v25, %v1799
  %vm1852 = vcmp.eq.s32.totalorder %v26, %v1787
  %vm1853 = vcmp.eq.s32.totalorder %v26, %v1791
  %vm1854 = vcmp.eq.s32.totalorder %v26, %v1795
  %vm1855 = vcmp.eq.s32.totalorder %v26, %v1799
  %vm1856 = vcmp.eq.s32.totalorder %v27, %v1787
  %vm1857 = vcmp.eq.s32.totalorder %v27, %v1791
  %vm1858 = vcmp.eq.s32.totalorder %v27, %v1795
  %vm1859 = vcmp.eq.s32.totalorder %v27, %v1799
  %vm1860 = vcmp.eq.s32.totalorder %v28, %v1787
  %vm1861 = vcmp.eq.s32.totalorder %v28, %v1791
  %vm1862 = vcmp.eq.s32.totalorder %v28, %v1795
  %vm1863 = vcmp.eq.s32.totalorder %v28, %v1799
  %vm1864 = vcmp.eq.s32.totalorder %v29, %v1787
  %vm1865 = vcmp.eq.s32.totalorder %v29, %v1791
  %vm1866 = vcmp.eq.s32.totalorder %v29, %v1795
  %vm1867 = vcmp.eq.s32.totalorder %v29, %v1799
  %vm1868 = vcmp.eq.s32.totalorder %v30, %v1787
  %vm1869 = vcmp.eq.s32.totalorder %v30, %v1791
  %vm1870 = vcmp.eq.s32.totalorder %v30, %v1795
  %vm1871 = vcmp.eq.s32.totalorder %v30, %v1799
  %vm1872 = vcmp.eq.s32.totalorder %v31, %v1787
  %vm1873 = vcmp.eq.s32.totalorder %v31, %v1791
  %vm1874 = vcmp.eq.s32.totalorder %v31, %v1795
  %vm1875 = vcmp.eq.s32.totalorder %v31, %v1799
  %vm1876 = vcmp.eq.s32.totalorder %v32, %v1787
  %vm1877 = vcmp.eq.s32.totalorder %v32, %v1791
  %vm1878 = vcmp.eq.s32.totalorder %v32, %v1795
  %vm1879 = vcmp.eq.s32.totalorder %v32, %v1799
  %vm1880 = vcmp.eq.s32.totalorder %v33, %v1787
  %vm1881 = vcmp.eq.s32.totalorder %v33, %v1791
  %vm1882 = vcmp.eq.s32.totalorder %v33, %v1795
  %vm1883 = vcmp.eq.s32.totalorder %v33, %v1799
  %vm1884 = vcmp.eq.s32.totalorder %v34, %v1787
  %vm1885 = vcmp.eq.s32.totalorder %v34, %v1791
  %vm1886 = vcmp.eq.s32.totalorder %v34, %v1795
  %vm1887 = vcmp.eq.s32.totalorder %v34, %v1799
  %vm1888 = vcmp.eq.s32.totalorder %v35, %v1787
  %vm1889 = vcmp.eq.s32.totalorder %v35, %v1791
  %vm1890 = vcmp.eq.s32.totalorder %v35, %v1795
  %vm1891 = vcmp.eq.s32.totalorder %v35, %v1799
  %vm1892 = vcmp.eq.s32.totalorder %v36, %v1787
  %vm1893 = vcmp.eq.s32.totalorder %v36, %v1791
  %vm1894 = vcmp.eq.s32.totalorder %v36, %v1795
  %vm1895 = vcmp.eq.s32.totalorder %v36, %v1799
  %vm1896 = vcmp.eq.s32.totalorder %v37, %v1787
  %vm1897 = vcmp.eq.s32.totalorder %v37, %v1791
  %vm1898 = vcmp.eq.s32.totalorder %v37, %v1795
  %vm1899 = vcmp.eq.s32.totalorder %v37, %v1799
  %vm1900 = vcmp.eq.s32.totalorder %v38, %v1787
  %vm1901 = vcmp.eq.s32.totalorder %v38, %v1791
  %vm1902 = vcmp.eq.s32.totalorder %v38, %v1795
  %vm1903 = vcmp.eq.s32.totalorder %v38, %v1799
  %vm1904 = vcmp.eq.s32.totalorder %v39, %v1787
  %vm1905 = vcmp.eq.s32.totalorder %v39, %v1791
  %vm1906 = vcmp.eq.s32.totalorder %v39, %v1795
  %vm1907 = vcmp.eq.s32.totalorder %v39, %v1799
  %vm1908 = vcmp.eq.s32.totalorder %v40, %v1787
  %vm1909 = vcmp.eq.s32.totalorder %v40, %v1791
  %vm1910 = vcmp.eq.s32.totalorder %v40, %v1795
  %vm1911 = vcmp.eq.s32.totalorder %v40, %v1799
  %vm1912 = vcmp.eq.s32.totalorder %v41, %v1787
  %vm1913 = vcmp.eq.s32.totalorder %v41, %v1791
  %vm1914 = vcmp.eq.s32.totalorder %v41, %v1795
  %vm1915 = vcmp.eq.s32.totalorder %v41, %v1799
  %vm1916 = vcmp.eq.s32.totalorder %v42, %v1787
  %vm1917 = vcmp.eq.s32.totalorder %v42, %v1791
  %vm1918 = vcmp.eq.s32.totalorder %v42, %v1795
  %vm1919 = vcmp.eq.s32.totalorder %v42, %v1799
  %vm1920 = vcmp.eq.s32.totalorder %v43, %v1787
  %vm1921 = vcmp.eq.s32.totalorder %v43, %v1791
  %vm1922 = vcmp.eq.s32.totalorder %v43, %v1795
  %vm1923 = vcmp.eq.s32.totalorder %v43, %v1799
  %vm1924 = vcmp.eq.s32.totalorder %v44, %v1787
  %vm1925 = vcmp.eq.s32.totalorder %v44, %v1791
  %vm1926 = vcmp.eq.s32.totalorder %v44, %v1795
  %vm1927 = vcmp.eq.s32.totalorder %v44, %v1799
  %v1928 = vsel %vm1800, 1, 0
  %v1929 = vsel %vm1801, 1, 0
  %v1930 = vsel %vm1802, 1, 0
  %v1931 = vsel %vm1803, 1, 0
  %v1932 = vsel %vm1804, 1, 0
  %v1933 = vsel %vm1805, 1, 0
  %v1934 = vsel %vm1806, 1, 0
  %v1935 = vsel %vm1807, 1, 0
  %v1936 = vsel %vm1808, 1, 0
  %v1937 = vsel %vm1809, 1, 0
  %v1938 = vsel %vm1810, 1, 0
  %v1939 = vsel %vm1811, 1, 0
  %v1940 = vsel %vm1812, 1, 0
  %v1941 = vsel %vm1813, 1, 0
  %v1942 = vsel %vm1814, 1, 0
  %v1943 = vsel %vm1815, 1, 0
  %v1944 = vsel %vm1816, 1, 0
  %v1945 = vsel %vm1817, 1, 0
  %v1946 = vsel %vm1818, 1, 0
  %v1947 = vsel %vm1819, 1, 0
  %v1948 = vsel %vm1820, 1, 0
  %v1949 = vsel %vm1821, 1, 0
  %v1950 = vsel %vm1822, 1, 0
  %v1951 = vsel %vm1823, 1, 0
  %v1952 = vsel %vm1824, 1, 0
  %v1953 = vsel %vm1825, 1, 0
  %v1954 = vsel %vm1826, 1, 0
  %v1955 = vsel %vm1827, 1, 0
  %v1956 = vsel %vm1828, 1, 0
  %v1957 = vsel %vm1829, 1, 0
  %v1958 = vsel %vm1830, 1, 0
  %v1959 = vsel %vm1831, 1, 0
  %v1960 = vsel %vm1832, 1, 0
  %v1961 = vsel %vm1833, 1, 0
  %v1962 = vsel %vm1834, 1, 0
  %v1963 = vsel %vm1835, 1, 0
  %v1964 = vsel %vm1836, 1, 0
  %v1965 = vsel %vm1837, 1, 0
  %v1966 = vsel %vm1838, 1, 0
  %v1967 = vsel %vm1839, 1, 0
  %v1968 = vsel %vm1840, 1, 0
  %v1969 = vsel %vm1841, 1, 0
  %v1970 = vsel %vm1842, 1, 0
  %v1971 = vsel %vm1843, 1, 0
  %v1972 = vsel %vm1844, 1, 0
  %v1973 = vsel %vm1845, 1, 0
  %v1974 = vsel %vm1846, 1, 0
  %v1975 = vsel %vm1847, 1, 0
  %v1976 = vsel %vm1848, 1, 0
  %v1977 = vsel %vm1849, 1, 0
  %v1978 = vsel %vm1850, 1, 0
  %v1979 = vsel %vm1851, 1, 0
  %v1980 = vsel %vm1852, 1, 0
  %v1981 = vsel %vm1853, 1, 0
  %v1982 = vsel %vm1854, 1, 0
  %v1983 = vsel %vm1855, 1, 0
  %v1984 = vsel %vm1856, 1, 0
  %v1985 = vsel %vm1857, 1, 0
  %v1986 = vsel %vm1858, 1, 0
  %v1987 = vsel %vm1859, 1, 0
  %v1988 = vsel %vm1860, 1, 0
  %v1989 = vsel %vm1861, 1, 0
  %v1990 = vsel %vm1862, 1, 0
  %v1991 = vsel %vm1863, 1, 0
  %v1992 = vsel %vm1864, 1, 0
  %v1993 = vsel %vm1865, 1, 0
  %v1994 = vsel %vm1866, 1, 0
  %v1995 = vsel %vm1867, 1, 0
  %v1996 = vsel %vm1868, 1, 0
  %v1997 = vsel %vm1869, 1, 0
  %v1998 = vsel %vm1870, 1, 0
  %v1999 = vsel %vm1871, 1, 0
  %v2000 = vsel %vm1872, 1, 0
  %v2001 = vsel %vm1873, 1, 0
  %v2002 = vsel %vm1874, 1, 0
  %v2003 = vsel %vm1875, 1, 0
  %v2004 = vsel %vm1876, 1, 0
  %v2005 = vsel %vm1877, 1, 0
  %v2006 = vsel %vm1878, 1, 0
  %v2007 = vsel %vm1879, 1, 0
  %v2008 = vsel %vm1880, 1, 0
  %v2009 = vsel %vm1881, 1, 0
  %v2010 = vsel %vm1882, 1, 0
  %v2011 = vsel %vm1883, 1, 0
  %v2012 = vsel %vm1884, 1, 0
  %v2013 = vsel %vm1885, 1, 0
  %v2014 = vsel %vm1886, 1, 0
  %v2015 = vsel %vm1887, 1, 0
  %v2016 = vsel %vm1888, 1, 0
  %v2017 = vsel %vm1889, 1, 0
  %v2018 = vsel %vm1890, 1, 0
  %v2019 = vsel %vm1891, 1, 0
  %v2020 = vsel %vm1892, 1, 0
  %v2021 = vsel %vm1893, 1, 0
  %v2022 = vsel %vm1894, 1, 0
  %v2023 = vsel %vm1895, 1, 0
  %v2024 = vsel %vm1896, 1, 0
  %v2025 = vsel %vm1897, 1, 0
  %v2026 = vsel %vm1898, 1, 0
  %v2027 = vsel %vm1899, 1, 0
  %v2028 = vsel %vm1900, 1, 0
  %v2029 = vsel %vm1901, 1, 0
  %v2030 = vsel %vm1902, 1, 0
  %v2031 = vsel %vm1903, 1, 0
  %v2032 = vsel %vm1904, 1, 0
  %v2033 = vsel %vm1905, 1, 0
  %v2034 = vsel %vm1906, 1, 0
  %v2035 = vsel %vm1907, 1, 0
  %v2036 = vsel %vm1908, 1, 0
  %v2037 = vsel %vm1909, 1, 0
  %v2038 = vsel %vm1910, 1, 0
  %v2039 = vsel %vm1911, 1, 0
  %v2040 = vsel %vm1912, 1, 0
  %v2041 = vsel %vm1913, 1, 0
  %v2042 = vsel %vm1914, 1, 0
  %v2043 = vsel %vm1915, 1, 0
  %v2044 = vsel %vm1916, 1, 0
  %v2045 = vsel %vm1917, 1, 0
  %v2046 = vsel %vm1918, 1, 0
  %v2047 = vsel %vm1919, 1, 0
  %v2048 = vsel %vm1920, 1, 0
  %v2049 = vsel %vm1921, 1, 0
  %v2050 = vsel %vm1922, 1, 0
  %v2051 = vsel %vm1923, 1, 0
  %v2052 = vsel %vm1924, 1, 0
  %v2053 = vsel %vm1925, 1, 0
  %v2054 = vsel %vm1926, 1, 0
  %v2055 = vsel %vm1927, 1, 0
  %v2056 = vcvt.s32.f32 %v1928
  %v2057 = vcvt.s32.f32 %v1929
  %v2058 = vcvt.s32.f32 %v1930
  %v2059 = vcvt.s32.f32 %v1931
  %v2060 = vcvt.s32.f32 %v1932
  %v2061 = vcvt.s32.f32 %v1933
  %v2062 = vcvt.s32.f32 %v1934
  %v2063 = vcvt.s32.f32 %v1935
  %v2064 = vcvt.s32.f32 %v1936
  %v2065 = vcvt.s32.f32 %v1937
  %v2066 = vcvt.s32.f32 %v1938
  %v2067 = vcvt.s32.f32 %v1939
  %v2068 = vcvt.s32.f32 %v1940
  %v2069 = vcvt.s32.f32 %v1941
  %v2070 = vcvt.s32.f32 %v1942
  %v2071 = vcvt.s32.f32 %v1943
  %v2072 = vcvt.s32.f32 %v1944
  %v2073 = vcvt.s32.f32 %v1945
  %v2074 = vcvt.s32.f32 %v1946
  %v2075 = vcvt.s32.f32 %v1947
  %v2076 = vcvt.s32.f32 %v1948
  %v2077 = vcvt.s32.f32 %v1949
  %v2078 = vcvt.s32.f32 %v1950
  %v2079 = vcvt.s32.f32 %v1951
  %v2080 = vcvt.s32.f32 %v1952
  %v2081 = vcvt.s32.f32 %v1953
  %v2082 = vcvt.s32.f32 %v1954
  %v2083 = vcvt.s32.f32 %v1955
  %v2084 = vcvt.s32.f32 %v1956
  %v2085 = vcvt.s32.f32 %v1957
  %v2086 = vcvt.s32.f32 %v1958
  %v2087 = vcvt.s32.f32 %v1959
  %v2088 = vcvt.s32.f32 %v1960
  %v2089 = vcvt.s32.f32 %v1961
  %v2090 = vcvt.s32.f32 %v1962
  %v2091 = vcvt.s32.f32 %v1963
  %v2092 = vcvt.s32.f32 %v1964
  %v2093 = vcvt.s32.f32 %v1965
  %v2094 = vcvt.s32.f32 %v1966
  %v2095 = vcvt.s32.f32 %v1967
  %v2096 = vcvt.s32.f32 %v1968
  %v2097 = vcvt.s32.f32 %v1969
  %v2098 = vcvt.s32.f32 %v1970
  %v2099 = vcvt.s32.f32 %v1971
  %v2100 = vcvt.s32.f32 %v1972
  %v2101 = vcvt.s32.f32 %v1973
  %v2102 = vcvt.s32.f32 %v1974
  %v2103 = vcvt.s32.f32 %v1975
  %v2104 = vcvt.s32.f32 %v1976
  %v2105 = vcvt.s32.f32 %v1977
  %v2106 = vcvt.s32.f32 %v1978
  %v2107 = vcvt.s32.f32 %v1979
  %v2108 = vcvt.s32.f32 %v1980
  %v2109 = vcvt.s32.f32 %v1981
  %v2110 = vcvt.s32.f32 %v1982
  %v2111 = vcvt.s32.f32 %v1983
  %v2112 = vcvt.s32.f32 %v1984
  %v2113 = vcvt.s32.f32 %v1985
  %v2114 = vcvt.s32.f32 %v1986
  %v2115 = vcvt.s32.f32 %v1987
  %v2116 = vcvt.s32.f32 %v1988
  %v2117 = vcvt.s32.f32 %v1989
  %v2118 = vcvt.s32.f32 %v1990
  %v2119 = vcvt.s32.f32 %v1991
  %v2120 = vcvt.s32.f32 %v1992
  %v2121 = vcvt.s32.f32 %v1993
  %v2122 = vcvt.s32.f32 %v1994
  %v2123 = vcvt.s32.f32 %v1995
  %v2124 = vcvt.s32.f32 %v1996
  %v2125 = vcvt.s32.f32 %v1997
  %v2126 = vcvt.s32.f32 %v1998
  %v2127 = vcvt.s32.f32 %v1999
  %v2128 = vcvt.s32.f32 %v2000
  %v2129 = vcvt.s32.f32 %v2001
  %v2130 = vcvt.s32.f32 %v2002
  %v2131 = vcvt.s32.f32 %v2003
  %v2132 = vcvt.s32.f32 %v2004
  %v2133 = vcvt.s32.f32 %v2005
  %v2134 = vcvt.s32.f32 %v2006
  %v2135 = vcvt.s32.f32 %v2007
  %v2136 = vcvt.s32.f32 %v2008
  %v2137 = vcvt.s32.f32 %v2009
  %v2138 = vcvt.s32.f32 %v2010
  %v2139 = vcvt.s32.f32 %v2011
  %v2140 = vcvt.s32.f32 %v2012
  %v2141 = vcvt.s32.f32 %v2013
  %v2142 = vcvt.s32.f32 %v2014
  %v2143 = vcvt.s32.f32 %v2015
  %v2144 = vcvt.s32.f32 %v2016
  %v2145 = vcvt.s32.f32 %v2017
  %v2146 = vcvt.s32.f32 %v2018
  %v2147 = vcvt.s32.f32 %v2019
  %v2148 = vcvt.s32.f32 %v2020
  %v2149 = vcvt.s32.f32 %v2021
  %v2150 = vcvt.s32.f32 %v2022
  %v2151 = vcvt.s32.f32 %v2023
  %v2152 = vcvt.s32.f32 %v2024
  %v2153 = vcvt.s32.f32 %v2025
  %v2154 = vcvt.s32.f32 %v2026
  %v2155 = vcvt.s32.f32 %v2027
  %v2156 = vcvt.s32.f32 %v2028
  %v2157 = vcvt.s32.f32 %v2029
  %v2158 = vcvt.s32.f32 %v2030
  %v2159 = vcvt.s32.f32 %v2031
  %v2160 = vcvt.s32.f32 %v2032
  %v2161 = vcvt.s32.f32 %v2033
  %v2162 = vcvt.s32.f32 %v2034
  %v2163 = vcvt.s32.f32 %v2035
  %v2164 = vcvt.s32.f32 %v2036
  %v2165 = vcvt.s32.f32 %v2037
  %v2166 = vcvt.s32.f32 %v2038
  %v2167 = vcvt.s32.f32 %v2039
  %v2168 = vcvt.s32.f32 %v2040
  %v2169 = vcvt.s32.f32 %v2041
  %v2170 = vcvt.s32.f32 %v2042
  %v2171 = vcvt.s32.f32 %v2043
  %v2172 = vcvt.s32.f32 %v2044
  %v2173 = vcvt.s32.f32 %v2045
  %v2174 = vcvt.s32.f32 %v2046
  %v2175 = vcvt.s32.f32 %v2047
  %v2176 = vcvt.s32.f32 %v2048
  %v2177 = vcvt.s32.f32 %v2049
  %v2178 = vcvt.s32.f32 %v2050
  %v2179 = vcvt.s32.f32 %v2051
  %v2180 = vcvt.s32.f32 %v2052
  %v2181 = vcvt.s32.f32 %v2053
  %v2182 = vcvt.s32.f32 %v2054
  %v2183 = vcvt.s32.f32 %v2055
  %v2184 = vpack.c.bf16 %v2060, %v2056
  %v2185 = vpack.c.bf16 %v2061, %v2057
  %v2186 = vpack.c.bf16 %v2062, %v2058
  %v2187 = vpack.c.bf16 %v2063, %v2059
  %v2188 = vpack.c.bf16 %v2068, %v2064
  %v2189 = vpack.c.bf16 %v2069, %v2065
  %v2190 = vpack.c.bf16 %v2070, %v2066
  %v2191 = vpack.c.bf16 %v2071, %v2067
  %v2192 = vpack.c.bf16 %v2076, %v2072
  %v2193 = vpack.c.bf16 %v2077, %v2073
  %v2194 = vpack.c.bf16 %v2078, %v2074
  %v2195 = vpack.c.bf16 %v2079, %v2075
  %v2196 = vpack.c.bf16 %v2084, %v2080
  %v2197 = vpack.c.bf16 %v2085, %v2081
  %v2198 = vpack.c.bf16 %v2086, %v2082
  %v2199 = vpack.c.bf16 %v2087, %v2083
  %v2200 = vpack.c.bf16 %v2092, %v2088
  %v2201 = vpack.c.bf16 %v2093, %v2089
  %v2202 = vpack.c.bf16 %v2094, %v2090
  %v2203 = vpack.c.bf16 %v2095, %v2091
  %v2204 = vpack.c.bf16 %v2100, %v2096
  %v2205 = vpack.c.bf16 %v2101, %v2097
  %v2206 = vpack.c.bf16 %v2102, %v2098
  %v2207 = vpack.c.bf16 %v2103, %v2099
  %v2208 = vpack.c.bf16 %v2108, %v2104
  %v2209 = vpack.c.bf16 %v2109, %v2105
  %v2210 = vpack.c.bf16 %v2110, %v2106
  %v2211 = vpack.c.bf16 %v2111, %v2107
  %v2212 = vpack.c.bf16 %v2116, %v2112
  %v2213 = vpack.c.bf16 %v2117, %v2113
  %v2214 = vpack.c.bf16 %v2118, %v2114
  %v2215 = vpack.c.bf16 %v2119, %v2115
  %v2216 = vpack.c.bf16 %v2124, %v2120
  %v2217 = vpack.c.bf16 %v2125, %v2121
  %v2218 = vpack.c.bf16 %v2126, %v2122
  %v2219 = vpack.c.bf16 %v2127, %v2123
  %v2220 = vpack.c.bf16 %v2132, %v2128
  %v2221 = vpack.c.bf16 %v2133, %v2129
  %v2222 = vpack.c.bf16 %v2134, %v2130
  %v2223 = vpack.c.bf16 %v2135, %v2131
  %v2224 = vpack.c.bf16 %v2140, %v2136
  %v2225 = vpack.c.bf16 %v2141, %v2137
  %v2226 = vpack.c.bf16 %v2142, %v2138
  %v2227 = vpack.c.bf16 %v2143, %v2139
  %v2228 = vpack.c.bf16 %v2148, %v2144
  %v2229 = vpack.c.bf16 %v2149, %v2145
  %v2230 = vpack.c.bf16 %v2150, %v2146
  %v2231 = vpack.c.bf16 %v2151, %v2147
  %v2232 = vpack.c.bf16 %v2156, %v2152
  %v2233 = vpack.c.bf16 %v2157, %v2153
  %v2234 = vpack.c.bf16 %v2158, %v2154
  %v2235 = vpack.c.bf16 %v2159, %v2155
  %v2236 = vpack.c.bf16 %v2164, %v2160
  %v2237 = vpack.c.bf16 %v2165, %v2161
  %v2238 = vpack.c.bf16 %v2166, %v2162
  %v2239 = vpack.c.bf16 %v2167, %v2163
  %v2240 = vpack.c.bf16 %v2172, %v2168
  %v2241 = vpack.c.bf16 %v2173, %v2169
  %v2242 = vpack.c.bf16 %v2174, %v2170
  %v2243 = vpack.c.bf16 %v2175, %v2171
  %v2244 = vpack.c.bf16 %v2180, %v2176
  %v2245 = vpack.c.bf16 %v2181, %v2177
  %v2246 = vpack.c.bf16 %v2182, %v2178
  %v2247 = vpack.c.bf16 %v2183, %v2179
  %2248 = vmatprep.subr.bf16.mxu0 %v2185
  %2249 = vmatpush1.bf16.msra.mxu0 %v2184
  %2250 = vmatprep.subr.bf16.mxu0 %v2189
  %2251 = vmatpush1.bf16.msra.mxu0 %v2188
  %2252 = vmatprep.subr.bf16.mxu0 %v2193
  %2253 = vmatpush1.bf16.msra.mxu0 %v2192
  %2254 = vmatprep.subr.bf16.mxu0 %v2197
  %2255 = vmatpush1.bf16.msra.mxu0 %v2196
  %2256 = vmatprep.subr.bf16.mxu0 %v2201
  %2257 = vmatpush1.bf16.msra.mxu0 %v2200
  %2258 = vmatprep.subr.bf16.mxu0 %v2205
  %2259 = vmatpush1.bf16.msra.mxu0 %v2204
  %2260 = vmatprep.subr.bf16.mxu0 %v2209
  %2261 = vmatpush1.bf16.msra.mxu0 %v2208
  %2262 = vmatprep.subr.bf16.mxu0 %v2213
  %2263 = vmatpush1.bf16.msra.mxu0 %v2212
  %2264 = vmatprep.subr.bf16.mxu0 %v2217
  %2265 = vmatpush1.bf16.msra.mxu0 %v2216
  %2266 = vmatprep.subr.bf16.mxu0 %v2221
  %2267 = vmatpush1.bf16.msra.mxu0 %v2220
  %2268 = vmatprep.subr.bf16.mxu0 %v2225
  %2269 = vmatpush1.bf16.msra.mxu0 %v2224
  %2270 = vmatprep.subr.bf16.mxu0 %v2229
  %2271 = vmatpush1.bf16.msra.mxu0 %v2228
  %2272 = vmatprep.subr.bf16.mxu0 %v2233
  %2273 = vmatpush1.bf16.msra.mxu0 %v2232
  %2274 = vmatprep.subr.bf16.mxu0 %v2237
  %2275 = vmatpush1.bf16.msra.mxu0 %v2236
  %2276 = vmatprep.subr.bf16.mxu0 %v2241
  %2277 = vmatpush1.bf16.msra.mxu0 %v2240
  %2278 = vmatprep.subr.bf16.mxu0 %v2245
  %2279 = vmatpush1.bf16.msra.mxu0 %v2244
  %2280 = vmatprep.mubr.bf16.mxu0 %v518
  %2281 = vmatmul.mubr.bf16.gmra.mrb[0].mxu0 %v517
  %v2282 = vpop.f32.mrb[0].mxu0
  %v2283 = vadd.f32 0.0, %v2282
  %v2284 = vpop.f32.mrb[0].mxu0
  %v2285 = vadd.f32 0.0, %v2284
  %v2286 = vpop.f32.mrb[0].mxu0
  %v2287 = vpop.f32.mrb[0].mxu0
  %2288 = vdwg.mxu0
  %2289 = vmatprep.subr.bf16.mxu0 %v2187
  %2290 = vmatpush1.bf16.msra.mxu0 %v2186
  %2291 = vmatprep.subr.bf16.mxu0 %v2191
  %2292 = vmatpush1.bf16.msra.mxu0 %v2190
  %2293 = vmatprep.subr.bf16.mxu0 %v2195
  %2294 = vmatpush1.bf16.msra.mxu0 %v2194
  %2295 = vmatprep.subr.bf16.mxu0 %v2199
  %2296 = vmatpush1.bf16.msra.mxu0 %v2198
  %2297 = vmatprep.subr.bf16.mxu0 %v2203
  %2298 = vmatpush1.bf16.msra.mxu0 %v2202
  %2299 = vmatprep.subr.bf16.mxu0 %v2207
  %2300 = vmatpush1.bf16.msra.mxu0 %v2206
  %2301 = vmatprep.subr.bf16.mxu0 %v2211
  %2302 = vmatpush1.bf16.msra.mxu0 %v2210
  %2303 = vmatprep.subr.bf16.mxu0 %v2215
  %2304 = vmatpush1.bf16.msra.mxu0 %v2214
  %2305 = vmatprep.subr.bf16.mxu0 %v2219
  %2306 = vmatpush1.bf16.msra.mxu0 %v2218
  %2307 = vmatprep.subr.bf16.mxu0 %v2223
  %2308 = vmatpush1.bf16.msra.mxu0 %v2222
  %2309 = vmatprep.subr.bf16.mxu0 %v2227
  %2310 = vmatpush1.bf16.msra.mxu0 %v2226
  %2311 = vmatprep.subr.bf16.mxu0 %v2231
  %2312 = vmatpush1.bf16.msra.mxu0 %v2230
  %2313 = vmatprep.subr.bf16.mxu0 %v2235
  %2314 = vmatpush1.bf16.msra.mxu0 %v2234
  %2315 = vmatprep.subr.bf16.mxu0 %v2239
  %2316 = vmatpush1.bf16.msra.mxu0 %v2238
  %2317 = vmatprep.subr.bf16.mxu0 %v2243
  %2318 = vmatpush1.bf16.msra.mxu0 %v2242
  %2319 = vmatprep.subr.bf16.mxu0 %v2247
  %2320 = vmatpush1.bf16.msra.mxu0 %v2246
  %2321 = vmatprep.mubr.bf16.mxu0 %v518
  %2322 = vmatmul.mubr.bf16.gmra.mrb[0].mxu0 %v517
  %v2323 = vpop.f32.mrb[0].mxu0
  %v2324 = vadd.f32 0.0, %v2323
  %v2325 = vpop.f32.mrb[0].mxu0
  %v2326 = vadd.f32 0.0, %v2325
  %v2327 = vpop.f32.mrb[0].mxu0
  %v2328 = vpop.f32.mrb[0].mxu0
  %2329 = vdwg.mxu0
  %v2330 = vpack.c.bf16 %v2283, %v2283
  %v2331 = vpack.c.bf16 %v2285, %v2285
  %v2332 = vpack.c.bf16 %v2324, %v2324
  %v2333 = vpack.c.bf16 %v2326, %v2326
  %v2338 = vcombine.low %v2330, %v2331
  %v2339 = vcombine.low %v2332, %v2333
  %v2341 = vunpack.c.l.s4 1983009808
  %v2342 = vunpack.c.0.s8 %v2341
  %v2343 = vlaneseq
  %v2344 = vshrl.u32 %v2343, 7
  %v2345 = vsub.s32 %v2342, %v2344
  %v2346 = vrot.slane %v2338, %v2345
  %v2348 = vunpack.c.l.s4 1983009808
  %v2349 = vunpack.c.0.s8 %v2348
  %v2350 = vlaneseq
  %v2351 = vshrl.u32 %v2350, 7
  %v2352 = vsub.s32 %v2349, %v2351
  %v2353 = vrot.slane %v2339, %v2352
  %v2354 = vcombine.low %v2346, %v2353
  %s2356 = scalar_lea.vmem %s2, 24
  %2357 = vst [vmem:[%s2356] sm:$0xff] %v2354
  %s2358 = scalar_lea.vmem %s0, 16
  %v2359 = vld [vmem:[%s2358] sm:$0xf]
  %v2360 = vlaneseq
  %v2361 = vshrl.u32 %v2360, 7
  %v2362 = vsub.s32 0, %v2361
  %v2363 = vrot.slane %v2359, %v2362
  %v2364 = vlaneseq
  %v2365 = vshrl.u32 %v2364, 7
  %v2366 = vsub.s32 1, %v2365
  %v2367 = vrot.slane %v2359, %v2366
  %v2368 = vlaneseq
  %v2369 = vshrl.u32 %v2368, 7
  %v2370 = vsub.s32 2, %v2369
  %v2371 = vrot.slane %v2359, %v2370
  %v2372 = vlaneseq
  %v2373 = vshrl.u32 %v2372, 7
  %v2374 = vsub.s32 3, %v2373
  %v2375 = vrot.slane %v2359, %v2374
  %vm2376 = vcmp.eq.s32.totalorder %v13, %v2363
  %vm2377 = vcmp.eq.s32.totalorder %v13, %v2367
  %vm2378 = vcmp.eq.s32.totalorder %v13, %v2371
  %vm2379 = vcmp.eq.s32.totalorder %v13, %v2375
  %vm2380 = vcmp.eq.s32.totalorder %v14, %v2363
  %vm2381 = vcmp.eq.s32.totalorder %v14, %v2367
  %vm2382 = vcmp.eq.s32.totalorder %v14, %v2371
  %vm2383 = vcmp.eq.s32.totalorder %v14, %v2375
  %vm2384 = vcmp.eq.s32.totalorder %v15, %v2363
  %vm2385 = vcmp.eq.s32.totalorder %v15, %v2367
  %vm2386 = vcmp.eq.s32.totalorder %v15, %v2371
  %vm2387 = vcmp.eq.s32.totalorder %v15, %v2375
  %vm2388 = vcmp.eq.s32.totalorder %v16, %v2363
  %vm2389 = vcmp.eq.s32.totalorder %v16, %v2367
  %vm2390 = vcmp.eq.s32.totalorder %v16, %v2371
  %vm2391 = vcmp.eq.s32.totalorder %v16, %v2375
  %vm2392 = vcmp.eq.s32.totalorder %v17, %v2363
  %vm2393 = vcmp.eq.s32.totalorder %v17, %v2367
  %vm2394 = vcmp.eq.s32.totalorder %v17, %v2371
  %vm2395 = vcmp.eq.s32.totalorder %v17, %v2375
  %vm2396 = vcmp.eq.s32.totalorder %v18, %v2363
  %vm2397 = vcmp.eq.s32.totalorder %v18, %v2367
  %vm2398 = vcmp.eq.s32.totalorder %v18, %v2371
  %vm2399 = vcmp.eq.s32.totalorder %v18, %v2375
  %vm2400 = vcmp.eq.s32.totalorder %v19, %v2363
  %vm2401 = vcmp.eq.s32.totalorder %v19, %v2367
  %vm2402 = vcmp.eq.s32.totalorder %v19, %v2371
  %vm2403 = vcmp.eq.s32.totalorder %v19, %v2375
  %vm2404 = vcmp.eq.s32.totalorder %v20, %v2363
  %vm2405 = vcmp.eq.s32.totalorder %v20, %v2367
  %vm2406 = vcmp.eq.s32.totalorder %v20, %v2371
  %vm2407 = vcmp.eq.s32.totalorder %v20, %v2375
  %vm2408 = vcmp.eq.s32.totalorder %v21, %v2363
  %vm2409 = vcmp.eq.s32.totalorder %v21, %v2367
  %vm2410 = vcmp.eq.s32.totalorder %v21, %v2371
  %vm2411 = vcmp.eq.s32.totalorder %v21, %v2375
  %vm2412 = vcmp.eq.s32.totalorder %v22, %v2363
  %vm2413 = vcmp.eq.s32.totalorder %v22, %v2367
  %vm2414 = vcmp.eq.s32.totalorder %v22, %v2371
  %vm2415 = vcmp.eq.s32.totalorder %v22, %v2375
  %vm2416 = vcmp.eq.s32.totalorder %v23, %v2363
  %vm2417 = vcmp.eq.s32.totalorder %v23, %v2367
  %vm2418 = vcmp.eq.s32.totalorder %v23, %v2371
  %vm2419 = vcmp.eq.s32.totalorder %v23, %v2375
  %vm2420 = vcmp.eq.s32.totalorder %v24, %v2363
  %vm2421 = vcmp.eq.s32.totalorder %v24, %v2367
  %vm2422 = vcmp.eq.s32.totalorder %v24, %v2371
  %vm2423 = vcmp.eq.s32.totalorder %v24, %v2375
  %vm2424 = vcmp.eq.s32.totalorder %v25, %v2363
  %vm2425 = vcmp.eq.s32.totalorder %v25, %v2367
  %vm2426 = vcmp.eq.s32.totalorder %v25, %v2371
  %vm2427 = vcmp.eq.s32.totalorder %v25, %v2375
  %vm2428 = vcmp.eq.s32.totalorder %v26, %v2363
  %vm2429 = vcmp.eq.s32.totalorder %v26, %v2367
  %vm2430 = vcmp.eq.s32.totalorder %v26, %v2371
  %vm2431 = vcmp.eq.s32.totalorder %v26, %v2375
  %vm2432 = vcmp.eq.s32.totalorder %v27, %v2363
  %vm2433 = vcmp.eq.s32.totalorder %v27, %v2367
  %vm2434 = vcmp.eq.s32.totalorder %v27, %v2371
  %vm2435 = vcmp.eq.s32.totalorder %v27, %v2375
  %vm2436 = vcmp.eq.s32.totalorder %v28, %v2363
  %vm2437 = vcmp.eq.s32.totalorder %v28, %v2367
  %vm2438 = vcmp.eq.s32.totalorder %v28, %v2371
  %vm2439 = vcmp.eq.s32.totalorder %v28, %v2375
  %vm2440 = vcmp.eq.s32.totalorder %v29, %v2363
  %vm2441 = vcmp.eq.s32.totalorder %v29, %v2367
  %vm2442 = vcmp.eq.s32.totalorder %v29, %v2371
  %vm2443 = vcmp.eq.s32.totalorder %v29, %v2375
  %vm2444 = vcmp.eq.s32.totalorder %v30, %v2363
  %vm2445 = vcmp.eq.s32.totalorder %v30, %v2367
  %vm2446 = vcmp.eq.s32.totalorder %v30, %v2371
  %vm2447 = vcmp.eq.s32.totalorder %v30, %v2375
  %vm2448 = vcmp.eq.s32.totalorder %v31, %v2363
  %vm2449 = vcmp.eq.s32.totalorder %v31, %v2367
  %vm2450 = vcmp.eq.s32.totalorder %v31, %v2371
  %vm2451 = vcmp.eq.s32.totalorder %v31, %v2375
  %vm2452 = vcmp.eq.s32.totalorder %v32, %v2363
  %vm2453 = vcmp.eq.s32.totalorder %v32, %v2367
  %vm2454 = vcmp.eq.s32.totalorder %v32, %v2371
  %vm2455 = vcmp.eq.s32.totalorder %v32, %v2375
  %vm2456 = vcmp.eq.s32.totalorder %v33, %v2363
  %vm2457 = vcmp.eq.s32.totalorder %v33, %v2367
  %vm2458 = vcmp.eq.s32.totalorder %v33, %v2371
  %vm2459 = vcmp.eq.s32.totalorder %v33, %v2375
  %vm2460 = vcmp.eq.s32.totalorder %v34, %v2363
  %vm2461 = vcmp.eq.s32.totalorder %v34, %v2367
  %vm2462 = vcmp.eq.s32.totalorder %v34, %v2371
  %vm2463 = vcmp.eq.s32.totalorder %v34, %v2375
  %vm2464 = vcmp.eq.s32.totalorder %v35, %v2363
  %vm2465 = vcmp.eq.s32.totalorder %v35, %v2367
  %vm2466 = vcmp.eq.s32.totalorder %v35, %v2371
  %vm2467 = vcmp.eq.s32.totalorder %v35, %v2375
  %vm2468 = vcmp.eq.s32.totalorder %v36, %v2363
  %vm2469 = vcmp.eq.s32.totalorder %v36, %v2367
  %vm2470 = vcmp.eq.s32.totalorder %v36, %v2371
  %vm2471 = vcmp.eq.s32.totalorder %v36, %v2375
  %vm2472 = vcmp.eq.s32.totalorder %v37, %v2363
  %vm2473 = vcmp.eq.s32.totalorder %v37, %v2367
  %vm2474 = vcmp.eq.s32.totalorder %v37, %v2371
  %vm2475 = vcmp.eq.s32.totalorder %v37, %v2375
  %vm2476 = vcmp.eq.s32.totalorder %v38, %v2363
  %vm2477 = vcmp.eq.s32.totalorder %v38, %v2367
  %vm2478 = vcmp.eq.s32.totalorder %v38, %v2371
  %vm2479 = vcmp.eq.s32.totalorder %v38, %v2375
  %vm2480 = vcmp.eq.s32.totalorder %v39, %v2363
  %vm2481 = vcmp.eq.s32.totalorder %v39, %v2367
  %vm2482 = vcmp.eq.s32.totalorder %v39, %v2371
  %vm2483 = vcmp.eq.s32.totalorder %v39, %v2375
  %vm2484 = vcmp.eq.s32.totalorder %v40, %v2363
  %vm2485 = vcmp.eq.s32.totalorder %v40, %v2367
  %vm2486 = vcmp.eq.s32.totalorder %v40, %v2371
  %vm2487 = vcmp.eq.s32.totalorder %v40, %v2375
  %vm2488 = vcmp.eq.s32.totalorder %v41, %v2363
  %vm2489 = vcmp.eq.s32.totalorder %v41, %v2367
  %vm2490 = vcmp.eq.s32.totalorder %v41, %v2371
  %vm2491 = vcmp.eq.s32.totalorder %v41, %v2375
  %vm2492 = vcmp.eq.s32.totalorder %v42, %v2363
  %vm2493 = vcmp.eq.s32.totalorder %v42, %v2367
  %vm2494 = vcmp.eq.s32.totalorder %v42, %v2371
  %vm2495 = vcmp.eq.s32.totalorder %v42, %v2375
  %vm2496 = vcmp.eq.s32.totalorder %v43, %v2363
  %vm2497 = vcmp.eq.s32.totalorder %v43, %v2367
  %vm2498 = vcmp.eq.s32.totalorder %v43, %v2371
  %vm2499 = vcmp.eq.s32.totalorder %v43, %v2375
  %vm2500 = vcmp.eq.s32.totalorder %v44, %v2363
  %vm2501 = vcmp.eq.s32.totalorder %v44, %v2367
  %vm2502 = vcmp.eq.s32.totalorder %v44, %v2371
  %vm2503 = vcmp.eq.s32.totalorder %v44, %v2375
  %v2504 = vsel %vm2376, 1, 0
  %v2505 = vsel %vm2377, 1, 0
  %v2506 = vsel %vm2378, 1, 0
  %v2507 = vsel %vm2379, 1, 0
  %v2508 = vsel %vm2380, 1, 0
  %v2509 = vsel %vm2381, 1, 0
  %v2510 = vsel %vm2382, 1, 0
  %v2511 = vsel %vm2383, 1, 0
  %v2512 = vsel %vm2384, 1, 0
  %v2513 = vsel %vm2385, 1, 0
  %v2514 = vsel %vm2386, 1, 0
  %v2515 = vsel %vm2387, 1, 0
  %v2516 = vsel %vm2388, 1, 0
  %v2517 = vsel %vm2389, 1, 0
  %v2518 = vsel %vm2390, 1, 0
  %v2519 = vsel %vm2391, 1, 0
  %v2520 = vsel %vm2392, 1, 0
  %v2521 = vsel %vm2393, 1, 0
  %v2522 = vsel %vm2394, 1, 0
  %v2523 = vsel %vm2395, 1, 0
  %v2524 = vsel %vm2396, 1, 0
  %v2525 = vsel %vm2397, 1, 0
  %v2526 = vsel %vm2398, 1, 0
  %v2527 = vsel %vm2399, 1, 0
  %v2528 = vsel %vm2400, 1, 0
  %v2529 = vsel %vm2401, 1, 0
  %v2530 = vsel %vm2402, 1, 0
  %v2531 = vsel %vm2403, 1, 0
  %v2532 = vsel %vm2404, 1, 0
  %v2533 = vsel %vm2405, 1, 0
  %v2534 = vsel %vm2406, 1, 0
  %v2535 = vsel %vm2407, 1, 0
  %v2536 = vsel %vm2408, 1, 0
  %v2537 = vsel %vm2409, 1, 0
  %v2538 = vsel %vm2410, 1, 0
  %v2539 = vsel %vm2411, 1, 0
  %v2540 = vsel %vm2412, 1, 0
  %v2541 = vsel %vm2413, 1, 0
  %v2542 = vsel %vm2414, 1, 0
  %v2543 = vsel %vm2415, 1, 0
  %v2544 = vsel %vm2416, 1, 0
  %v2545 = vsel %vm2417, 1, 0
  %v2546 = vsel %vm2418, 1, 0
  %v2547 = vsel %vm2419, 1, 0
  %v2548 = vsel %vm2420, 1, 0
  %v2549 = vsel %vm2421, 1, 0
  %v2550 = vsel %vm2422, 1, 0
  %v2551 = vsel %vm2423, 1, 0
  %v2552 = vsel %vm2424, 1, 0
  %v2553 = vsel %vm2425, 1, 0
  %v2554 = vsel %vm2426, 1, 0
  %v2555 = vsel %vm2427, 1, 0
  %v2556 = vsel %vm2428, 1, 0
  %v2557 = vsel %vm2429, 1, 0
  %v2558 = vsel %vm2430, 1, 0
  %v2559 = vsel %vm2431, 1, 0
  %v2560 = vsel %vm2432, 1, 0
  %v2561 = vsel %vm2433, 1, 0
  %v2562 = vsel %vm2434, 1, 0
  %v2563 = vsel %vm2435, 1, 0
  %v2564 = vsel %vm2436, 1, 0
  %v2565 = vsel %vm2437, 1, 0
  %v2566 = vsel %vm2438, 1, 0
  %v2567 = vsel %vm2439, 1, 0
  %v2568 = vsel %vm2440, 1, 0
  %v2569 = vsel %vm2441, 1, 0
  %v2570 = vsel %vm2442, 1, 0
  %v2571 = vsel %vm2443, 1, 0
  %v2572 = vsel %vm2444, 1, 0
  %v2573 = vsel %vm2445, 1, 0
  %v2574 = vsel %vm2446, 1, 0
  %v2575 = vsel %vm2447, 1, 0
  %v2576 = vsel %vm2448, 1, 0
  %v2577 = vsel %vm2449, 1, 0
  %v2578 = vsel %vm2450, 1, 0
  %v2579 = vsel %vm2451, 1, 0
  %v2580 = vsel %vm2452, 1, 0
  %v2581 = vsel %vm2453, 1, 0
  %v2582 = vsel %vm2454, 1, 0
  %v2583 = vsel %vm2455, 1, 0
  %v2584 = vsel %vm2456, 1, 0
  %v2585 = vsel %vm2457, 1, 0
  %v2586 = vsel %vm2458, 1, 0
  %v2587 = vsel %vm2459, 1, 0
  %v2588 = vsel %vm2460, 1, 0
  %v2589 = vsel %vm2461, 1, 0
  %v2590 = vsel %vm2462, 1, 0
  %v2591 = vsel %vm2463, 1, 0
  %v2592 = vsel %vm2464, 1, 0
  %v2593 = vsel %vm2465, 1, 0
  %v2594 = vsel %vm2466, 1, 0
  %v2595 = vsel %vm2467, 1, 0
  %v2596 = vsel %vm2468, 1, 0
  %v2597 = vsel %vm2469, 1, 0
  %v2598 = vsel %vm2470, 1, 0
  %v2599 = vsel %vm2471, 1, 0
  %v2600 = vsel %vm2472, 1, 0
  %v2601 = vsel %vm2473, 1, 0
  %v2602 = vsel %vm2474, 1, 0
  %v2603 = vsel %vm2475, 1, 0
  %v2604 = vsel %vm2476, 1, 0
  %v2605 = vsel %vm2477, 1, 0
  %v2606 = vsel %vm2478, 1, 0
  %v2607 = vsel %vm2479, 1, 0
  %v2608 = vsel %vm2480, 1, 0
  %v2609 = vsel %vm2481, 1, 0
  %v2610 = vsel %vm2482, 1, 0
  %v2611 = vsel %vm2483, 1, 0
  %v2612 = vsel %vm2484, 1, 0
  %v2613 = vsel %vm2485, 1, 0
  %v2614 = vsel %vm2486, 1, 0
  %v2615 = vsel %vm2487, 1, 0
  %v2616 = vsel %vm2488, 1, 0
  %v2617 = vsel %vm2489, 1, 0
  %v2618 = vsel %vm2490, 1, 0
  %v2619 = vsel %vm2491, 1, 0
  %v2620 = vsel %vm2492, 1, 0
  %v2621 = vsel %vm2493, 1, 0
  %v2622 = vsel %vm2494, 1, 0
  %v2623 = vsel %vm2495, 1, 0
  %v2624 = vsel %vm2496, 1, 0
  %v2625 = vsel %vm2497, 1, 0
  %v2626 = vsel %vm2498, 1, 0
  %v2627 = vsel %vm2499, 1, 0
  %v2628 = vsel %vm2500, 1, 0
  %v2629 = vsel %vm2501, 1, 0
  %v2630 = vsel %vm2502, 1, 0
  %v2631 = vsel %vm2503, 1, 0
  %v2632 = vcvt.s32.f32 %v2504
  %v2633 = vcvt.s32.f32 %v2505
  %v2634 = vcvt.s32.f32 %v2506
  %v2635 = vcvt.s32.f32 %v2507
  %v2636 = vcvt.s32.f32 %v2508
  %v2637 = vcvt.s32.f32 %v2509
  %v2638 = vcvt.s32.f32 %v2510
  %v2639 = vcvt.s32.f32 %v2511
  %v2640 = vcvt.s32.f32 %v2512
  %v2641 = vcvt.s32.f32 %v2513
  %v2642 = vcvt.s32.f32 %v2514
  %v2643 = vcvt.s32.f32 %v2515
  %v2644 = vcvt.s32.f32 %v2516
  %v2645 = vcvt.s32.f32 %v2517
  %v2646 = vcvt.s32.f32 %v2518
  %v2647 = vcvt.s32.f32 %v2519
  %v2648 = vcvt.s32.f32 %v2520
  %v2649 = vcvt.s32.f32 %v2521
  %v2650 = vcvt.s32.f32 %v2522
  %v2651 = vcvt.s32.f32 %v2523
  %v2652 = vcvt.s32.f32 %v2524
  %v2653 = vcvt.s32.f32 %v2525
  %v2654 = vcvt.s32.f32 %v2526
  %v2655 = vcvt.s32.f32 %v2527
  %v2656 = vcvt.s32.f32 %v2528
  %v2657 = vcvt.s32.f32 %v2529
  %v2658 = vcvt.s32.f32 %v2530
  %v2659 = vcvt.s32.f32 %v2531
  %v2660 = vcvt.s32.f32 %v2532
  %v2661 = vcvt.s32.f32 %v2533
  %v2662 = vcvt.s32.f32 %v2534
  %v2663 = vcvt.s32.f32 %v2535
  %v2664 = vcvt.s32.f32 %v2536
  %v2665 = vcvt.s32.f32 %v2537
  %v2666 = vcvt.s32.f32 %v2538
  %v2667 = vcvt.s32.f32 %v2539
  %v2668 = vcvt.s32.f32 %v2540
  %v2669 = vcvt.s32.f32 %v2541
  %v2670 = vcvt.s32.f32 %v2542
  %v2671 = vcvt.s32.f32 %v2543
  %v2672 = vcvt.s32.f32 %v2544
  %v2673 = vcvt.s32.f32 %v2545
  %v2674 = vcvt.s32.f32 %v2546
  %v2675 = vcvt.s32.f32 %v2547
  %v2676 = vcvt.s32.f32 %v2548
  %v2677 = vcvt.s32.f32 %v2549
  %v2678 = vcvt.s32.f32 %v2550
  %v2679 = vcvt.s32.f32 %v2551
  %v2680 = vcvt.s32.f32 %v2552
  %v2681 = vcvt.s32.f32 %v2553
  %v2682 = vcvt.s32.f32 %v2554
  %v2683 = vcvt.s32.f32 %v2555
  %v2684 = vcvt.s32.f32 %v2556
  %v2685 = vcvt.s32.f32 %v2557
  %v2686 = vcvt.s32.f32 %v2558
  %v2687 = vcvt.s32.f32 %v2559
  %v2688 = vcvt.s32.f32 %v2560
  %v2689 = vcvt.s32.f32 %v2561
  %v2690 = vcvt.s32.f32 %v2562
  %v2691 = vcvt.s32.f32 %v2563
  %v2692 = vcvt.s32.f32 %v2564
  %v2693 = vcvt.s32.f32 %v2565
  %v2694 = vcvt.s32.f32 %v2566
  %v2695 = vcvt.s32.f32 %v2567
  %v2696 = vcvt.s32.f32 %v2568
  %v2697 = vcvt.s32.f32 %v2569
  %v2698 = vcvt.s32.f32 %v2570
  %v2699 = vcvt.s32.f32 %v2571
  %v2700 = vcvt.s32.f32 %v2572
  %v2701 = vcvt.s32.f32 %v2573
  %v2702 = vcvt.s32.f32 %v2574
  %v2703 = vcvt.s32.f32 %v2575
  %v2704 = vcvt.s32.f32 %v2576
  %v2705 = vcvt.s32.f32 %v2577
  %v2706 = vcvt.s32.f32 %v2578
  %v2707 = vcvt.s32.f32 %v2579
  %v2708 = vcvt.s32.f32 %v2580
  %v2709 = vcvt.s32.f32 %v2581
  %v2710 = vcvt.s32.f32 %v2582
  %v2711 = vcvt.s32.f32 %v2583
  %v2712 = vcvt.s32.f32 %v2584
  %v2713 = vcvt.s32.f32 %v2585
  %v2714 = vcvt.s32.f32 %v2586
  %v2715 = vcvt.s32.f32 %v2587
  %v2716 = vcvt.s32.f32 %v2588
  %v2717 = vcvt.s32.f32 %v2589
  %v2718 = vcvt.s32.f32 %v2590
  %v2719 = vcvt.s32.f32 %v2591
  %v2720 = vcvt.s32.f32 %v2592
  %v2721 = vcvt.s32.f32 %v2593
  %v2722 = vcvt.s32.f32 %v2594
  %v2723 = vcvt.s32.f32 %v2595
  %v2724 = vcvt.s32.f32 %v2596
  %v2725 = vcvt.s32.f32 %v2597
  %v2726 = vcvt.s32.f32 %v2598
  %v2727 = vcvt.s32.f32 %v2599
  %v2728 = vcvt.s32.f32 %v2600
  %v2729 = vcvt.s32.f32 %v2601
  %v2730 = vcvt.s32.f32 %v2602
  %v2731 = vcvt.s32.f32 %v2603
  %v2732 = vcvt.s32.f32 %v2604
  %v2733 = vcvt.s32.f32 %v2605
  %v2734 = vcvt.s32.f32 %v2606
  %v2735 = vcvt.s32.f32 %v2607
  %v2736 = vcvt.s32.f32 %v2608
  %v2737 = vcvt.s32.f32 %v2609
  %v2738 = vcvt.s32.f32 %v2610
  %v2739 = vcvt.s32.f32 %v2611
  %v2740 = vcvt.s32.f32 %v2612
  %v2741 = vcvt.s32.f32 %v2613
  %v2742 = vcvt.s32.f32 %v2614
  %v2743 = vcvt.s32.f32 %v2615
  %v2744 = vcvt.s32.f32 %v2616
  %v2745 = vcvt.s32.f32 %v2617
  %v2746 = vcvt.s32.f32 %v2618
  %v2747 = vcvt.s32.f32 %v2619
  %v2748 = vcvt.s32.f32 %v2620
  %v2749 = vcvt.s32.f32 %v2621
  %v2750 = vcvt.s32.f32 %v2622
  %v2751 = vcvt.s32.f32 %v2623
  %v2752 = vcvt.s32.f32 %v2624
  %v2753 = vcvt.s32.f32 %v2625
  %v2754 = vcvt.s32.f32 %v2626
  %v2755 = vcvt.s32.f32 %v2627
  %v2756 = vcvt.s32.f32 %v2628
  %v2757 = vcvt.s32.f32 %v2629
  %v2758 = vcvt.s32.f32 %v2630
  %v2759 = vcvt.s32.f32 %v2631
  %v2760 = vpack.c.bf16 %v2636, %v2632
  %v2761 = vpack.c.bf16 %v2637, %v2633
  %v2762 = vpack.c.bf16 %v2638, %v2634
  %v2763 = vpack.c.bf16 %v2639, %v2635
  %v2764 = vpack.c.bf16 %v2644, %v2640
  %v2765 = vpack.c.bf16 %v2645, %v2641
  %v2766 = vpack.c.bf16 %v2646, %v2642
  %v2767 = vpack.c.bf16 %v2647, %v2643
  %v2768 = vpack.c.bf16 %v2652, %v2648
  %v2769 = vpack.c.bf16 %v2653, %v2649
  %v2770 = vpack.c.bf16 %v2654, %v2650
  %v2771 = vpack.c.bf16 %v2655, %v2651
  %v2772 = vpack.c.bf16 %v2660, %v2656
  %v2773 = vpack.c.bf16 %v2661, %v2657
  %v2774 = vpack.c.bf16 %v2662, %v2658
  %v2775 = vpack.c.bf16 %v2663, %v2659
  %v2776 = vpack.c.bf16 %v2668, %v2664
  %v2777 = vpack.c.bf16 %v2669, %v2665
  %v2778 = vpack.c.bf16 %v2670, %v2666
  %v2779 = vpack.c.bf16 %v2671, %v2667
  %v2780 = vpack.c.bf16 %v2676, %v2672
  %v2781 = vpack.c.bf16 %v2677, %v2673
  %v2782 = vpack.c.bf16 %v2678, %v2674
  %v2783 = vpack.c.bf16 %v2679, %v2675
  %v2784 = vpack.c.bf16 %v2684, %v2680
  %v2785 = vpack.c.bf16 %v2685, %v2681
  %v2786 = vpack.c.bf16 %v2686, %v2682
  %v2787 = vpack.c.bf16 %v2687, %v2683
  %v2788 = vpack.c.bf16 %v2692, %v2688
  %v2789 = vpack.c.bf16 %v2693, %v2689
  %v2790 = vpack.c.bf16 %v2694, %v2690
  %v2791 = vpack.c.bf16 %v2695, %v2691
  %v2792 = vpack.c.bf16 %v2700, %v2696
  %v2793 = vpack.c.bf16 %v2701, %v2697
  %v2794 = vpack.c.bf16 %v2702, %v2698
  %v2795 = vpack.c.bf16 %v2703, %v2699
  %v2796 = vpack.c.bf16 %v2708, %v2704
  %v2797 = vpack.c.bf16 %v2709, %v2705
  %v2798 = vpack.c.bf16 %v2710, %v2706
  %v2799 = vpack.c.bf16 %v2711, %v2707
  %v2800 = vpack.c.bf16 %v2716, %v2712
  %v2801 = vpack.c.bf16 %v2717, %v2713
  %v2802 = vpack.c.bf16 %v2718, %v2714
  %v2803 = vpack.c.bf16 %v2719, %v2715
  %v2804 = vpack.c.bf16 %v2724, %v2720
  %v2805 = vpack.c.bf16 %v2725, %v2721
  %v2806 = vpack.c.bf16 %v2726, %v2722
  %v2807 = vpack.c.bf16 %v2727, %v2723
  %v2808 = vpack.c.bf16 %v2732, %v2728
  %v2809 = vpack.c.bf16 %v2733, %v2729
  %v2810 = vpack.c.bf16 %v2734, %v2730
  %v2811 = vpack.c.bf16 %v2735, %v2731
  %v2812 = vpack.c.bf16 %v2740, %v2736
  %v2813 = vpack.c.bf16 %v2741, %v2737
  %v2814 = vpack.c.bf16 %v2742, %v2738
  %v2815 = vpack.c.bf16 %v2743, %v2739
  %v2816 = vpack.c.bf16 %v2748, %v2744
  %v2817 = vpack.c.bf16 %v2749, %v2745
  %v2818 = vpack.c.bf16 %v2750, %v2746
  %v2819 = vpack.c.bf16 %v2751, %v2747
  %v2820 = vpack.c.bf16 %v2756, %v2752
  %v2821 = vpack.c.bf16 %v2757, %v2753
  %v2822 = vpack.c.bf16 %v2758, %v2754
  %v2823 = vpack.c.bf16 %v2759, %v2755
  %2824 = vmatprep.subr.bf16.mxu0 %v2761
  %2825 = vmatpush1.bf16.msra.mxu0 %v2760
  %2826 = vmatprep.subr.bf16.mxu0 %v2765
  %2827 = vmatpush1.bf16.msra.mxu0 %v2764
  %2828 = vmatprep.subr.bf16.mxu0 %v2769
  %2829 = vmatpush1.bf16.msra.mxu0 %v2768
  %2830 = vmatprep.subr.bf16.mxu0 %v2773
  %2831 = vmatpush1.bf16.msra.mxu0 %v2772
  %2832 = vmatprep.subr.bf16.mxu0 %v2777
  %2833 = vmatpush1.bf16.msra.mxu0 %v2776
  %2834 = vmatprep.subr.bf16.mxu0 %v2781
  %2835 = vmatpush1.bf16.msra.mxu0 %v2780
  %2836 = vmatprep.subr.bf16.mxu0 %v2785
  %2837 = vmatpush1.bf16.msra.mxu0 %v2784
  %2838 = vmatprep.subr.bf16.mxu0 %v2789
  %2839 = vmatpush1.bf16.msra.mxu0 %v2788
  %2840 = vmatprep.subr.bf16.mxu0 %v2793
  %2841 = vmatpush1.bf16.msra.mxu0 %v2792
  %2842 = vmatprep.subr.bf16.mxu0 %v2797
  %2843 = vmatpush1.bf16.msra.mxu0 %v2796
  %2844 = vmatprep.subr.bf16.mxu0 %v2801
  %2845 = vmatpush1.bf16.msra.mxu0 %v2800
  %2846 = vmatprep.subr.bf16.mxu0 %v2805
  %2847 = vmatpush1.bf16.msra.mxu0 %v2804
  %2848 = vmatprep.subr.bf16.mxu0 %v2809
  %2849 = vmatpush1.bf16.msra.mxu0 %v2808
  %2850 = vmatprep.subr.bf16.mxu0 %v2813
  %2851 = vmatpush1.bf16.msra.mxu0 %v2812
  %2852 = vmatprep.subr.bf16.mxu0 %v2817
  %2853 = vmatpush1.bf16.msra.mxu0 %v2816
  %2854 = vmatprep.subr.bf16.mxu0 %v2821
  %2855 = vmatpush1.bf16.msra.mxu0 %v2820
  %2856 = vmatprep.mubr.bf16.mxu0 %v518
  %2857 = vmatmul.mubr.bf16.gmra.mrb[0].mxu0 %v517
  %v2858 = vpop.f32.mrb[0].mxu0
  %v2859 = vadd.f32 0.0, %v2858
  %v2860 = vpop.f32.mrb[0].mxu0
  %v2861 = vadd.f32 0.0, %v2860
  %v2862 = vpop.f32.mrb[0].mxu0
  %v2863 = vpop.f32.mrb[0].mxu0
  %2864 = vdwg.mxu0
  %2865 = vmatprep.subr.bf16.mxu0 %v2763
  %2866 = vmatpush1.bf16.msra.mxu0 %v2762
  %2867 = vmatprep.subr.bf16.mxu0 %v2767
  %2868 = vmatpush1.bf16.msra.mxu0 %v2766
  %2869 = vmatprep.subr.bf16.mxu0 %v2771
  %2870 = vmatpush1.bf16.msra.mxu0 %v2770
  %2871 = vmatprep.subr.bf16.mxu0 %v2775
  %2872 = vmatpush1.bf16.msra.mxu0 %v2774
  %2873 = vmatprep.subr.bf16.mxu0 %v2779
  %2874 = vmatpush1.bf16.msra.mxu0 %v2778
  %2875 = vmatprep.subr.bf16.mxu0 %v2783
  %2876 = vmatpush1.bf16.msra.mxu0 %v2782
  %2877 = vmatprep.subr.bf16.mxu0 %v2787
  %2878 = vmatpush1.bf16.msra.mxu0 %v2786
  %2879 = vmatprep.subr.bf16.mxu0 %v2791
  %2880 = vmatpush1.bf16.msra.mxu0 %v2790
  %2881 = vmatprep.subr.bf16.mxu0 %v2795
  %2882 = vmatpush1.bf16.msra.mxu0 %v2794
  %2883 = vmatprep.subr.bf16.mxu0 %v2799
  %2884 = vmatpush1.bf16.msra.mxu0 %v2798
  %2885 = vmatprep.subr.bf16.mxu0 %v2803
  %2886 = vmatpush1.bf16.msra.mxu0 %v2802
  %2887 = vmatprep.subr.bf16.mxu0 %v2807
  %2888 = vmatpush1.bf16.msra.mxu0 %v2806
  %2889 = vmatprep.subr.bf16.mxu0 %v2811
  %2890 = vmatpush1.bf16.msra.mxu0 %v2810
  %2891 = vmatprep.subr.bf16.mxu0 %v2815
  %2892 = vmatpush1.bf16.msra.mxu0 %v2814
  %2893 = vmatprep.subr.bf16.mxu0 %v2819
  %2894 = vmatpush1.bf16.msra.mxu0 %v2818
  %2895 = vmatprep.subr.bf16.mxu0 %v2823
  %2896 = vmatpush1.bf16.msra.mxu0 %v2822
  %2897 = vmatprep.mubr.bf16.mxu0 %v518
  %2898 = vmatmul.mubr.bf16.gmra.mrb[0].mxu0 %v517
  %v2899 = vpop.f32.mrb[0].mxu0
  %v2900 = vadd.f32 0.0, %v2899
  %v2901 = vpop.f32.mrb[0].mxu0
  %v2902 = vadd.f32 0.0, %v2901
  %v2903 = vpop.f32.mrb[0].mxu0
  %v2904 = vpop.f32.mrb[0].mxu0
  %2905 = vdwg.mxu0
  %v2906 = vpack.c.bf16 %v2859, %v2859
  %v2907 = vpack.c.bf16 %v2861, %v2861
  %v2908 = vpack.c.bf16 %v2900, %v2900
  %v2909 = vpack.c.bf16 %v2902, %v2902
  %v2914 = vcombine.low %v2906, %v2907
  %v2915 = vcombine.low %v2908, %v2909
  %v2917 = vunpack.c.l.s4 1983009808
  %v2918 = vunpack.c.0.s8 %v2917
  %v2919 = vlaneseq
  %v2920 = vshrl.u32 %v2919, 7
  %v2921 = vsub.s32 %v2918, %v2920
  %v2922 = vrot.slane %v2914, %v2921
  %v2924 = vunpack.c.l.s4 1983009808
  %v2925 = vunpack.c.0.s8 %v2924
  %v2926 = vlaneseq
  %v2927 = vshrl.u32 %v2926, 7
  %v2928 = vsub.s32 %v2925, %v2927
  %v2929 = vrot.slane %v2915, %v2928
  %v2930 = vcombine.low %v2922, %v2929
  %s2932 = scalar_lea.vmem %s2, 32
  %2933 = vst [vmem:[%s2932] sm:$0xff] %v2930
  %s2934 = scalar_lea.vmem %s0, 20
  %v2935 = vld [vmem:[%s2934] sm:$0xf]
  %v2936 = vlaneseq
  %v2937 = vshrl.u32 %v2936, 7
  %v2938 = vsub.s32 0, %v2937
  %v2939 = vrot.slane %v2935, %v2938
  %v2940 = vlaneseq
  %v2941 = vshrl.u32 %v2940, 7
  %v2942 = vsub.s32 1, %v2941
  %v2943 = vrot.slane %v2935, %v2942
  %v2944 = vlaneseq
  %v2945 = vshrl.u32 %v2944, 7
  %v2946 = vsub.s32 2, %v2945
  %v2947 = vrot.slane %v2935, %v2946
  %v2948 = vlaneseq
  %v2949 = vshrl.u32 %v2948, 7
  %v2950 = vsub.s32 3, %v2949
  %v2951 = vrot.slane %v2935, %v2950
  %vm2952 = vcmp.eq.s32.totalorder %v13, %v2939
  %vm2953 = vcmp.eq.s32.totalorder %v13, %v2943
  %vm2954 = vcmp.eq.s32.totalorder %v13, %v2947
  %vm2955 = vcmp.eq.s32.totalorder %v13, %v2951
  %vm2956 = vcmp.eq.s32.totalorder %v14, %v2939
  %vm2957 = vcmp.eq.s32.totalorder %v14, %v2943
  %vm2958 = vcmp.eq.s32.totalorder %v14, %v2947
  %vm2959 = vcmp.eq.s32.totalorder %v14, %v2951
  %vm2960 = vcmp.eq.s32.totalorder %v15, %v2939
  %vm2961 = vcmp.eq.s32.totalorder %v15, %v2943
  %vm2962 = vcmp.eq.s32.totalorder %v15, %v2947
  %vm2963 = vcmp.eq.s32.totalorder %v15, %v2951
  %vm2964 = vcmp.eq.s32.totalorder %v16, %v2939
  %vm2965 = vcmp.eq.s32.totalorder %v16, %v2943
  %vm2966 = vcmp.eq.s32.totalorder %v16, %v2947
  %vm2967 = vcmp.eq.s32.totalorder %v16, %v2951
  %vm2968 = vcmp.eq.s32.totalorder %v17, %v2939
  %vm2969 = vcmp.eq.s32.totalorder %v17, %v2943
  %vm2970 = vcmp.eq.s32.totalorder %v17, %v2947
  %vm2971 = vcmp.eq.s32.totalorder %v17, %v2951
  %vm2972 = vcmp.eq.s32.totalorder %v18, %v2939
  %vm2973 = vcmp.eq.s32.totalorder %v18, %v2943
  %vm2974 = vcmp.eq.s32.totalorder %v18, %v2947
  %vm2975 = vcmp.eq.s32.totalorder %v18, %v2951
  %vm2976 = vcmp.eq.s32.totalorder %v19, %v2939
  %vm2977 = vcmp.eq.s32.totalorder %v19, %v2943
  %vm2978 = vcmp.eq.s32.totalorder %v19, %v2947
  %vm2979 = vcmp.eq.s32.totalorder %v19, %v2951
  %vm2980 = vcmp.eq.s32.totalorder %v20, %v2939
  %vm2981 = vcmp.eq.s32.totalorder %v20, %v2943
  %vm2982 = vcmp.eq.s32.totalorder %v20, %v2947
  %vm2983 = vcmp.eq.s32.totalorder %v20, %v2951
  %vm2984 = vcmp.eq.s32.totalorder %v21, %v2939
  %vm2985 = vcmp.eq.s32.totalorder %v21, %v2943
  %vm2986 = vcmp.eq.s32.totalorder %v21, %v2947
  %vm2987 = vcmp.eq.s32.totalorder %v21, %v2951
  %vm2988 = vcmp.eq.s32.totalorder %v22, %v2939
  %vm2989 = vcmp.eq.s32.totalorder %v22, %v2943
  %vm2990 = vcmp.eq.s32.totalorder %v22, %v2947
  %vm2991 = vcmp.eq.s32.totalorder %v22, %v2951
  %vm2992 = vcmp.eq.s32.totalorder %v23, %v2939
  %vm2993 = vcmp.eq.s32.totalorder %v23, %v2943
  %vm2994 = vcmp.eq.s32.totalorder %v23, %v2947
  %vm2995 = vcmp.eq.s32.totalorder %v23, %v2951
  %vm2996 = vcmp.eq.s32.totalorder %v24, %v2939
  %vm2997 = vcmp.eq.s32.totalorder %v24, %v2943
  %vm2998 = vcmp.eq.s32.totalorder %v24, %v2947
  %vm2999 = vcmp.eq.s32.totalorder %v24, %v2951
  %vm3000 = vcmp.eq.s32.totalorder %v25, %v2939
  %vm3001 = vcmp.eq.s32.totalorder %v25, %v2943
  %vm3002 = vcmp.eq.s32.totalorder %v25, %v2947
  %vm3003 = vcmp.eq.s32.totalorder %v25, %v2951
  %vm3004 = vcmp.eq.s32.totalorder %v26, %v2939
  %vm3005 = vcmp.eq.s32.totalorder %v26, %v2943
  %vm3006 = vcmp.eq.s32.totalorder %v26, %v2947
  %vm3007 = vcmp.eq.s32.totalorder %v26, %v2951
  %vm3008 = vcmp.eq.s32.totalorder %v27, %v2939
  %vm3009 = vcmp.eq.s32.totalorder %v27, %v2943
  %vm3010 = vcmp.eq.s32.totalorder %v27, %v2947
  %vm3011 = vcmp.eq.s32.totalorder %v27, %v2951
  %vm3012 = vcmp.eq.s32.totalorder %v28, %v2939
  %vm3013 = vcmp.eq.s32.totalorder %v28, %v2943
  %vm3014 = vcmp.eq.s32.totalorder %v28, %v2947
  %vm3015 = vcmp.eq.s32.totalorder %v28, %v2951
  %vm3016 = vcmp.eq.s32.totalorder %v29, %v2939
  %vm3017 = vcmp.eq.s32.totalorder %v29, %v2943
  %vm3018 = vcmp.eq.s32.totalorder %v29, %v2947
  %vm3019 = vcmp.eq.s32.totalorder %v29, %v2951
  %vm3020 = vcmp.eq.s32.totalorder %v30, %v2939
  %vm3021 = vcmp.eq.s32.totalorder %v30, %v2943
  %vm3022 = vcmp.eq.s32.totalorder %v30, %v2947
  %vm3023 = vcmp.eq.s32.totalorder %v30, %v2951
  %vm3024 = vcmp.eq.s32.totalorder %v31, %v2939
  %vm3025 = vcmp.eq.s32.totalorder %v31, %v2943
  %vm3026 = vcmp.eq.s32.totalorder %v31, %v2947
  %vm3027 = vcmp.eq.s32.totalorder %v31, %v2951
  %vm3028 = vcmp.eq.s32.totalorder %v32, %v2939
  %vm3029 = vcmp.eq.s32.totalorder %v32, %v2943
  %vm3030 = vcmp.eq.s32.totalorder %v32, %v2947
  %vm3031 = vcmp.eq.s32.totalorder %v32, %v2951
  %vm3032 = vcmp.eq.s32.totalorder %v33, %v2939
  %vm3033 = vcmp.eq.s32.totalorder %v33, %v2943
  %vm3034 = vcmp.eq.s32.totalorder %v33, %v2947
  %vm3035 = vcmp.eq.s32.totalorder %v33, %v2951
  %vm3036 = vcmp.eq.s32.totalorder %v34, %v2939
  %vm3037 = vcmp.eq.s32.totalorder %v34, %v2943
  %vm3038 = vcmp.eq.s32.totalorder %v34, %v2947
  %vm3039 = vcmp.eq.s32.totalorder %v34, %v2951
  %vm3040 = vcmp.eq.s32.totalorder %v35, %v2939
  %vm3041 = vcmp.eq.s32.totalorder %v35, %v2943
  %vm3042 = vcmp.eq.s32.totalorder %v35, %v2947
  %vm3043 = vcmp.eq.s32.totalorder %v35, %v2951
  %vm3044 = vcmp.eq.s32.totalorder %v36, %v2939
  %vm3045 = vcmp.eq.s32.totalorder %v36, %v2943
  %vm3046 = vcmp.eq.s32.totalorder %v36, %v2947
  %vm3047 = vcmp.eq.s32.totalorder %v36, %v2951
  %vm3048 = vcmp.eq.s32.totalorder %v37, %v2939
  %vm3049 = vcmp.eq.s32.totalorder %v37, %v2943
  %vm3050 = vcmp.eq.s32.totalorder %v37, %v2947
  %vm3051 = vcmp.eq.s32.totalorder %v37, %v2951
  %vm3052 = vcmp.eq.s32.totalorder %v38, %v2939
  %vm3053 = vcmp.eq.s32.totalorder %v38, %v2943
  %vm3054 = vcmp.eq.s32.totalorder %v38, %v2947
  %vm3055 = vcmp.eq.s32.totalorder %v38, %v2951
  %vm3056 = vcmp.eq.s32.totalorder %v39, %v2939
  %vm3057 = vcmp.eq.s32.totalorder %v39, %v2943
  %vm3058 = vcmp.eq.s32.totalorder %v39, %v2947
  %vm3059 = vcmp.eq.s32.totalorder %v39, %v2951
  %vm3060 = vcmp.eq.s32.totalorder %v40, %v2939
  %vm3061 = vcmp.eq.s32.totalorder %v40, %v2943
  %vm3062 = vcmp.eq.s32.totalorder %v40, %v2947
  %vm3063 = vcmp.eq.s32.totalorder %v40, %v2951
  %vm3064 = vcmp.eq.s32.totalorder %v41, %v2939
  %vm3065 = vcmp.eq.s32.totalorder %v41, %v2943
  %vm3066 = vcmp.eq.s32.totalorder %v41, %v2947
  %vm3067 = vcmp.eq.s32.totalorder %v41, %v2951
  %vm3068 = vcmp.eq.s32.totalorder %v42, %v2939
  %vm3069 = vcmp.eq.s32.totalorder %v42, %v2943
  %vm3070 = vcmp.eq.s32.totalorder %v42, %v2947
  %vm3071 = vcmp.eq.s32.totalorder %v42, %v2951
  %vm3072 = vcmp.eq.s32.totalorder %v43, %v2939
  %vm3073 = vcmp.eq.s32.totalorder %v43, %v2943
  %vm3074 = vcmp.eq.s32.totalorder %v43, %v2947
  %vm3075 = vcmp.eq.s32.totalorder %v43, %v2951
  %vm3076 = vcmp.eq.s32.totalorder %v44, %v2939
  %vm3077 = vcmp.eq.s32.totalorder %v44, %v2943
  %vm3078 = vcmp.eq.s32.totalorder %v44, %v2947
  %vm3079 = vcmp.eq.s32.totalorder %v44, %v2951
  %v3080 = vsel %vm2952, 1, 0
  %v3081 = vsel %vm2953, 1, 0
  %v3082 = vsel %vm2954, 1, 0
  %v3083 = vsel %vm2955, 1, 0
  %v3084 = vsel %vm2956, 1, 0
  %v3085 = vsel %vm2957, 1, 0
  %v3086 = vsel %vm2958, 1, 0
  %v3087 = vsel %vm2959, 1, 0
  %v3088 = vsel %vm2960, 1, 0
  %v3089 = vsel %vm2961, 1, 0
  %v3090 = vsel %vm2962, 1, 0
  %v3091 = vsel %vm2963, 1, 0
  %v3092 = vsel %vm2964, 1, 0
  %v3093 = vsel %vm2965, 1, 0
  %v3094 = vsel %vm2966, 1, 0
  %v3095 = vsel %vm2967, 1, 0
  %v3096 = vsel %vm2968, 1, 0
  %v3097 = vsel %vm2969, 1, 0
  %v3098 = vsel %vm2970, 1, 0
  %v3099 = vsel %vm2971, 1, 0
  %v3100 = vsel %vm2972, 1, 0
  %v3101 = vsel %vm2973, 1, 0
  %v3102 = vsel %vm2974, 1, 0
  %v3103 = vsel %vm2975, 1, 0
  %v3104 = vsel %vm2976, 1, 0
  %v3105 = vsel %vm2977, 1, 0
  %v3106 = vsel %vm2978, 1, 0
  %v3107 = vsel %vm2979, 1, 0
  %v3108 = vsel %vm2980, 1, 0
  %v3109 = vsel %vm2981, 1, 0
  %v3110 = vsel %vm2982, 1, 0
  %v3111 = vsel %vm2983, 1, 0
  %v3112 = vsel %vm2984, 1, 0
  %v3113 = vsel %vm2985, 1, 0
  %v3114 = vsel %vm2986, 1, 0
  %v3115 = vsel %vm2987, 1, 0
  %v3116 = vsel %vm2988, 1, 0
  %v3117 = vsel %vm2989, 1, 0
  %v3118 = vsel %vm2990, 1, 0
  %v3119 = vsel %vm2991, 1, 0
  %v3120 = vsel %vm2992, 1, 0
  %v3121 = vsel %vm2993, 1, 0
  %v3122 = vsel %vm2994, 1, 0
  %v3123 = vsel %vm2995, 1, 0
  %v3124 = vsel %vm2996, 1, 0
  %v3125 = vsel %vm2997, 1, 0
  %v3126 = vsel %vm2998, 1, 0
  %v3127 = vsel %vm2999, 1, 0
  %v3128 = vsel %vm3000, 1, 0
  %v3129 = vsel %vm3001, 1, 0
  %v3130 = vsel %vm3002, 1, 0
  %v3131 = vsel %vm3003, 1, 0
  %v3132 = vsel %vm3004, 1, 0
  %v3133 = vsel %vm3005, 1, 0
  %v3134 = vsel %vm3006, 1, 0
  %v3135 = vsel %vm3007, 1, 0
  %v3136 = vsel %vm3008, 1, 0
  %v3137 = vsel %vm3009, 1, 0
  %v3138 = vsel %vm3010, 1, 0
  %v3139 = vsel %vm3011, 1, 0
  %v3140 = vsel %vm3012, 1, 0
  %v3141 = vsel %vm3013, 1, 0
  %v3142 = vsel %vm3014, 1, 0
  %v3143 = vsel %vm3015, 1, 0
  %v3144 = vsel %vm3016, 1, 0
  %v3145 = vsel %vm3017, 1, 0
  %v3146 = vsel %vm3018, 1, 0
  %v3147 = vsel %vm3019, 1, 0
  %v3148 = vsel %vm3020, 1, 0
  %v3149 = vsel %vm3021, 1, 0
  %v3150 = vsel %vm3022, 1, 0
  %v3151 = vsel %vm3023, 1, 0
  %v3152 = vsel %vm3024, 1, 0
  %v3153 = vsel %vm3025, 1, 0
  %v3154 = vsel %vm3026, 1, 0
  %v3155 = vsel %vm3027, 1, 0
  %v3156 = vsel %vm3028, 1, 0
  %v3157 = vsel %vm3029, 1, 0
  %v3158 = vsel %vm3030, 1, 0
  %v3159 = vsel %vm3031, 1, 0
  %v3160 = vsel %vm3032, 1, 0
  %v3161 = vsel %vm3033, 1, 0
  %v3162 = vsel %vm3034, 1, 0
  %v3163 = vsel %vm3035, 1, 0
  %v3164 = vsel %vm3036, 1, 0
  %v3165 = vsel %vm3037, 1, 0
  %v3166 = vsel %vm3038, 1, 0
  %v3167 = vsel %vm3039, 1, 0
  %v3168 = vsel %vm3040, 1, 0
  %v3169 = vsel %vm3041, 1, 0
  %v3170 = vsel %vm3042, 1, 0
  %v3171 = vsel %vm3043, 1, 0
  %v3172 = vsel %vm3044, 1, 0
  %v3173 = vsel %vm3045, 1, 0
  %v3174 = vsel %vm3046, 1, 0
  %v3175 = vsel %vm3047, 1, 0
  %v3176 = vsel %vm3048, 1, 0
  %v3177 = vsel %vm3049, 1, 0
  %v3178 = vsel %vm3050, 1, 0
  %v3179 = vsel %vm3051, 1, 0
  %v3180 = vsel %vm3052, 1, 0
  %v3181 = vsel %vm3053, 1, 0
  %v3182 = vsel %vm3054, 1, 0
  %v3183 = vsel %vm3055, 1, 0
  %v3184 = vsel %vm3056, 1, 0
  %v3185 = vsel %vm3057, 1, 0
  %v3186 = vsel %vm3058, 1, 0
  %v3187 = vsel %vm3059, 1, 0
  %v3188 = vsel %vm3060, 1, 0
  %v3189 = vsel %vm3061, 1, 0
  %v3190 = vsel %vm3062, 1, 0
  %v3191 = vsel %vm3063, 1, 0
  %v3192 = vsel %vm3064, 1, 0
  %v3193 = vsel %vm3065, 1, 0
  %v3194 = vsel %vm3066, 1, 0
  %v3195 = vsel %vm3067, 1, 0
  %v3196 = vsel %vm3068, 1, 0
  %v3197 = vsel %vm3069, 1, 0
  %v3198 = vsel %vm3070, 1, 0
  %v3199 = vsel %vm3071, 1, 0
  %v3200 = vsel %vm3072, 1, 0
  %v3201 = vsel %vm3073, 1, 0
  %v3202 = vsel %vm3074, 1, 0
  %v3203 = vsel %vm3075, 1, 0
  %v3204 = vsel %vm3076, 1, 0
  %v3205 = vsel %vm3077, 1, 0
  %v3206 = vsel %vm3078, 1, 0
  %v3207 = vsel %vm3079, 1, 0
  %v3208 = vcvt.s32.f32 %v3080
  %v3209 = vcvt.s32.f32 %v3081
  %v3210 = vcvt.s32.f32 %v3082
  %v3211 = vcvt.s32.f32 %v3083
  %v3212 = vcvt.s32.f32 %v3084
  %v3213 = vcvt.s32.f32 %v3085
  %v3214 = vcvt.s32.f32 %v3086
  %v3215 = vcvt.s32.f32 %v3087
  %v3216 = vcvt.s32.f32 %v3088
  %v3217 = vcvt.s32.f32 %v3089
  %v3218 = vcvt.s32.f32 %v3090
  %v3219 = vcvt.s32.f32 %v3091
  %v3220 = vcvt.s32.f32 %v3092
  %v3221 = vcvt.s32.f32 %v3093
  %v3222 = vcvt.s32.f32 %v3094
  %v3223 = vcvt.s32.f32 %v3095
  %v3224 = vcvt.s32.f32 %v3096
  %v3225 = vcvt.s32.f32 %v3097
  %v3226 = vcvt.s32.f32 %v3098
  %v3227 = vcvt.s32.f32 %v3099
  %v3228 = vcvt.s32.f32 %v3100
  %v3229 = vcvt.s32.f32 %v3101
  %v3230 = vcvt.s32.f32 %v3102
  %v3231 = vcvt.s32.f32 %v3103
  %v3232 = vcvt.s32.f32 %v3104
  %v3233 = vcvt.s32.f32 %v3105
  %v3234 = vcvt.s32.f32 %v3106
  %v3235 = vcvt.s32.f32 %v3107
  %v3236 = vcvt.s32.f32 %v3108
  %v3237 = vcvt.s32.f32 %v3109
  %v3238 = vcvt.s32.f32 %v3110
  %v3239 = vcvt.s32.f32 %v3111
  %v3240 = vcvt.s32.f32 %v3112
  %v3241 = vcvt.s32.f32 %v3113
  %v3242 = vcvt.s32.f32 %v3114
  %v3243 = vcvt.s32.f32 %v3115
  %v3244 = vcvt.s32.f32 %v3116
  %v3245 = vcvt.s32.f32 %v3117
  %v3246 = vcvt.s32.f32 %v3118
  %v3247 = vcvt.s32.f32 %v3119
  %v3248 = vcvt.s32.f32 %v3120
  %v3249 = vcvt.s32.f32 %v3121
  %v3250 = vcvt.s32.f32 %v3122
  %v3251 = vcvt.s32.f32 %v3123
  %v3252 = vcvt.s32.f32 %v3124
  %v3253 = vcvt.s32.f32 %v3125
  %v3254 = vcvt.s32.f32 %v3126
  %v3255 = vcvt.s32.f32 %v3127
  %v3256 = vcvt.s32.f32 %v3128
  %v3257 = vcvt.s32.f32 %v3129
  %v3258 = vcvt.s32.f32 %v3130
  %v3259 = vcvt.s32.f32 %v3131
  %v3260 = vcvt.s32.f32 %v3132
  %v3261 = vcvt.s32.f32 %v3133
  %v3262 = vcvt.s32.f32 %v3134
  %v3263 = vcvt.s32.f32 %v3135
  %v3264 = vcvt.s32.f32 %v3136
  %v3265 = vcvt.s32.f32 %v3137
  %v3266 = vcvt.s32.f32 %v3138
  %v3267 = vcvt.s32.f32 %v3139
  %v3268 = vcvt.s32.f32 %v3140
  %v3269 = vcvt.s32.f32 %v3141
  %v3270 = vcvt.s32.f32 %v3142
  %v3271 = vcvt.s32.f32 %v3143
  %v3272 = vcvt.s32.f32 %v3144
  %v3273 = vcvt.s32.f32 %v3145
  %v3274 = vcvt.s32.f32 %v3146
  %v3275 = vcvt.s32.f32 %v3147
  %v3276 = vcvt.s32.f32 %v3148
  %v3277 = vcvt.s32.f32 %v3149
  %v3278 = vcvt.s32.f32 %v3150
  %v3279 = vcvt.s32.f32 %v3151
  %v3280 = vcvt.s32.f32 %v3152
  %v3281 = vcvt.s32.f32 %v3153
  %v3282 = vcvt.s32.f32 %v3154
  %v3283 = vcvt.s32.f32 %v3155
  %v3284 = vcvt.s32.f32 %v3156
  %v3285 = vcvt.s32.f32 %v3157
  %v3286 = vcvt.s32.f32 %v3158
  %v3287 = vcvt.s32.f32 %v3159
  %v3288 = vcvt.s32.f32 %v3160
  %v3289 = vcvt.s32.f32 %v3161
  %v3290 = vcvt.s32.f32 %v3162
  %v3291 = vcvt.s32.f32 %v3163
  %v3292 = vcvt.s32.f32 %v3164
  %v3293 = vcvt.s32.f32 %v3165
  %v3294 = vcvt.s32.f32 %v3166
  %v3295 = vcvt.s32.f32 %v3167
  %v3296 = vcvt.s32.f32 %v3168
  %v3297 = vcvt.s32.f32 %v3169
  %v3298 = vcvt.s32.f32 %v3170
  %v3299 = vcvt.s32.f32 %v3171
  %v3300 = vcvt.s32.f32 %v3172
  %v3301 = vcvt.s32.f32 %v3173
  %v3302 = vcvt.s32.f32 %v3174
  %v3303 = vcvt.s32.f32 %v3175
  %v3304 = vcvt.s32.f32 %v3176
  %v3305 = vcvt.s32.f32 %v3177
  %v3306 = vcvt.s32.f32 %v3178
  %v3307 = vcvt.s32.f32 %v3179
  %v3308 = vcvt.s32.f32 %v3180
  %v3309 = vcvt.s32.f32 %v3181
  %v3310 = vcvt.s32.f32 %v3182
  %v3311 = vcvt.s32.f32 %v3183
  %v3312 = vcvt.s32.f32 %v3184
  %v3313 = vcvt.s32.f32 %v3185
  %v3314 = vcvt.s32.f32 %v3186
  %v3315 = vcvt.s32.f32 %v3187
  %v3316 = vcvt.s32.f32 %v3188
  %v3317 = vcvt.s32.f32 %v3189
  %v3318 = vcvt.s32.f32 %v3190
  %v3319 = vcvt.s32.f32 %v3191
  %v3320 = vcvt.s32.f32 %v3192
  %v3321 = vcvt.s32.f32 %v3193
  %v3322 = vcvt.s32.f32 %v3194
  %v3323 = vcvt.s32.f32 %v3195
  %v3324 = vcvt.s32.f32 %v3196
  %v3325 = vcvt.s32.f32 %v3197
  %v3326 = vcvt.s32.f32 %v3198
  %v3327 = vcvt.s32.f32 %v3199
  %v3328 = vcvt.s32.f32 %v3200
  %v3329 = vcvt.s32.f32 %v3201
  %v3330 = vcvt.s32.f32 %v3202
  %v3331 = vcvt.s32.f32 %v3203
  %v3332 = vcvt.s32.f32 %v3204
  %v3333 = vcvt.s32.f32 %v3205
  %v3334 = vcvt.s32.f32 %v3206
  %v3335 = vcvt.s32.f32 %v3207
  %v3336 = vpack.c.bf16 %v3212, %v3208
  %v3337 = vpack.c.bf16 %v3213, %v3209
  %v3338 = vpack.c.bf16 %v3214, %v3210
  %v3339 = vpack.c.bf16 %v3215, %v3211
  %v3340 = vpack.c.bf16 %v3220, %v3216
  %v3341 = vpack.c.bf16 %v3221, %v3217
  %v3342 = vpack.c.bf16 %v3222, %v3218
  %v3343 = vpack.c.bf16 %v3223, %v3219
  %v3344 = vpack.c.bf16 %v3228, %v3224
  %v3345 = vpack.c.bf16 %v3229, %v3225
  %v3346 = vpack.c.bf16 %v3230, %v3226
  %v3347 = vpack.c.bf16 %v3231, %v3227
  %v3348 = vpack.c.bf16 %v3236, %v3232
  %v3349 = vpack.c.bf16 %v3237, %v3233
  %v3350 = vpack.c.bf16 %v3238, %v3234
  %v3351 = vpack.c.bf16 %v3239, %v3235
  %v3352 = vpack.c.bf16 %v3244, %v3240
  %v3353 = vpack.c.bf16 %v3245, %v3241
  %v3354 = vpack.c.bf16 %v3246, %v3242
  %v3355 = vpack.c.bf16 %v3247, %v3243
  %v3356 = vpack.c.bf16 %v3252, %v3248
  %v3357 = vpack.c.bf16 %v3253, %v3249
  %v3358 = vpack.c.bf16 %v3254, %v3250
  %v3359 = vpack.c.bf16 %v3255, %v3251
  %v3360 = vpack.c.bf16 %v3260, %v3256
  %v3361 = vpack.c.bf16 %v3261, %v3257
  %v3362 = vpack.c.bf16 %v3262, %v3258
  %v3363 = vpack.c.bf16 %v3263, %v3259
  %v3364 = vpack.c.bf16 %v3268, %v3264
  %v3365 = vpack.c.bf16 %v3269, %v3265
  %v3366 = vpack.c.bf16 %v3270, %v3266
  %v3367 = vpack.c.bf16 %v3271, %v3267
  %v3368 = vpack.c.bf16 %v3276, %v3272
  %v3369 = vpack.c.bf16 %v3277, %v3273
  %v3370 = vpack.c.bf16 %v3278, %v3274
  %v3371 = vpack.c.bf16 %v3279, %v3275
  %v3372 = vpack.c.bf16 %v3284, %v3280
  %v3373 = vpack.c.bf16 %v3285, %v3281
  %v3374 = vpack.c.bf16 %v3286, %v3282
  %v3375 = vpack.c.bf16 %v3287, %v3283
  %v3376 = vpack.c.bf16 %v3292, %v3288
  %v3377 = vpack.c.bf16 %v3293, %v3289
  %v3378 = vpack.c.bf16 %v3294, %v3290
  %v3379 = vpack.c.bf16 %v3295, %v3291
  %v3380 = vpack.c.bf16 %v3300, %v3296
  %v3381 = vpack.c.bf16 %v3301, %v3297
  %v3382 = vpack.c.bf16 %v3302, %v3298
  %v3383 = vpack.c.bf16 %v3303, %v3299
  %v3384 = vpack.c.bf16 %v3308, %v3304
  %v3385 = vpack.c.bf16 %v3309, %v3305
  %v3386 = vpack.c.bf16 %v3310, %v3306
  %v3387 = vpack.c.bf16 %v3311, %v3307
  %v3388 = vpack.c.bf16 %v3316, %v3312
  %v3389 = vpack.c.bf16 %v3317, %v3313
  %v3390 = vpack.c.bf16 %v3318, %v3314
  %v3391 = vpack.c.bf16 %v3319, %v3315
  %v3392 = vpack.c.bf16 %v3324, %v3320
  %v3393 = vpack.c.bf16 %v3325, %v3321
  %v3394 = vpack.c.bf16 %v3326, %v3322
  %v3395 = vpack.c.bf16 %v3327, %v3323
  %v3396 = vpack.c.bf16 %v3332, %v3328
  %v3397 = vpack.c.bf16 %v3333, %v3329
  %v3398 = vpack.c.bf16 %v3334, %v3330
  %v3399 = vpack.c.bf16 %v3335, %v3331
  %3400 = vmatprep.subr.bf16.mxu0 %v3337
  %3401 = vmatpush1.bf16.msra.mxu0 %v3336
  %3402 = vmatprep.subr.bf16.mxu0 %v3341
  %3403 = vmatpush1.bf16.msra.mxu0 %v3340
  %3404 = vmatprep.subr.bf16.mxu0 %v3345
  %3405 = vmatpush1.bf16.msra.mxu0 %v3344
  %3406 = vmatprep.subr.bf16.mxu0 %v3349
  %3407 = vmatpush1.bf16.msra.mxu0 %v3348
  %3408 = vmatprep.subr.bf16.mxu0 %v3353
  %3409 = vmatpush1.bf16.msra.mxu0 %v3352
  %3410 = vmatprep.subr.bf16.mxu0 %v3357
  %3411 = vmatpush1.bf16.msra.mxu0 %v3356
  %3412 = vmatprep.subr.bf16.mxu0 %v3361
  %3413 = vmatpush1.bf16.msra.mxu0 %v3360
  %3414 = vmatprep.subr.bf16.mxu0 %v3365
  %3415 = vmatpush1.bf16.msra.mxu0 %v3364
  %3416 = vmatprep.subr.bf16.mxu0 %v3369
  %3417 = vmatpush1.bf16.msra.mxu0 %v3368
  %3418 = vmatprep.subr.bf16.mxu0 %v3373
  %3419 = vmatpush1.bf16.msra.mxu0 %v3372
  %3420 = vmatprep.subr.bf16.mxu0 %v3377
  %3421 = vmatpush1.bf16.msra.mxu0 %v3376
  %3422 = vmatprep.subr.bf16.mxu0 %v3381
  %3423 = vmatpush1.bf16.msra.mxu0 %v3380
  %3424 = vmatprep.subr.bf16.mxu0 %v3385
  %3425 = vmatpush1.bf16.msra.mxu0 %v3384
  %3426 = vmatprep.subr.bf16.mxu0 %v3389
  %3427 = vmatpush1.bf16.msra.mxu0 %v3388
  %3428 = vmatprep.subr.bf16.mxu0 %v3393
  %3429 = vmatpush1.bf16.msra.mxu0 %v3392
  %3430 = vmatprep.subr.bf16.mxu0 %v3397
  %3431 = vmatpush1.bf16.msra.mxu0 %v3396
  %3432 = vmatprep.mubr.bf16.mxu0 %v518
  %3433 = vmatmul.mubr.bf16.gmra.mrb[0].mxu0 %v517
  %v3434 = vpop.f32.mrb[0].mxu0
  %v3435 = vadd.f32 0.0, %v3434
  %v3436 = vpop.f32.mrb[0].mxu0
  %v3437 = vadd.f32 0.0, %v3436
  %v3438 = vpop.f32.mrb[0].mxu0
  %v3439 = vpop.f32.mrb[0].mxu0
  %3440 = vdwg.mxu0
  %3441 = vmatprep.subr.bf16.mxu0 %v3339
  %3442 = vmatpush1.bf16.msra.mxu0 %v3338
  %3443 = vmatprep.subr.bf16.mxu0 %v3343
  %3444 = vmatpush1.bf16.msra.mxu0 %v3342
  %3445 = vmatprep.subr.bf16.mxu0 %v3347
  %3446 = vmatpush1.bf16.msra.mxu0 %v3346
  %3447 = vmatprep.subr.bf16.mxu0 %v3351
  %3448 = vmatpush1.bf16.msra.mxu0 %v3350
  %3449 = vmatprep.subr.bf16.mxu0 %v3355
  %3450 = vmatpush1.bf16.msra.mxu0 %v3354
  %3451 = vmatprep.subr.bf16.mxu0 %v3359
  %3452 = vmatpush1.bf16.msra.mxu0 %v3358
  %3453 = vmatprep.subr.bf16.mxu0 %v3363
  %3454 = vmatpush1.bf16.msra.mxu0 %v3362
  %3455 = vmatprep.subr.bf16.mxu0 %v3367
  %3456 = vmatpush1.bf16.msra.mxu0 %v3366
  %3457 = vmatprep.subr.bf16.mxu0 %v3371
  %3458 = vmatpush1.bf16.msra.mxu0 %v3370
  %3459 = vmatprep.subr.bf16.mxu0 %v3375
  %3460 = vmatpush1.bf16.msra.mxu0 %v3374
  %3461 = vmatprep.subr.bf16.mxu0 %v3379
  %3462 = vmatpush1.bf16.msra.mxu0 %v3378
  %3463 = vmatprep.subr.bf16.mxu0 %v3383
  %3464 = vmatpush1.bf16.msra.mxu0 %v3382
  %3465 = vmatprep.subr.bf16.mxu0 %v3387
  %3466 = vmatpush1.bf16.msra.mxu0 %v3386
  %3467 = vmatprep.subr.bf16.mxu0 %v3391
  %3468 = vmatpush1.bf16.msra.mxu0 %v3390
  %3469 = vmatprep.subr.bf16.mxu0 %v3395
  %3470 = vmatpush1.bf16.msra.mxu0 %v3394
  %3471 = vmatprep.subr.bf16.mxu0 %v3399
  %3472 = vmatpush1.bf16.msra.mxu0 %v3398
  %3473 = vmatprep.mubr.bf16.mxu0 %v518
  %3474 = vmatmul.mubr.bf16.gmra.mrb[0].mxu0 %v517
  %v3475 = vpop.f32.mrb[0].mxu0
  %v3476 = vadd.f32 0.0, %v3475
  %v3477 = vpop.f32.mrb[0].mxu0
  %v3478 = vadd.f32 0.0, %v3477
  %v3479 = vpop.f32.mrb[0].mxu0
  %v3480 = vpop.f32.mrb[0].mxu0
  %3481 = vdwg.mxu0
  %v3482 = vpack.c.bf16 %v3435, %v3435
  %v3483 = vpack.c.bf16 %v3437, %v3437
  %v3484 = vpack.c.bf16 %v3476, %v3476
  %v3485 = vpack.c.bf16 %v3478, %v3478
  %v3490 = vcombine.low %v3482, %v3483
  %v3491 = vcombine.low %v3484, %v3485
  %v3493 = vunpack.c.l.s4 1983009808
  %v3494 = vunpack.c.0.s8 %v3493
  %v3495 = vlaneseq
  %v3496 = vshrl.u32 %v3495, 7
  %v3497 = vsub.s32 %v3494, %v3496
  %v3498 = vrot.slane %v3490, %v3497
  %v3500 = vunpack.c.l.s4 1983009808
  %v3501 = vunpack.c.0.s8 %v3500
  %v3502 = vlaneseq
  %v3503 = vshrl.u32 %v3502, 7
  %v3504 = vsub.s32 %v3501, %v3503
  %v3505 = vrot.slane %v3491, %v3504
  %v3506 = vcombine.low %v3498, %v3505
  %s3508 = scalar_lea.vmem %s2, 40
  %3509 = vst [vmem:[%s3508] sm:$0xff] %v3506
  %s3510 = scalar_lea.vmem %s0, 24
  %v3511 = vld [vmem:[%s3510] sm:$0xf]
  %v3512 = vlaneseq
  %v3513 = vshrl.u32 %v3512, 7
  %v3514 = vsub.s32 0, %v3513
  %v3515 = vrot.slane %v3511, %v3514
  %v3516 = vlaneseq
  %v3517 = vshrl.u32 %v3516, 7
  %v3518 = vsub.s32 1, %v3517
  %v3519 = vrot.slane %v3511, %v3518
  %v3520 = vlaneseq
  %v3521 = vshrl.u32 %v3520, 7
  %v3522 = vsub.s32 2, %v3521
  %v3523 = vrot.slane %v3511, %v3522
  %v3524 = vlaneseq
  %v3525 = vshrl.u32 %v3524, 7
  %v3526 = vsub.s32 3, %v3525
  %v3527 = vrot.slane %v3511, %v3526
  %vm3528 = vcmp.eq.s32.totalorder %v13, %v3515
  %vm3529 = vcmp.eq.s32.totalorder %v13, %v3519
  %vm3530 = vcmp.eq.s32.totalorder %v13, %v3523
  %vm3531 = vcmp.eq.s32.totalorder %v13, %v3527
  %vm3532 = vcmp.eq.s32.totalorder %v14, %v3515
  %vm3533 = vcmp.eq.s32.totalorder %v14, %v3519
  %vm3534 = vcmp.eq.s32.totalorder %v14, %v3523
  %vm3535 = vcmp.eq.s32.totalorder %v14, %v3527
  %vm3536 = vcmp.eq.s32.totalorder %v15, %v3515
  %vm3537 = vcmp.eq.s32.totalorder %v15, %v3519
  %vm3538 = vcmp.eq.s32.totalorder %v15, %v3523
  %vm3539 = vcmp.eq.s32.totalorder %v15, %v3527
  %vm3540 = vcmp.eq.s32.totalorder %v16, %v3515
  %vm3541 = vcmp.eq.s32.totalorder %v16, %v3519
  %vm3542 = vcmp.eq.s32.totalorder %v16, %v3523
  %vm3543 = vcmp.eq.s32.totalorder %v16, %v3527
  %vm3544 = vcmp.eq.s32.totalorder %v17, %v3515
  %vm3545 = vcmp.eq.s32.totalorder %v17, %v3519
  %vm3546 = vcmp.eq.s32.totalorder %v17, %v3523
  %vm3547 = vcmp.eq.s32.totalorder %v17, %v3527
  %vm3548 = vcmp.eq.s32.totalorder %v18, %v3515
  %vm3549 = vcmp.eq.s32.totalorder %v18, %v3519
  %vm3550 = vcmp.eq.s32.totalorder %v18, %v3523
  %vm3551 = vcmp.eq.s32.totalorder %v18, %v3527
  %vm3552 = vcmp.eq.s32.totalorder %v19, %v3515
  %vm3553 = vcmp.eq.s32.totalorder %v19, %v3519
  %vm3554 = vcmp.eq.s32.totalorder %v19, %v3523
  %vm3555 = vcmp.eq.s32.totalorder %v19, %v3527
  %vm3556 = vcmp.eq.s32.totalorder %v20, %v3515
  %vm3557 = vcmp.eq.s32.totalorder %v20, %v3519
  %vm3558 = vcmp.eq.s32.totalorder %v20, %v3523
  %vm3559 = vcmp.eq.s32.totalorder %v20, %v3527
  %vm3560 = vcmp.eq.s32.totalorder %v21, %v3515
  %vm3561 = vcmp.eq.s32.totalorder %v21, %v3519
  %vm3562 = vcmp.eq.s32.totalorder %v21, %v3523
  %vm3563 = vcmp.eq.s32.totalorder %v21, %v3527
  %vm3564 = vcmp.eq.s32.totalorder %v22, %v3515
  %vm3565 = vcmp.eq.s32.totalorder %v22, %v3519
  %vm3566 = vcmp.eq.s32.totalorder %v22, %v3523
  %vm3567 = vcmp.eq.s32.totalorder %v22, %v3527
  %vm3568 = vcmp.eq.s32.totalorder %v23, %v3515
  %vm3569 = vcmp.eq.s32.totalorder %v23, %v3519
  %vm3570 = vcmp.eq.s32.totalorder %v23, %v3523
  %vm3571 = vcmp.eq.s32.totalorder %v23, %v3527
  %vm3572 = vcmp.eq.s32.totalorder %v24, %v3515
  %vm3573 = vcmp.eq.s32.totalorder %v24, %v3519
  %vm3574 = vcmp.eq.s32.totalorder %v24, %v3523
  %vm3575 = vcmp.eq.s32.totalorder %v24, %v3527
  %vm3576 = vcmp.eq.s32.totalorder %v25, %v3515
  %vm3577 = vcmp.eq.s32.totalorder %v25, %v3519
  %vm3578 = vcmp.eq.s32.totalorder %v25, %v3523
  %vm3579 = vcmp.eq.s32.totalorder %v25, %v3527
  %vm3580 = vcmp.eq.s32.totalorder %v26, %v3515
  %vm3581 = vcmp.eq.s32.totalorder %v26, %v3519
  %vm3582 = vcmp.eq.s32.totalorder %v26, %v3523
  %vm3583 = vcmp.eq.s32.totalorder %v26, %v3527
  %vm3584 = vcmp.eq.s32.totalorder %v27, %v3515
  %vm3585 = vcmp.eq.s32.totalorder %v27, %v3519
  %vm3586 = vcmp.eq.s32.totalorder %v27, %v3523
  %vm3587 = vcmp.eq.s32.totalorder %v27, %v3527
  %vm3588 = vcmp.eq.s32.totalorder %v28, %v3515
  %vm3589 = vcmp.eq.s32.totalorder %v28, %v3519
  %vm3590 = vcmp.eq.s32.totalorder %v28, %v3523
  %vm3591 = vcmp.eq.s32.totalorder %v28, %v3527
  %vm3592 = vcmp.eq.s32.totalorder %v29, %v3515
  %vm3593 = vcmp.eq.s32.totalorder %v29, %v3519
  %vm3594 = vcmp.eq.s32.totalorder %v29, %v3523
  %vm3595 = vcmp.eq.s32.totalorder %v29, %v3527
  %vm3596 = vcmp.eq.s32.totalorder %v30, %v3515
  %vm3597 = vcmp.eq.s32.totalorder %v30, %v3519
  %vm3598 = vcmp.eq.s32.totalorder %v30, %v3523
  %vm3599 = vcmp.eq.s32.totalorder %v30, %v3527
  %vm3600 = vcmp.eq.s32.totalorder %v31, %v3515
  %vm3601 = vcmp.eq.s32.totalorder %v31, %v3519
  %vm3602 = vcmp.eq.s32.totalorder %v31, %v3523
  %vm3603 = vcmp.eq.s32.totalorder %v31, %v3527
  %vm3604 = vcmp.eq.s32.totalorder %v32, %v3515
  %vm3605 = vcmp.eq.s32.totalorder %v32, %v3519
  %vm3606 = vcmp.eq.s32.totalorder %v32, %v3523
  %vm3607 = vcmp.eq.s32.totalorder %v32, %v3527
  %vm3608 = vcmp.eq.s32.totalorder %v33, %v3515
  %vm3609 = vcmp.eq.s32.totalorder %v33, %v3519
  %vm3610 = vcmp.eq.s32.totalorder %v33, %v3523
  %vm3611 = vcmp.eq.s32.totalorder %v33, %v3527
  %vm3612 = vcmp.eq.s32.totalorder %v34, %v3515
  %vm3613 = vcmp.eq.s32.totalorder %v34, %v3519
  %vm3614 = vcmp.eq.s32.totalorder %v34, %v3523
  %vm3615 = vcmp.eq.s32.totalorder %v34, %v3527
  %vm3616 = vcmp.eq.s32.totalorder %v35, %v3515
  %vm3617 = vcmp.eq.s32.totalorder %v35, %v3519
  %vm3618 = vcmp.eq.s32.totalorder %v35, %v3523
  %vm3619 = vcmp.eq.s32.totalorder %v35, %v3527
  %vm3620 = vcmp.eq.s32.totalorder %v36, %v3515
  %vm3621 = vcmp.eq.s32.totalorder %v36, %v3519
  %vm3622 = vcmp.eq.s32.totalorder %v36, %v3523
  %vm3623 = vcmp.eq.s32.totalorder %v36, %v3527
  %vm3624 = vcmp.eq.s32.totalorder %v37, %v3515
  %vm3625 = vcmp.eq.s32.totalorder %v37, %v3519
  %vm3626 = vcmp.eq.s32.totalorder %v37, %v3523
  %vm3627 = vcmp.eq.s32.totalorder %v37, %v3527
  %vm3628 = vcmp.eq.s32.totalorder %v38, %v3515
  %vm3629 = vcmp.eq.s32.totalorder %v38, %v3519
  %vm3630 = vcmp.eq.s32.totalorder %v38, %v3523
  %vm3631 = vcmp.eq.s32.totalorder %v38, %v3527
  %vm3632 = vcmp.eq.s32.totalorder %v39, %v3515
  %vm3633 = vcmp.eq.s32.totalorder %v39, %v3519
  %vm3634 = vcmp.eq.s32.totalorder %v39, %v3523
  %vm3635 = vcmp.eq.s32.totalorder %v39, %v3527
  %vm3636 = vcmp.eq.s32.totalorder %v40, %v3515
  %vm3637 = vcmp.eq.s32.totalorder %v40, %v3519
  %vm3638 = vcmp.eq.s32.totalorder %v40, %v3523
  %vm3639 = vcmp.eq.s32.totalorder %v40, %v3527
  %vm3640 = vcmp.eq.s32.totalorder %v41, %v3515
  %vm3641 = vcmp.eq.s32.totalorder %v41, %v3519
  %vm3642 = vcmp.eq.s32.totalorder %v41, %v3523
  %vm3643 = vcmp.eq.s32.totalorder %v41, %v3527
  %vm3644 = vcmp.eq.s32.totalorder %v42, %v3515
  %vm3645 = vcmp.eq.s32.totalorder %v42, %v3519
  %vm3646 = vcmp.eq.s32.totalorder %v42, %v3523
  %vm3647 = vcmp.eq.s32.totalorder %v42, %v3527
  %vm3648 = vcmp.eq.s32.totalorder %v43, %v3515
  %vm3649 = vcmp.eq.s32.totalorder %v43, %v3519
  %vm3650 = vcmp.eq.s32.totalorder %v43, %v3523
  %vm3651 = vcmp.eq.s32.totalorder %v43, %v3527
  %vm3652 = vcmp.eq.s32.totalorder %v44, %v3515
  %vm3653 = vcmp.eq.s32.totalorder %v44, %v3519
  %vm3654 = vcmp.eq.s32.totalorder %v44, %v3523
  %vm3655 = vcmp.eq.s32.totalorder %v44, %v3527
  %v3656 = vsel %vm3528, 1, 0
  %v3657 = vsel %vm3529, 1, 0
  %v3658 = vsel %vm3530, 1, 0
  %v3659 = vsel %vm3531, 1, 0
  %v3660 = vsel %vm3532, 1, 0
  %v3661 = vsel %vm3533, 1, 0
  %v3662 = vsel %vm3534, 1, 0
  %v3663 = vsel %vm3535, 1, 0
  %v3664 = vsel %vm3536, 1, 0
  %v3665 = vsel %vm3537, 1, 0
  %v3666 = vsel %vm3538, 1, 0
  %v3667 = vsel %vm3539, 1, 0
  %v3668 = vsel %vm3540, 1, 0
  %v3669 = vsel %vm3541, 1, 0
  %v3670 = vsel %vm3542, 1, 0
  %v3671 = vsel %vm3543, 1, 0
  %v3672 = vsel %vm3544, 1, 0
  %v3673 = vsel %vm3545, 1, 0
  %v3674 = vsel %vm3546, 1, 0
  %v3675 = vsel %vm3547, 1, 0
  %v3676 = vsel %vm3548, 1, 0
  %v3677 = vsel %vm3549, 1, 0
  %v3678 = vsel %vm3550, 1, 0
  %v3679 = vsel %vm3551, 1, 0
  %v3680 = vsel %vm3552, 1, 0
  %v3681 = vsel %vm3553, 1, 0
  %v3682 = vsel %vm3554, 1, 0
  %v3683 = vsel %vm3555, 1, 0
  %v3684 = vsel %vm3556, 1, 0
  %v3685 = vsel %vm3557, 1, 0
  %v3686 = vsel %vm3558, 1, 0
  %v3687 = vsel %vm3559, 1, 0
  %v3688 = vsel %vm3560, 1, 0
  %v3689 = vsel %vm3561, 1, 0
  %v3690 = vsel %vm3562, 1, 0
  %v3691 = vsel %vm3563, 1, 0
  %v3692 = vsel %vm3564, 1, 0
  %v3693 = vsel %vm3565, 1, 0
  %v3694 = vsel %vm3566, 1, 0
  %v3695 = vsel %vm3567, 1, 0
  %v3696 = vsel %vm3568, 1, 0
  %v3697 = vsel %vm3569, 1, 0
  %v3698 = vsel %vm3570, 1, 0
  %v3699 = vsel %vm3571, 1, 0
  %v3700 = vsel %vm3572, 1, 0
  %v3701 = vsel %vm3573, 1, 0
  %v3702 = vsel %vm3574, 1, 0
  %v3703 = vsel %vm3575, 1, 0
  %v3704 = vsel %vm3576, 1, 0
  %v3705 = vsel %vm3577, 1, 0
  %v3706 = vsel %vm3578, 1, 0
  %v3707 = vsel %vm3579, 1, 0
  %v3708 = vsel %vm3580, 1, 0
  %v3709 = vsel %vm3581, 1, 0
  %v3710 = vsel %vm3582, 1, 0
  %v3711 = vsel %vm3583, 1, 0
  %v3712 = vsel %vm3584, 1, 0
  %v3713 = vsel %vm3585, 1, 0
  %v3714 = vsel %vm3586, 1, 0
  %v3715 = vsel %vm3587, 1, 0
  %v3716 = vsel %vm3588, 1, 0
  %v3717 = vsel %vm3589, 1, 0
  %v3718 = vsel %vm3590, 1, 0
  %v3719 = vsel %vm3591, 1, 0
  %v3720 = vsel %vm3592, 1, 0
  %v3721 = vsel %vm3593, 1, 0
  %v3722 = vsel %vm3594, 1, 0
  %v3723 = vsel %vm3595, 1, 0
  %v3724 = vsel %vm3596, 1, 0
  %v3725 = vsel %vm3597, 1, 0
  %v3726 = vsel %vm3598, 1, 0
  %v3727 = vsel %vm3599, 1, 0
  %v3728 = vsel %vm3600, 1, 0
  %v3729 = vsel %vm3601, 1, 0
  %v3730 = vsel %vm3602, 1, 0
  %v3731 = vsel %vm3603, 1, 0
  %v3732 = vsel %vm3604, 1, 0
  %v3733 = vsel %vm3605, 1, 0
  %v3734 = vsel %vm3606, 1, 0
  %v3735 = vsel %vm3607, 1, 0
  %v3736 = vsel %vm3608, 1, 0
  %v3737 = vsel %vm3609, 1, 0
  %v3738 = vsel %vm3610, 1, 0
  %v3739 = vsel %vm3611, 1, 0
  %v3740 = vsel %vm3612, 1, 0
  %v3741 = vsel %vm3613, 1, 0
  %v3742 = vsel %vm3614, 1, 0
  %v3743 = vsel %vm3615, 1, 0
  %v3744 = vsel %vm3616, 1, 0
  %v3745 = vsel %vm3617, 1, 0
  %v3746 = vsel %vm3618, 1, 0
  %v3747 = vsel %vm3619, 1, 0
  %v3748 = vsel %vm3620, 1, 0
  %v3749 = vsel %vm3621, 1, 0
  %v3750 = vsel %vm3622, 1, 0
  %v3751 = vsel %vm3623, 1, 0
  %v3752 = vsel %vm3624, 1, 0
  %v3753 = vsel %vm3625, 1, 0
  %v3754 = vsel %vm3626, 1, 0
  %v3755 = vsel %vm3627, 1, 0
  %v3756 = vsel %vm3628, 1, 0
  %v3757 = vsel %vm3629, 1, 0
  %v3758 = vsel %vm3630, 1, 0
  %v3759 = vsel %vm3631, 1, 0
  %v3760 = vsel %vm3632, 1, 0
  %v3761 = vsel %vm3633, 1, 0
  %v3762 = vsel %vm3634, 1, 0
  %v3763 = vsel %vm3635, 1, 0
  %v3764 = vsel %vm3636, 1, 0
  %v3765 = vsel %vm3637, 1, 0
  %v3766 = vsel %vm3638, 1, 0
  %v3767 = vsel %vm3639, 1, 0
  %v3768 = vsel %vm3640, 1, 0
  %v3769 = vsel %vm3641, 1, 0
  %v3770 = vsel %vm3642, 1, 0
  %v3771 = vsel %vm3643, 1, 0
  %v3772 = vsel %vm3644, 1, 0
  %v3773 = vsel %vm3645, 1, 0
  %v3774 = vsel %vm3646, 1, 0
  %v3775 = vsel %vm3647, 1, 0
  %v3776 = vsel %vm3648, 1, 0
  %v3777 = vsel %vm3649, 1, 0
  %v3778 = vsel %vm3650, 1, 0
  %v3779 = vsel %vm3651, 1, 0
  %v3780 = vsel %vm3652, 1, 0
  %v3781 = vsel %vm3653, 1, 0
  %v3782 = vsel %vm3654, 1, 0
  %v3783 = vsel %vm3655, 1, 0
  %v3784 = vcvt.s32.f32 %v3656
  %v3785 = vcvt.s32.f32 %v3657
  %v3786 = vcvt.s32.f32 %v3658
  %v3787 = vcvt.s32.f32 %v3659
  %v3788 = vcvt.s32.f32 %v3660
  %v3789 = vcvt.s32.f32 %v3661
  %v3790 = vcvt.s32.f32 %v3662
  %v3791 = vcvt.s32.f32 %v3663
  %v3792 = vcvt.s32.f32 %v3664
  %v3793 = vcvt.s32.f32 %v3665
  %v3794 = vcvt.s32.f32 %v3666
  %v3795 = vcvt.s32.f32 %v3667
  %v3796 = vcvt.s32.f32 %v3668
  %v3797 = vcvt.s32.f32 %v3669
  %v3798 = vcvt.s32.f32 %v3670
  %v3799 = vcvt.s32.f32 %v3671
  %v3800 = vcvt.s32.f32 %v3672
  %v3801 = vcvt.s32.f32 %v3673
  %v3802 = vcvt.s32.f32 %v3674
  %v3803 = vcvt.s32.f32 %v3675
  %v3804 = vcvt.s32.f32 %v3676
  %v3805 = vcvt.s32.f32 %v3677
  %v3806 = vcvt.s32.f32 %v3678
  %v3807 = vcvt.s32.f32 %v3679
  %v3808 = vcvt.s32.f32 %v3680
  %v3809 = vcvt.s32.f32 %v3681
  %v3810 = vcvt.s32.f32 %v3682
  %v3811 = vcvt.s32.f32 %v3683
  %v3812 = vcvt.s32.f32 %v3684
  %v3813 = vcvt.s32.f32 %v3685
  %v3814 = vcvt.s32.f32 %v3686
  %v3815 = vcvt.s32.f32 %v3687
  %v3816 = vcvt.s32.f32 %v3688
  %v3817 = vcvt.s32.f32 %v3689
  %v3818 = vcvt.s32.f32 %v3690
  %v3819 = vcvt.s32.f32 %v3691
  %v3820 = vcvt.s32.f32 %v3692
  %v3821 = vcvt.s32.f32 %v3693
  %v3822 = vcvt.s32.f32 %v3694
  %v3823 = vcvt.s32.f32 %v3695
  %v3824 = vcvt.s32.f32 %v3696
  %v3825 = vcvt.s32.f32 %v3697
  %v3826 = vcvt.s32.f32 %v3698
  %v3827 = vcvt.s32.f32 %v3699
  %v3828 = vcvt.s32.f32 %v3700
  %v3829 = vcvt.s32.f32 %v3701
  %v3830 = vcvt.s32.f32 %v3702
  %v3831 = vcvt.s32.f32 %v3703
  %v3832 = vcvt.s32.f32 %v3704
  %v3833 = vcvt.s32.f32 %v3705
  %v3834 = vcvt.s32.f32 %v3706
  %v3835 = vcvt.s32.f32 %v3707
  %v3836 = vcvt.s32.f32 %v3708
  %v3837 = vcvt.s32.f32 %v3709
  %v3838 = vcvt.s32.f32 %v3710
  %v3839 = vcvt.s32.f32 %v3711
  %v3840 = vcvt.s32.f32 %v3712
  %v3841 = vcvt.s32.f32 %v3713
  %v3842 = vcvt.s32.f32 %v3714
  %v3843 = vcvt.s32.f32 %v3715
  %v3844 = vcvt.s32.f32 %v3716
  %v3845 = vcvt.s32.f32 %v3717
  %v3846 = vcvt.s32.f32 %v3718
  %v3847 = vcvt.s32.f32 %v3719
  %v3848 = vcvt.s32.f32 %v3720
  %v3849 = vcvt.s32.f32 %v3721
  %v3850 = vcvt.s32.f32 %v3722
  %v3851 = vcvt.s32.f32 %v3723
  %v3852 = vcvt.s32.f32 %v3724
  %v3853 = vcvt.s32.f32 %v3725
  %v3854 = vcvt.s32.f32 %v3726
  %v3855 = vcvt.s32.f32 %v3727
  %v3856 = vcvt.s32.f32 %v3728
  %v3857 = vcvt.s32.f32 %v3729
  %v3858 = vcvt.s32.f32 %v3730
  %v3859 = vcvt.s32.f32 %v3731
  %v3860 = vcvt.s32.f32 %v3732
  %v3861 = vcvt.s32.f32 %v3733
  %v3862 = vcvt.s32.f32 %v3734
  %v3863 = vcvt.s32.f32 %v3735
  %v3864 = vcvt.s32.f32 %v3736
  %v3865 = vcvt.s32.f32 %v3737
  %v3866 = vcvt.s32.f32 %v3738
  %v3867 = vcvt.s32.f32 %v3739
  %v3868 = vcvt.s32.f32 %v3740
  %v3869 = vcvt.s32.f32 %v3741
  %v3870 = vcvt.s32.f32 %v3742
  %v3871 = vcvt.s32.f32 %v3743
  %v3872 = vcvt.s32.f32 %v3744
  %v3873 = vcvt.s32.f32 %v3745
  %v3874 = vcvt.s32.f32 %v3746
  %v3875 = vcvt.s32.f32 %v3747
  %v3876 = vcvt.s32.f32 %v3748
  %v3877 = vcvt.s32.f32 %v3749
  %v3878 = vcvt.s32.f32 %v3750
  %v3879 = vcvt.s32.f32 %v3751
  %v3880 = vcvt.s32.f32 %v3752
  %v3881 = vcvt.s32.f32 %v3753
  %v3882 = vcvt.s32.f32 %v3754
  %v3883 = vcvt.s32.f32 %v3755
  %v3884 = vcvt.s32.f32 %v3756
  %v3885 = vcvt.s32.f32 %v3757
  %v3886 = vcvt.s32.f32 %v3758
  %v3887 = vcvt.s32.f32 %v3759
  %v3888 = vcvt.s32.f32 %v3760
  %v3889 = vcvt.s32.f32 %v3761
  %v3890 = vcvt.s32.f32 %v3762
  %v3891 = vcvt.s32.f32 %v3763
  %v3892 = vcvt.s32.f32 %v3764
  %v3893 = vcvt.s32.f32 %v3765
  %v3894 = vcvt.s32.f32 %v3766
  %v3895 = vcvt.s32.f32 %v3767
  %v3896 = vcvt.s32.f32 %v3768
  %v3897 = vcvt.s32.f32 %v3769
  %v3898 = vcvt.s32.f32 %v3770
  %v3899 = vcvt.s32.f32 %v3771
  %v3900 = vcvt.s32.f32 %v3772
  %v3901 = vcvt.s32.f32 %v3773
  %v3902 = vcvt.s32.f32 %v3774
  %v3903 = vcvt.s32.f32 %v3775
  %v3904 = vcvt.s32.f32 %v3776
  %v3905 = vcvt.s32.f32 %v3777
  %v3906 = vcvt.s32.f32 %v3778
  %v3907 = vcvt.s32.f32 %v3779
  %v3908 = vcvt.s32.f32 %v3780
  %v3909 = vcvt.s32.f32 %v3781
  %v3910 = vcvt.s32.f32 %v3782
  %v3911 = vcvt.s32.f32 %v3783
  %v3912 = vpack.c.bf16 %v3788, %v3784
  %v3913 = vpack.c.bf16 %v3789, %v3785
  %v3914 = vpack.c.bf16 %v3790, %v3786
  %v3915 = vpack.c.bf16 %v3791, %v3787
  %v3916 = vpack.c.bf16 %v3796, %v3792
  %v3917 = vpack.c.bf16 %v3797, %v3793
  %v3918 = vpack.c.bf16 %v3798, %v3794
  %v3919 = vpack.c.bf16 %v3799, %v3795
  %v3920 = vpack.c.bf16 %v3804, %v3800
  %v3921 = vpack.c.bf16 %v3805, %v3801
  %v3922 = vpack.c.bf16 %v3806, %v3802
  %v3923 = vpack.c.bf16 %v3807, %v3803
  %v3924 = vpack.c.bf16 %v3812, %v3808
  %v3925 = vpack.c.bf16 %v3813, %v3809
  %v3926 = vpack.c.bf16 %v3814, %v3810
  %v3927 = vpack.c.bf16 %v3815, %v3811
  %v3928 = vpack.c.bf16 %v3820, %v3816
  %v3929 = vpack.c.bf16 %v3821, %v3817
  %v3930 = vpack.c.bf16 %v3822, %v3818
  %v3931 = vpack.c.bf16 %v3823, %v3819
  %v3932 = vpack.c.bf16 %v3828, %v3824
  %v3933 = vpack.c.bf16 %v3829, %v3825
  %v3934 = vpack.c.bf16 %v3830, %v3826
  %v3935 = vpack.c.bf16 %v3831, %v3827
  %v3936 = vpack.c.bf16 %v3836, %v3832
  %v3937 = vpack.c.bf16 %v3837, %v3833
  %v3938 = vpack.c.bf16 %v3838, %v3834
  %v3939 = vpack.c.bf16 %v3839, %v3835
  %v3940 = vpack.c.bf16 %v3844, %v3840
  %v3941 = vpack.c.bf16 %v3845, %v3841
  %v3942 = vpack.c.bf16 %v3846, %v3842
  %v3943 = vpack.c.bf16 %v3847, %v3843
  %v3944 = vpack.c.bf16 %v3852, %v3848
  %v3945 = vpack.c.bf16 %v3853, %v3849
  %v3946 = vpack.c.bf16 %v3854, %v3850
  %v3947 = vpack.c.bf16 %v3855, %v3851
  %v3948 = vpack.c.bf16 %v3860, %v3856
  %v3949 = vpack.c.bf16 %v3861, %v3857
  %v3950 = vpack.c.bf16 %v3862, %v3858
  %v3951 = vpack.c.bf16 %v3863, %v3859
  %v3952 = vpack.c.bf16 %v3868, %v3864
  %v3953 = vpack.c.bf16 %v3869, %v3865
  %v3954 = vpack.c.bf16 %v3870, %v3866
  %v3955 = vpack.c.bf16 %v3871, %v3867
  %v3956 = vpack.c.bf16 %v3876, %v3872
  %v3957 = vpack.c.bf16 %v3877, %v3873
  %v3958 = vpack.c.bf16 %v3878, %v3874
  %v3959 = vpack.c.bf16 %v3879, %v3875
  %v3960 = vpack.c.bf16 %v3884, %v3880
  %v3961 = vpack.c.bf16 %v3885, %v3881
  %v3962 = vpack.c.bf16 %v3886, %v3882
  %v3963 = vpack.c.bf16 %v3887, %v3883
  %v3964 = vpack.c.bf16 %v3892, %v3888
  %v3965 = vpack.c.bf16 %v3893, %v3889
  %v3966 = vpack.c.bf16 %v3894, %v3890
  %v3967 = vpack.c.bf16 %v3895, %v3891
  %v3968 = vpack.c.bf16 %v3900, %v3896
  %v3969 = vpack.c.bf16 %v3901, %v3897
  %v3970 = vpack.c.bf16 %v3902, %v3898
  %v3971 = vpack.c.bf16 %v3903, %v3899
  %v3972 = vpack.c.bf16 %v3908, %v3904
  %v3973 = vpack.c.bf16 %v3909, %v3905
  %v3974 = vpack.c.bf16 %v3910, %v3906
  %v3975 = vpack.c.bf16 %v3911, %v3907
  %3976 = vmatprep.subr.bf16.mxu0 %v3913
  %3977 = vmatpush1.bf16.msra.mxu0 %v3912
  %3978 = vmatprep.subr.bf16.mxu0 %v3917
  %3979 = vmatpush1.bf16.msra.mxu0 %v3916
  %3980 = vmatprep.subr.bf16.mxu0 %v3921
  %3981 = vmatpush1.bf16.msra.mxu0 %v3920
  %3982 = vmatprep.subr.bf16.mxu0 %v3925
  %3983 = vmatpush1.bf16.msra.mxu0 %v3924
  %3984 = vmatprep.subr.bf16.mxu0 %v3929
  %3985 = vmatpush1.bf16.msra.mxu0 %v3928
  %3986 = vmatprep.subr.bf16.mxu0 %v3933
  %3987 = vmatpush1.bf16.msra.mxu0 %v3932
  %3988 = vmatprep.subr.bf16.mxu0 %v3937
  %3989 = vmatpush1.bf16.msra.mxu0 %v3936
  %3990 = vmatprep.subr.bf16.mxu0 %v3941
  %3991 = vmatpush1.bf16.msra.mxu0 %v3940
  %3992 = vmatprep.subr.bf16.mxu0 %v3945
  %3993 = vmatpush1.bf16.msra.mxu0 %v3944
  %3994 = vmatprep.subr.bf16.mxu0 %v3949
  %3995 = vmatpush1.bf16.msra.mxu0 %v3948
  %3996 = vmatprep.subr.bf16.mxu0 %v3953
  %3997 = vmatpush1.bf16.msra.mxu0 %v3952
  %3998 = vmatprep.subr.bf16.mxu0 %v3957
  %3999 = vmatpush1.bf16.msra.mxu0 %v3956
  %4000 = vmatprep.subr.bf16.mxu0 %v3961
  %4001 = vmatpush1.bf16.msra.mxu0 %v3960
  %4002 = vmatprep.subr.bf16.mxu0 %v3965
  %4003 = vmatpush1.bf16.msra.mxu0 %v3964
  %4004 = vmatprep.subr.bf16.mxu0 %v3969
  %4005 = vmatpush1.bf16.msra.mxu0 %v3968
  %4006 = vmatprep.subr.bf16.mxu0 %v3973
  %4007 = vmatpush1.bf16.msra.mxu0 %v3972
  %4008 = vmatprep.mubr.bf16.mxu0 %v518
  %4009 = vmatmul.mubr.bf16.gmra.mrb[0].mxu0 %v517
  %v4010 = vpop.f32.mrb[0].mxu0
  %v4011 = vadd.f32 0.0, %v4010
  %v4012 = vpop.f32.mrb[0].mxu0
  %v4013 = vadd.f32 0.0, %v4012
  %v4014 = vpop.f32.mrb[0].mxu0
  %v4015 = vpop.f32.mrb[0].mxu0
  %4016 = vdwg.mxu0
  %4017 = vmatprep.subr.bf16.mxu0 %v3915
  %4018 = vmatpush1.bf16.msra.mxu0 %v3914
  %4019 = vmatprep.subr.bf16.mxu0 %v3919
  %4020 = vmatpush1.bf16.msra.mxu0 %v3918
  %4021 = vmatprep.subr.bf16.mxu0 %v3923
  %4022 = vmatpush1.bf16.msra.mxu0 %v3922
  %4023 = vmatprep.subr.bf16.mxu0 %v3927
  %4024 = vmatpush1.bf16.msra.mxu0 %v3926
  %4025 = vmatprep.subr.bf16.mxu0 %v3931
  %4026 = vmatpush1.bf16.msra.mxu0 %v3930
  %4027 = vmatprep.subr.bf16.mxu0 %v3935
  %4028 = vmatpush1.bf16.msra.mxu0 %v3934
  %4029 = vmatprep.subr.bf16.mxu0 %v3939
  %4030 = vmatpush1.bf16.msra.mxu0 %v3938
  %4031 = vmatprep.subr.bf16.mxu0 %v3943
  %4032 = vmatpush1.bf16.msra.mxu0 %v3942
  %4033 = vmatprep.subr.bf16.mxu0 %v3947
  %4034 = vmatpush1.bf16.msra.mxu0 %v3946
  %4035 = vmatprep.subr.bf16.mxu0 %v3951
  %4036 = vmatpush1.bf16.msra.mxu0 %v3950
  %4037 = vmatprep.subr.bf16.mxu0 %v3955
  %4038 = vmatpush1.bf16.msra.mxu0 %v3954
  %4039 = vmatprep.subr.bf16.mxu0 %v3959
  %4040 = vmatpush1.bf16.msra.mxu0 %v3958
  %4041 = vmatprep.subr.bf16.mxu0 %v3963
  %4042 = vmatpush1.bf16.msra.mxu0 %v3962
  %4043 = vmatprep.subr.bf16.mxu0 %v3967
  %4044 = vmatpush1.bf16.msra.mxu0 %v3966
  %4045 = vmatprep.subr.bf16.mxu0 %v3971
  %4046 = vmatpush1.bf16.msra.mxu0 %v3970
  %4047 = vmatprep.subr.bf16.mxu0 %v3975
  %4048 = vmatpush1.bf16.msra.mxu0 %v3974
  %4049 = vmatprep.mubr.bf16.mxu0 %v518
  %4050 = vmatmul.mubr.bf16.gmra.mrb[0].mxu0 %v517
  %v4051 = vpop.f32.mrb[0].mxu0
  %v4052 = vadd.f32 0.0, %v4051
  %v4053 = vpop.f32.mrb[0].mxu0
  %v4054 = vadd.f32 0.0, %v4053
  %v4055 = vpop.f32.mrb[0].mxu0
  %v4056 = vpop.f32.mrb[0].mxu0
  %4057 = vdwg.mxu0
  %v4058 = vpack.c.bf16 %v4011, %v4011
  %v4059 = vpack.c.bf16 %v4013, %v4013
  %v4060 = vpack.c.bf16 %v4052, %v4052
  %v4061 = vpack.c.bf16 %v4054, %v4054
  %v4066 = vcombine.low %v4058, %v4059
  %v4067 = vcombine.low %v4060, %v4061
  %v4069 = vunpack.c.l.s4 1983009808
  %v4070 = vunpack.c.0.s8 %v4069
  %v4071 = vlaneseq
  %v4072 = vshrl.u32 %v4071, 7
  %v4073 = vsub.s32 %v4070, %v4072
  %v4074 = vrot.slane %v4066, %v4073
  %v4076 = vunpack.c.l.s4 1983009808
  %v4077 = vunpack.c.0.s8 %v4076
  %v4078 = vlaneseq
  %v4079 = vshrl.u32 %v4078, 7
  %v4080 = vsub.s32 %v4077, %v4079
  %v4081 = vrot.slane %v4067, %v4080
  %v4082 = vcombine.low %v4074, %v4081
  %s4084 = scalar_lea.vmem %s2, 48
  %4085 = vst [vmem:[%s4084] sm:$0xff] %v4082
  %s4086 = scalar_lea.vmem %s0, 28
  %v4087 = vld [vmem:[%s4086] sm:$0xf]
  %v4088 = vlaneseq
  %v4089 = vshrl.u32 %v4088, 7
  %v4090 = vsub.s32 0, %v4089
  %v4091 = vrot.slane %v4087, %v4090
  %v4092 = vlaneseq
  %v4093 = vshrl.u32 %v4092, 7
  %v4094 = vsub.s32 1, %v4093
  %v4095 = vrot.slane %v4087, %v4094
  %v4096 = vlaneseq
  %v4097 = vshrl.u32 %v4096, 7
  %v4098 = vsub.s32 2, %v4097
  %v4099 = vrot.slane %v4087, %v4098
  %v4100 = vlaneseq
  %v4101 = vshrl.u32 %v4100, 7
  %v4102 = vsub.s32 3, %v4101
  %v4103 = vrot.slane %v4087, %v4102
  %vm4104 = vcmp.eq.s32.totalorder %v13, %v4091
  %vm4105 = vcmp.eq.s32.totalorder %v13, %v4095
  %vm4106 = vcmp.eq.s32.totalorder %v13, %v4099
  %vm4107 = vcmp.eq.s32.totalorder %v13, %v4103
  %vm4108 = vcmp.eq.s32.totalorder %v14, %v4091
  %vm4109 = vcmp.eq.s32.totalorder %v14, %v4095
  %vm4110 = vcmp.eq.s32.totalorder %v14, %v4099
  %vm4111 = vcmp.eq.s32.totalorder %v14, %v4103
  %vm4112 = vcmp.eq.s32.totalorder %v15, %v4091
  %vm4113 = vcmp.eq.s32.totalorder %v15, %v4095
  %vm4114 = vcmp.eq.s32.totalorder %v15, %v4099
  %vm4115 = vcmp.eq.s32.totalorder %v15, %v4103
  %vm4116 = vcmp.eq.s32.totalorder %v16, %v4091
  %vm4117 = vcmp.eq.s32.totalorder %v16, %v4095
  %vm4118 = vcmp.eq.s32.totalorder %v16, %v4099
  %vm4119 = vcmp.eq.s32.totalorder %v16, %v4103
  %vm4120 = vcmp.eq.s32.totalorder %v17, %v4091
  %vm4121 = vcmp.eq.s32.totalorder %v17, %v4095
  %vm4122 = vcmp.eq.s32.totalorder %v17, %v4099
  %vm4123 = vcmp.eq.s32.totalorder %v17, %v4103
  %vm4124 = vcmp.eq.s32.totalorder %v18, %v4091
  %vm4125 = vcmp.eq.s32.totalorder %v18, %v4095
  %vm4126 = vcmp.eq.s32.totalorder %v18, %v4099
  %vm4127 = vcmp.eq.s32.totalorder %v18, %v4103
  %vm4128 = vcmp.eq.s32.totalorder %v19, %v4091
  %vm4129 = vcmp.eq.s32.totalorder %v19, %v4095
  %vm4130 = vcmp.eq.s32.totalorder %v19, %v4099
  %vm4131 = vcmp.eq.s32.totalorder %v19, %v4103
  %vm4132 = vcmp.eq.s32.totalorder %v20, %v4091
  %vm4133 = vcmp.eq.s32.totalorder %v20, %v4095
  %vm4134 = vcmp.eq.s32.totalorder %v20, %v4099
  %vm4135 = vcmp.eq.s32.totalorder %v20, %v4103
  %vm4136 = vcmp.eq.s32.totalorder %v21, %v4091
  %vm4137 = vcmp.eq.s32.totalorder %v21, %v4095
  %vm4138 = vcmp.eq.s32.totalorder %v21, %v4099
  %vm4139 = vcmp.eq.s32.totalorder %v21, %v4103
  %vm4140 = vcmp.eq.s32.totalorder %v22, %v4091
  %vm4141 = vcmp.eq.s32.totalorder %v22, %v4095
  %vm4142 = vcmp.eq.s32.totalorder %v22, %v4099
  %vm4143 = vcmp.eq.s32.totalorder %v22, %v4103
  %vm4144 = vcmp.eq.s32.totalorder %v23, %v4091
  %vm4145 = vcmp.eq.s32.totalorder %v23, %v4095
  %vm4146 = vcmp.eq.s32.totalorder %v23, %v4099
  %vm4147 = vcmp.eq.s32.totalorder %v23, %v4103
  %vm4148 = vcmp.eq.s32.totalorder %v24, %v4091
  %vm4149 = vcmp.eq.s32.totalorder %v24, %v4095
  %vm4150 = vcmp.eq.s32.totalorder %v24, %v4099
  %vm4151 = vcmp.eq.s32.totalorder %v24, %v4103
  %vm4152 = vcmp.eq.s32.totalorder %v25, %v4091
  %vm4153 = vcmp.eq.s32.totalorder %v25, %v4095
  %vm4154 = vcmp.eq.s32.totalorder %v25, %v4099
  %vm4155 = vcmp.eq.s32.totalorder %v25, %v4103
  %vm4156 = vcmp.eq.s32.totalorder %v26, %v4091
  %vm4157 = vcmp.eq.s32.totalorder %v26, %v4095
  %vm4158 = vcmp.eq.s32.totalorder %v26, %v4099
  %vm4159 = vcmp.eq.s32.totalorder %v26, %v4103
  %vm4160 = vcmp.eq.s32.totalorder %v27, %v4091
  %vm4161 = vcmp.eq.s32.totalorder %v27, %v4095
  %vm4162 = vcmp.eq.s32.totalorder %v27, %v4099
  %vm4163 = vcmp.eq.s32.totalorder %v27, %v4103
  %vm4164 = vcmp.eq.s32.totalorder %v28, %v4091
  %vm4165 = vcmp.eq.s32.totalorder %v28, %v4095
  %vm4166 = vcmp.eq.s32.totalorder %v28, %v4099
  %vm4167 = vcmp.eq.s32.totalorder %v28, %v4103
  %vm4168 = vcmp.eq.s32.totalorder %v29, %v4091
  %vm4169 = vcmp.eq.s32.totalorder %v29, %v4095
  %vm4170 = vcmp.eq.s32.totalorder %v29, %v4099
  %vm4171 = vcmp.eq.s32.totalorder %v29, %v4103
  %vm4172 = vcmp.eq.s32.totalorder %v30, %v4091
  %vm4173 = vcmp.eq.s32.totalorder %v30, %v4095
  %vm4174 = vcmp.eq.s32.totalorder %v30, %v4099
  %vm4175 = vcmp.eq.s32.totalorder %v30, %v4103
  %vm4176 = vcmp.eq.s32.totalorder %v31, %v4091
  %vm4177 = vcmp.eq.s32.totalorder %v31, %v4095
  %vm4178 = vcmp.eq.s32.totalorder %v31, %v4099
  %vm4179 = vcmp.eq.s32.totalorder %v31, %v4103
  %vm4180 = vcmp.eq.s32.totalorder %v32, %v4091
  %vm4181 = vcmp.eq.s32.totalorder %v32, %v4095
  %vm4182 = vcmp.eq.s32.totalorder %v32, %v4099
  %vm4183 = vcmp.eq.s32.totalorder %v32, %v4103
  %vm4184 = vcmp.eq.s32.totalorder %v33, %v4091
  %vm4185 = vcmp.eq.s32.totalorder %v33, %v4095
  %vm4186 = vcmp.eq.s32.totalorder %v33, %v4099
  %vm4187 = vcmp.eq.s32.totalorder %v33, %v4103
  %vm4188 = vcmp.eq.s32.totalorder %v34, %v4091
  %vm4189 = vcmp.eq.s32.totalorder %v34, %v4095
  %vm4190 = vcmp.eq.s32.totalorder %v34, %v4099
  %vm4191 = vcmp.eq.s32.totalorder %v34, %v4103
  %vm4192 = vcmp.eq.s32.totalorder %v35, %v4091
  %vm4193 = vcmp.eq.s32.totalorder %v35, %v4095
  %vm4194 = vcmp.eq.s32.totalorder %v35, %v4099
  %vm4195 = vcmp.eq.s32.totalorder %v35, %v4103
  %vm4196 = vcmp.eq.s32.totalorder %v36, %v4091
  %vm4197 = vcmp.eq.s32.totalorder %v36, %v4095
  %vm4198 = vcmp.eq.s32.totalorder %v36, %v4099
  %vm4199 = vcmp.eq.s32.totalorder %v36, %v4103
  %vm4200 = vcmp.eq.s32.totalorder %v37, %v4091
  %vm4201 = vcmp.eq.s32.totalorder %v37, %v4095
  %vm4202 = vcmp.eq.s32.totalorder %v37, %v4099
  %vm4203 = vcmp.eq.s32.totalorder %v37, %v4103
  %vm4204 = vcmp.eq.s32.totalorder %v38, %v4091
  %vm4205 = vcmp.eq.s32.totalorder %v38, %v4095
  %vm4206 = vcmp.eq.s32.totalorder %v38, %v4099
  %vm4207 = vcmp.eq.s32.totalorder %v38, %v4103
  %vm4208 = vcmp.eq.s32.totalorder %v39, %v4091
  %vm4209 = vcmp.eq.s32.totalorder %v39, %v4095
  %vm4210 = vcmp.eq.s32.totalorder %v39, %v4099
  %vm4211 = vcmp.eq.s32.totalorder %v39, %v4103
  %vm4212 = vcmp.eq.s32.totalorder %v40, %v4091
  %vm4213 = vcmp.eq.s32.totalorder %v40, %v4095
  %vm4214 = vcmp.eq.s32.totalorder %v40, %v4099
  %vm4215 = vcmp.eq.s32.totalorder %v40, %v4103
  %vm4216 = vcmp.eq.s32.totalorder %v41, %v4091
  %vm4217 = vcmp.eq.s32.totalorder %v41, %v4095
  %vm4218 = vcmp.eq.s32.totalorder %v41, %v4099
  %vm4219 = vcmp.eq.s32.totalorder %v41, %v4103
  %vm4220 = vcmp.eq.s32.totalorder %v42, %v4091
  %vm4221 = vcmp.eq.s32.totalorder %v42, %v4095
  %vm4222 = vcmp.eq.s32.totalorder %v42, %v4099
  %vm4223 = vcmp.eq.s32.totalorder %v42, %v4103
  %vm4224 = vcmp.eq.s32.totalorder %v43, %v4091
  %vm4225 = vcmp.eq.s32.totalorder %v43, %v4095
  %vm4226 = vcmp.eq.s32.totalorder %v43, %v4099
  %vm4227 = vcmp.eq.s32.totalorder %v43, %v4103
  %vm4228 = vcmp.eq.s32.totalorder %v44, %v4091
  %vm4229 = vcmp.eq.s32.totalorder %v44, %v4095
  %vm4230 = vcmp.eq.s32.totalorder %v44, %v4099
  %vm4231 = vcmp.eq.s32.totalorder %v44, %v4103
  %v4232 = vsel %vm4104, 1, 0
  %v4233 = vsel %vm4105, 1, 0
  %v4234 = vsel %vm4106, 1, 0
  %v4235 = vsel %vm4107, 1, 0
  %v4236 = vsel %vm4108, 1, 0
  %v4237 = vsel %vm4109, 1, 0
  %v4238 = vsel %vm4110, 1, 0
  %v4239 = vsel %vm4111, 1, 0
  %v4240 = vsel %vm4112, 1, 0
  %v4241 = vsel %vm4113, 1, 0
  %v4242 = vsel %vm4114, 1, 0
  %v4243 = vsel %vm4115, 1, 0
  %v4244 = vsel %vm4116, 1, 0
  %v4245 = vsel %vm4117, 1, 0
  %v4246 = vsel %vm4118, 1, 0
  %v4247 = vsel %vm4119, 1, 0
  %v4248 = vsel %vm4120, 1, 0
  %v4249 = vsel %vm4121, 1, 0
  %v4250 = vsel %vm4122, 1, 0
  %v4251 = vsel %vm4123, 1, 0
  %v4252 = vsel %vm4124, 1, 0
  %v4253 = vsel %vm4125, 1, 0
  %v4254 = vsel %vm4126, 1, 0
  %v4255 = vsel %vm4127, 1, 0
  %v4256 = vsel %vm4128, 1, 0
  %v4257 = vsel %vm4129, 1, 0
  %v4258 = vsel %vm4130, 1, 0
  %v4259 = vsel %vm4131, 1, 0
  %v4260 = vsel %vm4132, 1, 0
  %v4261 = vsel %vm4133, 1, 0
  %v4262 = vsel %vm4134, 1, 0
  %v4263 = vsel %vm4135, 1, 0
  %v4264 = vsel %vm4136, 1, 0
  %v4265 = vsel %vm4137, 1, 0
  %v4266 = vsel %vm4138, 1, 0
  %v4267 = vsel %vm4139, 1, 0
  %v4268 = vsel %vm4140, 1, 0
  %v4269 = vsel %vm4141, 1, 0
  %v4270 = vsel %vm4142, 1, 0
  %v4271 = vsel %vm4143, 1, 0
  %v4272 = vsel %vm4144, 1, 0
  %v4273 = vsel %vm4145, 1, 0
  %v4274 = vsel %vm4146, 1, 0
  %v4275 = vsel %vm4147, 1, 0
  %v4276 = vsel %vm4148, 1, 0
  %v4277 = vsel %vm4149, 1, 0
  %v4278 = vsel %vm4150, 1, 0
  %v4279 = vsel %vm4151, 1, 0
  %v4280 = vsel %vm4152, 1, 0
  %v4281 = vsel %vm4153, 1, 0
  %v4282 = vsel %vm4154, 1, 0
  %v4283 = vsel %vm4155, 1, 0
  %v4284 = vsel %vm4156, 1, 0
  %v4285 = vsel %vm4157, 1, 0
  %v4286 = vsel %vm4158, 1, 0
  %v4287 = vsel %vm4159, 1, 0
  %v4288 = vsel %vm4160, 1, 0
  %v4289 = vsel %vm4161, 1, 0
  %v4290 = vsel %vm4162, 1, 0
  %v4291 = vsel %vm4163, 1, 0
  %v4292 = vsel %vm4164, 1, 0
  %v4293 = vsel %vm4165, 1, 0
  %v4294 = vsel %vm4166, 1, 0
  %v4295 = vsel %vm4167, 1, 0
  %v4296 = vsel %vm4168, 1, 0
  %v4297 = vsel %vm4169, 1, 0
  %v4298 = vsel %vm4170, 1, 0
  %v4299 = vsel %vm4171, 1, 0
  %v4300 = vsel %vm4172, 1, 0
  %v4301 = vsel %vm4173, 1, 0
  %v4302 = vsel %vm4174, 1, 0
  %v4303 = vsel %vm4175, 1, 0
  %v4304 = vsel %vm4176, 1, 0
  %v4305 = vsel %vm4177, 1, 0
  %v4306 = vsel %vm4178, 1, 0
  %v4307 = vsel %vm4179, 1, 0
  %v4308 = vsel %vm4180, 1, 0
  %v4309 = vsel %vm4181, 1, 0
  %v4310 = vsel %vm4182, 1, 0
  %v4311 = vsel %vm4183, 1, 0
  %v4312 = vsel %vm4184, 1, 0
  %v4313 = vsel %vm4185, 1, 0
  %v4314 = vsel %vm4186, 1, 0
  %v4315 = vsel %vm4187, 1, 0
  %v4316 = vsel %vm4188, 1, 0
  %v4317 = vsel %vm4189, 1, 0
  %v4318 = vsel %vm4190, 1, 0
  %v4319 = vsel %vm4191, 1, 0
  %v4320 = vsel %vm4192, 1, 0
  %v4321 = vsel %vm4193, 1, 0
  %v4322 = vsel %vm4194, 1, 0
  %v4323 = vsel %vm4195, 1, 0
  %v4324 = vsel %vm4196, 1, 0
  %v4325 = vsel %vm4197, 1, 0
  %v4326 = vsel %vm4198, 1, 0
  %v4327 = vsel %vm4199, 1, 0
  %v4328 = vsel %vm4200, 1, 0
  %v4329 = vsel %vm4201, 1, 0
  %v4330 = vsel %vm4202, 1, 0
  %v4331 = vsel %vm4203, 1, 0
  %v4332 = vsel %vm4204, 1, 0
  %v4333 = vsel %vm4205, 1, 0
  %v4334 = vsel %vm4206, 1, 0
  %v4335 = vsel %vm4207, 1, 0
  %v4336 = vsel %vm4208, 1, 0
  %v4337 = vsel %vm4209, 1, 0
  %v4338 = vsel %vm4210, 1, 0
  %v4339 = vsel %vm4211, 1, 0
  %v4340 = vsel %vm4212, 1, 0
  %v4341 = vsel %vm4213, 1, 0
  %v4342 = vsel %vm4214, 1, 0
  %v4343 = vsel %vm4215, 1, 0
  %v4344 = vsel %vm4216, 1, 0
  %v4345 = vsel %vm4217, 1, 0
  %v4346 = vsel %vm4218, 1, 0
  %v4347 = vsel %vm4219, 1, 0
  %v4348 = vsel %vm4220, 1, 0
  %v4349 = vsel %vm4221, 1, 0
  %v4350 = vsel %vm4222, 1, 0
  %v4351 = vsel %vm4223, 1, 0
  %v4352 = vsel %vm4224, 1, 0
  %v4353 = vsel %vm4225, 1, 0
  %v4354 = vsel %vm4226, 1, 0
  %v4355 = vsel %vm4227, 1, 0
  %v4356 = vsel %vm4228, 1, 0
  %v4357 = vsel %vm4229, 1, 0
  %v4358 = vsel %vm4230, 1, 0
  %v4359 = vsel %vm4231, 1, 0
  %v4360 = vcvt.s32.f32 %v4232
  %v4361 = vcvt.s32.f32 %v4233
  %v4362 = vcvt.s32.f32 %v4234
  %v4363 = vcvt.s32.f32 %v4235
  %v4364 = vcvt.s32.f32 %v4236
  %v4365 = vcvt.s32.f32 %v4237
  %v4366 = vcvt.s32.f32 %v4238
  %v4367 = vcvt.s32.f32 %v4239
  %v4368 = vcvt.s32.f32 %v4240
  %v4369 = vcvt.s32.f32 %v4241
  %v4370 = vcvt.s32.f32 %v4242
  %v4371 = vcvt.s32.f32 %v4243
  %v4372 = vcvt.s32.f32 %v4244
  %v4373 = vcvt.s32.f32 %v4245
  %v4374 = vcvt.s32.f32 %v4246
  %v4375 = vcvt.s32.f32 %v4247
  %v4376 = vcvt.s32.f32 %v4248
  %v4377 = vcvt.s32.f32 %v4249
  %v4378 = vcvt.s32.f32 %v4250
  %v4379 = vcvt.s32.f32 %v4251
  %v4380 = vcvt.s32.f32 %v4252
  %v4381 = vcvt.s32.f32 %v4253
  %v4382 = vcvt.s32.f32 %v4254
  %v4383 = vcvt.s32.f32 %v4255
  %v4384 = vcvt.s32.f32 %v4256
  %v4385 = vcvt.s32.f32 %v4257
  %v4386 = vcvt.s32.f32 %v4258
  %v4387 = vcvt.s32.f32 %v4259
  %v4388 = vcvt.s32.f32 %v4260
  %v4389 = vcvt.s32.f32 %v4261
  %v4390 = vcvt.s32.f32 %v4262
  %v4391 = vcvt.s32.f32 %v4263
  %v4392 = vcvt.s32.f32 %v4264
  %v4393 = vcvt.s32.f32 %v4265
  %v4394 = vcvt.s32.f32 %v4266
  %v4395 = vcvt.s32.f32 %v4267
  %v4396 = vcvt.s32.f32 %v4268
  %v4397 = vcvt.s32.f32 %v4269
  %v4398 = vcvt.s32.f32 %v4270
  %v4399 = vcvt.s32.f32 %v4271
  %v4400 = vcvt.s32.f32 %v4272
  %v4401 = vcvt.s32.f32 %v4273
  %v4402 = vcvt.s32.f32 %v4274
  %v4403 = vcvt.s32.f32 %v4275
  %v4404 = vcvt.s32.f32 %v4276
  %v4405 = vcvt.s32.f32 %v4277
  %v4406 = vcvt.s32.f32 %v4278
  %v4407 = vcvt.s32.f32 %v4279
  %v4408 = vcvt.s32.f32 %v4280
  %v4409 = vcvt.s32.f32 %v4281
  %v4410 = vcvt.s32.f32 %v4282
  %v4411 = vcvt.s32.f32 %v4283
  %v4412 = vcvt.s32.f32 %v4284
  %v4413 = vcvt.s32.f32 %v4285
  %v4414 = vcvt.s32.f32 %v4286
  %v4415 = vcvt.s32.f32 %v4287
  %v4416 = vcvt.s32.f32 %v4288
  %v4417 = vcvt.s32.f32 %v4289
  %v4418 = vcvt.s32.f32 %v4290
  %v4419 = vcvt.s32.f32 %v4291
  %v4420 = vcvt.s32.f32 %v4292
  %v4421 = vcvt.s32.f32 %v4293
  %v4422 = vcvt.s32.f32 %v4294
  %v4423 = vcvt.s32.f32 %v4295
  %v4424 = vcvt.s32.f32 %v4296
  %v4425 = vcvt.s32.f32 %v4297
  %v4426 = vcvt.s32.f32 %v4298
  %v4427 = vcvt.s32.f32 %v4299
  %v4428 = vcvt.s32.f32 %v4300
  %v4429 = vcvt.s32.f32 %v4301
  %v4430 = vcvt.s32.f32 %v4302
  %v4431 = vcvt.s32.f32 %v4303
  %v4432 = vcvt.s32.f32 %v4304
  %v4433 = vcvt.s32.f32 %v4305
  %v4434 = vcvt.s32.f32 %v4306
  %v4435 = vcvt.s32.f32 %v4307
  %v4436 = vcvt.s32.f32 %v4308
  %v4437 = vcvt.s32.f32 %v4309
  %v4438 = vcvt.s32.f32 %v4310
  %v4439 = vcvt.s32.f32 %v4311
  %v4440 = vcvt.s32.f32 %v4312
  %v4441 = vcvt.s32.f32 %v4313
  %v4442 = vcvt.s32.f32 %v4314
  %v4443 = vcvt.s32.f32 %v4315
  %v4444 = vcvt.s32.f32 %v4316
  %v4445 = vcvt.s32.f32 %v4317
  %v4446 = vcvt.s32.f32 %v4318
  %v4447 = vcvt.s32.f32 %v4319
  %v4448 = vcvt.s32.f32 %v4320
  %v4449 = vcvt.s32.f32 %v4321
  %v4450 = vcvt.s32.f32 %v4322
  %v4451 = vcvt.s32.f32 %v4323
  %v4452 = vcvt.s32.f32 %v4324
  %v4453 = vcvt.s32.f32 %v4325
  %v4454 = vcvt.s32.f32 %v4326
  %v4455 = vcvt.s32.f32 %v4327
  %v4456 = vcvt.s32.f32 %v4328
  %v4457 = vcvt.s32.f32 %v4329
  %v4458 = vcvt.s32.f32 %v4330
  %v4459 = vcvt.s32.f32 %v4331
  %v4460 = vcvt.s32.f32 %v4332
  %v4461 = vcvt.s32.f32 %v4333
  %v4462 = vcvt.s32.f32 %v4334
  %v4463 = vcvt.s32.f32 %v4335
  %v4464 = vcvt.s32.f32 %v4336
  %v4465 = vcvt.s32.f32 %v4337
  %v4466 = vcvt.s32.f32 %v4338
  %v4467 = vcvt.s32.f32 %v4339
  %v4468 = vcvt.s32.f32 %v4340
  %v4469 = vcvt.s32.f32 %v4341
  %v4470 = vcvt.s32.f32 %v4342
  %v4471 = vcvt.s32.f32 %v4343
  %v4472 = vcvt.s32.f32 %v4344
  %v4473 = vcvt.s32.f32 %v4345
  %v4474 = vcvt.s32.f32 %v4346
  %v4475 = vcvt.s32.f32 %v4347
  %v4476 = vcvt.s32.f32 %v4348
  %v4477 = vcvt.s32.f32 %v4349
  %v4478 = vcvt.s32.f32 %v4350
  %v4479 = vcvt.s32.f32 %v4351
  %v4480 = vcvt.s32.f32 %v4352
  %v4481 = vcvt.s32.f32 %v4353
  %v4482 = vcvt.s32.f32 %v4354
  %v4483 = vcvt.s32.f32 %v4355
  %v4484 = vcvt.s32.f32 %v4356
  %v4485 = vcvt.s32.f32 %v4357
  %v4486 = vcvt.s32.f32 %v4358
  %v4487 = vcvt.s32.f32 %v4359
  %v4488 = vpack.c.bf16 %v4364, %v4360
  %v4489 = vpack.c.bf16 %v4365, %v4361
  %v4490 = vpack.c.bf16 %v4366, %v4362
  %v4491 = vpack.c.bf16 %v4367, %v4363
  %v4492 = vpack.c.bf16 %v4372, %v4368
  %v4493 = vpack.c.bf16 %v4373, %v4369
  %v4494 = vpack.c.bf16 %v4374, %v4370
  %v4495 = vpack.c.bf16 %v4375, %v4371
  %v4496 = vpack.c.bf16 %v4380, %v4376
  %v4497 = vpack.c.bf16 %v4381, %v4377
  %v4498 = vpack.c.bf16 %v4382, %v4378
  %v4499 = vpack.c.bf16 %v4383, %v4379
  %v4500 = vpack.c.bf16 %v4388, %v4384
  %v4501 = vpack.c.bf16 %v4389, %v4385
  %v4502 = vpack.c.bf16 %v4390, %v4386
  %v4503 = vpack.c.bf16 %v4391, %v4387
  %v4504 = vpack.c.bf16 %v4396, %v4392
  %v4505 = vpack.c.bf16 %v4397, %v4393
  %v4506 = vpack.c.bf16 %v4398, %v4394
  %v4507 = vpack.c.bf16 %v4399, %v4395
  %v4508 = vpack.c.bf16 %v4404, %v4400
  %v4509 = vpack.c.bf16 %v4405, %v4401
  %v4510 = vpack.c.bf16 %v4406, %v4402
  %v4511 = vpack.c.bf16 %v4407, %v4403
  %v4512 = vpack.c.bf16 %v4412, %v4408
  %v4513 = vpack.c.bf16 %v4413, %v4409
  %v4514 = vpack.c.bf16 %v4414, %v4410
  %v4515 = vpack.c.bf16 %v4415, %v4411
  %v4516 = vpack.c.bf16 %v4420, %v4416
  %v4517 = vpack.c.bf16 %v4421, %v4417
  %v4518 = vpack.c.bf16 %v4422, %v4418
  %v4519 = vpack.c.bf16 %v4423, %v4419
  %v4520 = vpack.c.bf16 %v4428, %v4424
  %v4521 = vpack.c.bf16 %v4429, %v4425
  %v4522 = vpack.c.bf16 %v4430, %v4426
  %v4523 = vpack.c.bf16 %v4431, %v4427
  %v4524 = vpack.c.bf16 %v4436, %v4432
  %v4525 = vpack.c.bf16 %v4437, %v4433
  %v4526 = vpack.c.bf16 %v4438, %v4434
  %v4527 = vpack.c.bf16 %v4439, %v4435
  %v4528 = vpack.c.bf16 %v4444, %v4440
  %v4529 = vpack.c.bf16 %v4445, %v4441
  %v4530 = vpack.c.bf16 %v4446, %v4442
  %v4531 = vpack.c.bf16 %v4447, %v4443
  %v4532 = vpack.c.bf16 %v4452, %v4448
  %v4533 = vpack.c.bf16 %v4453, %v4449
  %v4534 = vpack.c.bf16 %v4454, %v4450
  %v4535 = vpack.c.bf16 %v4455, %v4451
  %v4536 = vpack.c.bf16 %v4460, %v4456
  %v4537 = vpack.c.bf16 %v4461, %v4457
  %v4538 = vpack.c.bf16 %v4462, %v4458
  %v4539 = vpack.c.bf16 %v4463, %v4459
  %v4540 = vpack.c.bf16 %v4468, %v4464
  %v4541 = vpack.c.bf16 %v4469, %v4465
  %v4542 = vpack.c.bf16 %v4470, %v4466
  %v4543 = vpack.c.bf16 %v4471, %v4467
  %v4544 = vpack.c.bf16 %v4476, %v4472
  %v4545 = vpack.c.bf16 %v4477, %v4473
  %v4546 = vpack.c.bf16 %v4478, %v4474
  %v4547 = vpack.c.bf16 %v4479, %v4475
  %v4548 = vpack.c.bf16 %v4484, %v4480
  %v4549 = vpack.c.bf16 %v4485, %v4481
  %v4550 = vpack.c.bf16 %v4486, %v4482
  %v4551 = vpack.c.bf16 %v4487, %v4483
  %4552 = vmatprep.subr.bf16.mxu0 %v4489
  %4553 = vmatpush1.bf16.msra.mxu0 %v4488
  %4554 = vmatprep.subr.bf16.mxu0 %v4493
  %4555 = vmatpush1.bf16.msra.mxu0 %v4492
  %4556 = vmatprep.subr.bf16.mxu0 %v4497
  %4557 = vmatpush1.bf16.msra.mxu0 %v4496
  %4558 = vmatprep.subr.bf16.mxu0 %v4501
  %4559 = vmatpush1.bf16.msra.mxu0 %v4500
  %4560 = vmatprep.subr.bf16.mxu0 %v4505
  %4561 = vmatpush1.bf16.msra.mxu0 %v4504
  %4562 = vmatprep.subr.bf16.mxu0 %v4509
  %4563 = vmatpush1.bf16.msra.mxu0 %v4508
  %4564 = vmatprep.subr.bf16.mxu0 %v4513
  %4565 = vmatpush1.bf16.msra.mxu0 %v4512
  %4566 = vmatprep.subr.bf16.mxu0 %v4517
  %4567 = vmatpush1.bf16.msra.mxu0 %v4516
  %4568 = vmatprep.subr.bf16.mxu0 %v4521
  %4569 = vmatpush1.bf16.msra.mxu0 %v4520
  %4570 = vmatprep.subr.bf16.mxu0 %v4525
  %4571 = vmatpush1.bf16.msra.mxu0 %v4524
  %4572 = vmatprep.subr.bf16.mxu0 %v4529
  %4573 = vmatpush1.bf16.msra.mxu0 %v4528
  %4574 = vmatprep.subr.bf16.mxu0 %v4533
  %4575 = vmatpush1.bf16.msra.mxu0 %v4532
  %4576 = vmatprep.subr.bf16.mxu0 %v4537
  %4577 = vmatpush1.bf16.msra.mxu0 %v4536
  %4578 = vmatprep.subr.bf16.mxu0 %v4541
  %4579 = vmatpush1.bf16.msra.mxu0 %v4540
  %4580 = vmatprep.subr.bf16.mxu0 %v4545
  %4581 = vmatpush1.bf16.msra.mxu0 %v4544
  %4582 = vmatprep.subr.bf16.mxu0 %v4549
  %4583 = vmatpush1.bf16.msra.mxu0 %v4548
  %4584 = vmatprep.mubr.bf16.mxu0 %v518
  %4585 = vmatmul.mubr.bf16.gmra.mrb[0].mxu0 %v517
  %v4586 = vpop.f32.mrb[0].mxu0
  %v4587 = vadd.f32 0.0, %v4586
  %v4588 = vpop.f32.mrb[0].mxu0
  %v4589 = vadd.f32 0.0, %v4588
  %v4590 = vpop.f32.mrb[0].mxu0
  %v4591 = vpop.f32.mrb[0].mxu0
  %4592 = vdwg.mxu0
  %4593 = vmatprep.subr.bf16.mxu0 %v4491
  %4594 = vmatpush1.bf16.msra.mxu0 %v4490
  %4595 = vmatprep.subr.bf16.mxu0 %v4495
  %4596 = vmatpush1.bf16.msra.mxu0 %v4494
  %4597 = vmatprep.subr.bf16.mxu0 %v4499
  %4598 = vmatpush1.bf16.msra.mxu0 %v4498
  %4599 = vmatprep.subr.bf16.mxu0 %v4503
  %4600 = vmatpush1.bf16.msra.mxu0 %v4502
  %4601 = vmatprep.subr.bf16.mxu0 %v4507
  %4602 = vmatpush1.bf16.msra.mxu0 %v4506
  %4603 = vmatprep.subr.bf16.mxu0 %v4511
  %4604 = vmatpush1.bf16.msra.mxu0 %v4510
  %4605 = vmatprep.subr.bf16.mxu0 %v4515
  %4606 = vmatpush1.bf16.msra.mxu0 %v4514
  %4607 = vmatprep.subr.bf16.mxu0 %v4519
  %4608 = vmatpush1.bf16.msra.mxu0 %v4518
  %4609 = vmatprep.subr.bf16.mxu0 %v4523
  %4610 = vmatpush1.bf16.msra.mxu0 %v4522
  %4611 = vmatprep.subr.bf16.mxu0 %v4527
  %4612 = vmatpush1.bf16.msra.mxu0 %v4526
  %4613 = vmatprep.subr.bf16.mxu0 %v4531
  %4614 = vmatpush1.bf16.msra.mxu0 %v4530
  %4615 = vmatprep.subr.bf16.mxu0 %v4535
  %4616 = vmatpush1.bf16.msra.mxu0 %v4534
  %4617 = vmatprep.subr.bf16.mxu0 %v4539
  %4618 = vmatpush1.bf16.msra.mxu0 %v4538
  %4619 = vmatprep.subr.bf16.mxu0 %v4543
  %4620 = vmatpush1.bf16.msra.mxu0 %v4542
  %4621 = vmatprep.subr.bf16.mxu0 %v4547
  %4622 = vmatpush1.bf16.msra.mxu0 %v4546
  %4623 = vmatprep.subr.bf16.mxu0 %v4551
  %4624 = vmatpush1.bf16.msra.mxu0 %v4550
  %4625 = vmatprep.mubr.bf16.mxu0 %v518
  %4626 = vmatmul.mubr.bf16.gmra.mrb[0].mxu0 %v517
  %v4627 = vpop.f32.mrb[0].mxu0
  %v4628 = vadd.f32 0.0, %v4627
  %v4629 = vpop.f32.mrb[0].mxu0
  %v4630 = vadd.f32 0.0, %v4629
  %v4631 = vpop.f32.mrb[0].mxu0
  %v4632 = vpop.f32.mrb[0].mxu0
  %4633 = vdwg.mxu0
  %v4634 = vpack.c.bf16 %v4587, %v4587
  %v4635 = vpack.c.bf16 %v4589, %v4589
  %v4636 = vpack.c.bf16 %v4628, %v4628
  %v4637 = vpack.c.bf16 %v4630, %v4630
  %v4642 = vcombine.low %v4634, %v4635
  %v4643 = vcombine.low %v4636, %v4637
  %v4645 = vunpack.c.l.s4 1983009808
  %v4646 = vunpack.c.0.s8 %v4645
  %v4647 = vlaneseq
  %v4648 = vshrl.u32 %v4647, 7
  %v4649 = vsub.s32 %v4646, %v4648
  %v4650 = vrot.slane %v4642, %v4649
  %v4652 = vunpack.c.l.s4 1983009808
  %v4653 = vunpack.c.0.s8 %v4652
  %v4654 = vlaneseq
  %v4655 = vshrl.u32 %v4654, 7
  %v4656 = vsub.s32 %v4653, %v4655
  %v4657 = vrot.slane %v4643, %v4656
  %v4658 = vcombine.low %v4650, %v4657
  %s4660 = scalar_lea.vmem %s2, 56
  %4661 = vst [vmem:[%s4660] sm:$0xff] %v4658
  // Predicated region
  $region10: #{relative_position_bias_2d.1} parent=0 // pred_check
    _
  $region11: #{relative_position_bias_2d.1} parent=0 // pred_check_branch
    %4663 = sbr.rel (0) target = $region13
  $region12: #{relative_position_bias_2d.1} parent=0 // pred_region
    _
  $region13: #{relative_position_bias_2d.1} parent=0 // pred_fallthru
    _
  // Predicated region
  $region14: #{relative_position_bias_2d.1} parent=0 // pred_check
    _
  $region15: #{relative_position_bias_2d.1} parent=0 // pred_check_branch
    %4665 = sbr.rel (0) target = $region17
  $region16: #{relative_position_bias_2d.1} parent=0 // pred_region
    _
  $region17: #{relative_position_bias_2d.1} parent=0 // pred_fallthru
    _

</llo_original>
